<compile_context>
chip_gen: v6e
topology: v6e:2x2x1
jax: 0.10.0
libtpu: 0.0.40
codegen_flags: <defaults>
</compile_context>

<pallas_src>
import numpy as np

import jax
import jax.numpy as jnp
from jax import lax
from jax.experimental import pallas as pl
from jax.experimental.pallas import tpu as pltpu

NEG_SLOPE = 0.2
BN_EPS = 1e-5
PAD_TOP = 8          # sublane-aligned top padding inside the VMEM activation buffers


def _leaky(x):
    return jnp.where(x >= 0, x, NEG_SLOPE * x)


# ---------------------------------------------------------------------------
# Host-side weight prepacking (run ONCE per parameter set, outside jit).
# ---------------------------------------------------------------------------
def _pack_conv(w, F, Win, Wout, B):
    """Pack a stride-2 / pad-1 Conv2d weight (Cout, Cin, kh, kw) into the three
    row-tap matrices used with the H-pair-packed activation layout.

    Activation layout: rows = packed H (F consecutive h per row), lanes =
    (b, q, w, c) with c innermost; the layer output uses G = F//2.  Row-tap
    t in {-1,0,+1} multiplies input packed row (m+t) to produce output packed
    row m.  The matrices absorb the W-convolution (incl. W zero padding), the
    H stride-2 / parity structure and the per-batch block-diagonality.
    """
    w = np.asarray(w, np.float32)
    Cout, Cin, kh, kw = w.shape
    G = F // 2
    assert kh <= F + 2, "packed 3-tap scheme requires kh <= F + 2"
    rows, cols = F * Win * Cin, G * Wout * Cout
    blk = np.zeros((3, rows, cols), np.float32)
    for ti, t in enumerate((-1, 0, 1)):
        for q in range(F):
            for p in range(G):
                i = 2 * t * G + q - 2 * p + 1          # conv H-tap index
                if not (0 <= i < kh):
                    continue
                for wo in range(Wout):
                    for j in range(kw):
                        wi = 2 * wo + j - 1             # W stride 2, pad 1
                        if not (0 <= wi < Win):
                            continue
                        r0 = q * Win * Cin + wi * Cin
                        c0 = p * Wout * Cout + wo * Cout
                        blk[ti, r0:r0 + Cin, c0:c0 + Cout] += w[:, :, i, j].T
    eye = np.eye(B, dtype=np.float32)
    return np.stack([np.kron(eye, blk[ti]) for ti in range(3)])


def prepack_encoder_params(params, B, H, W):
    """Build all constant matrices for the fused kernel (hoisted out of jit)."""
    nc = params["w1"].shape[1]
    ndf = params["w1"].shape[0]
    nz = params["w4"].shape[0]
    C2, C3 = 2 * ndf, 4 * ndf
    kh4 = params["w4"].shape[2]
    W1 = (W + 2 - 3) // 2 + 1
    W2 = (W1 + 2 - 4) // 2 + 1
    W3 = (W2 + 2 - 4) // 2 + 1
    H3 = H // 8
    assert H % 16 == 0 and H3 == kh4, "final (kh4,1) conv must reduce H to 1"
    assert params["w4"].shape[3] == 1

    # Conv layers 1-3: 3 row-tap matrices each (H-pair packed, batch in lanes).
    w1p = _pack_conv(params["w1"], 8, W,  W1, B)     # (3, B*8*W*nc,   B*4*W1*ndf)
    w2p = _pack_conv(params["w2"], 4, W1, W2, B)     # (3, B*4*W1*ndf, B*2*W2*C2)
    w3p = _pack_conv(params["w3"], 2, W2, W3, B)     # (3, B*2*W2*C2,  B*1*W3*C3)

    # Layer 4 ((kh4,1) conv, H_out=1): 3 matmuls + one diagonal mask.
    #   Z = Wr @ a3 ; S = Gt @ (Z*mask) ; out = S @ Gs   with a3 lanes = (b,wo,c)
    w4 = np.asarray(params["w4"], np.float32)[:, :, :, 0]            # (nz, C3, H3)
    wr = w4.reshape(nz * C3, H3)                                     # row = o*C3 + c
    L3 = B * W3 * C3
    msk = (np.arange(nz * C3)[:, None] % C3 ==
           (np.arange(L3)[None, :] % C3)).astype(np.float32)         # (nz*C3, L3)
    gt = np.kron(np.eye(nz, dtype=np.float32), np.ones((1, C3), np.float32))
    gs = np.kron(np.eye(B * W3, dtype=np.float32), np.ones((C3, 1), np.float32))

    # BatchNorm channel fold matrices for the packed lane layouts (c innermost).
    fl2 = np.tile(np.eye(C2, dtype=np.float32), (B * 2 * W2, 1))     # (B*2*W2*C2, C2)
    fl3 = np.tile(np.eye(C3, dtype=np.float32), (B * 1 * W3, 1))     # (B*W3*C3,   C3)

    j = jnp.asarray
    return {
        "w1p": j(w1p), "w2p": j(w2p), "w3p": j(w3p),
        "g2": j(np.asarray(params["g2"], np.float32).reshape(1, C2)),
        "b2": j(np.asarray(params["b2"], np.float32).reshape(1, C2)),
        "fl2": j(fl2), "fl2t": j(np.ascontiguousarray(fl2.T)),
        "g3": j(np.asarray(params["g3"], np.float32).reshape(1, C3)),
        "b3": j(np.asarray(params["b3"], np.float32).reshape(1, C3)),
        "fl3": j(fl3), "fl3t": j(np.ascontiguousarray(fl3.T)),
        "wr": j(wr), "msk": j(msk), "gt": j(gt), "gs": j(gs),
    }


# ---------------------------------------------------------------------------
# Fused kernel
# ---------------------------------------------------------------------------
def _encoder_kernel(xp_ref, w1_ref, w2_ref, w3_ref,
                    g2_ref, b2_ref, fl2_ref, fl2t_ref,
                    g3_ref, b3_ref, fl3_ref, fl3t_ref,
                    wr_ref, msk_ref, gt_ref, gs_ref,
                    out_ref,
                    a1_ref, a2_ref):
    f32 = jnp.float32
    R = xp_ref.shape[0] - 2            # packed data rows; identical for layers 1-3

    def conv3(in_ref, w_ref, off):
        # Three row-taps (t = -1, 0, +1), contiguous unstrided reads, one matmul each.
        acc = jnp.dot(in_ref[pl.ds(off - 1, R), :], w_ref[0], preferred_element_type=f32)
        acc = acc + jnp.dot(in_ref[pl.ds(off, R), :], w_ref[1], preferred_element_type=f32)
        acc = acc + jnp.dot(in_ref[pl.ds(off + 1, R), :], w_ref[2], preferred_element_type=f32)
        return acc

    def bn_lrelu(acc, g_ref, b_ref, fl_ref, flt_ref):
        # Single-pass training-mode BatchNorm2d stats (sum / sum-of-squares),
        # channel fold via one small matmul, then fused scale/shift + LeakyReLU.
        C = fl_ref.shape[1]
        cnt = float(R * acc.shape[1] // C)
        s1 = jnp.sum(acc, axis=0, keepdims=True)
        s2 = jnp.sum(acc * acc, axis=0, keepdims=True)
        mean_c = jnp.dot(s1, fl_ref[...], preferred_element_type=f32) / cnt
        ex2_c = jnp.dot(s2, fl_ref[...], preferred_element_type=f32) / cnt
        var_c = ex2_c - mean_c * mean_c
        scale_c = g_ref[...] * lax.rsqrt(var_c + BN_EPS)
        shift_c = b_ref[...] - mean_c * scale_c
        scale_l = jnp.dot(scale_c, flt_ref[...], preferred_element_type=f32)
        shift_l = jnp.dot(shift_c, flt_ref[...], preferred_element_type=f32)
        return _leaky(acc * scale_l + shift_l)

    def store_padded(a_ref, y):
        # Zero only the two padding rows that the next layer's taps read.
        zrow = jnp.zeros((1, a_ref.shape[1]), f32)
        a_ref[pl.ds(PAD_TOP - 1, 1), :] = zrow
        a_ref[pl.ds(PAD_TOP + R, 1), :] = zrow
        a_ref[pl.ds(PAD_TOP, R), :] = y

    # ---- layer 1: Conv2d(nc, ndf, (4,3), 2, 1) + LeakyReLU --------------------
    store_padded(a1_ref, _leaky(conv3(xp_ref, w1_ref, 1)))

    # ---- layer 2: Conv2d(ndf, 2ndf, 4, 2, 1) + BN + LeakyReLU -----------------
    acc2 = conv3(a1_ref, w2_ref, PAD_TOP)
    store_padded(a2_ref, bn_lrelu(acc2, g2_ref, b2_ref, fl2_ref, fl2t_ref))

    # ---- layer 3: Conv2d(2ndf, 4ndf, 4, 2, 1) + BN + LeakyReLU ----------------
    acc3 = conv3(a2_ref, w3_ref, PAD_TOP)
    a3 = bn_lrelu(acc3, g3_ref, b3_ref, fl3_ref, fl3t_ref)     # (H3, B*W3*C3)

    # ---- layer 4: Conv2d(4ndf, nz, (32,1), 1, 0): 3 matmuls + diagonal mask ---
    z = jnp.dot(wr_ref[...], a3, preferred_element_type=f32)          # (nz*C3, B*W3*C3)
    s = jnp.dot(gt_ref[...], z * msk_ref[...], preferred_element_type=f32)   # (nz, B*W3*C3)
    out_ref[...] = jnp.dot(s, gs_ref[...], preferred_element_type=f32)       # (nz, B*W3)


# ---------------------------------------------------------------------------
# Wrapper
# ---------------------------------------------------------------------------
def encoder_forward(x_nchw, packed):
    """Matches Encoder.forward (training-mode BN): NCHW in -> NCHW out."""
    f32 = jnp.float32
    B, nc, H, W = x_nchw.shape
    w1p, w2p, w3p = packed["w1p"], packed["w2p"], packed["w3p"]
    F = w1p.shape[1] // (B * W * nc)           # input H-pack factor (8)
    R = H // F                                 # packed data rows (32)
    L1, L2 = w1p.shape[2], w2p.shape[2]        # lane widths of a1 / a2
    nz = packed["gt"].shape[0]
    W4 = packed["gs"].shape[1] // B

    # H-pair-packed input: rows = H/F (+ one zero pad row top/bottom),
    # lanes = (b, q, w, ci) with ci innermost.
    t = x_nchw.astype(f32).transpose(0, 2, 3, 1).reshape(B, R, F, W * nc)
    xp = jnp.pad(t.transpose(1, 0, 2, 3).reshape(R, B * F * W * nc), ((1, 1), (0, 0)))

    vmem = pl.BlockSpec(memory_space=pltpu.MemorySpace.VMEM)
    rows_buf = PAD_TOP + R + 8
    out = pl.pallas_call(
        _encoder_kernel,
        out_shape=jax.ShapeDtypeStruct((nz, B * W4), f32),
        in_specs=[vmem] * 16,
        out_specs=vmem,
        scratch_shapes=[
            pltpu.VMEM((rows_buf, L1), f32),   # layer-1 activation (H-pair packed)
            pltpu.VMEM((rows_buf, L2), f32),   # layer-2 activation (H-pair packed)
        ],
    )(xp, w1p, w2p, w3p,
      packed["g2"], packed["b2"], packed["fl2"], packed["fl2t"],
      packed["g3"], packed["b3"], packed["fl3"], packed["fl3t"],
      packed["wr"], packed["msk"], packed["gt"], packed["gs"])

    # (nz, B*W4) -> NCHW (B, nz, 1, W4)
    return out.reshape(nz, B, W4).transpose(1, 0, 2).reshape(B, nz, 1, W4)


# ---------------------------------------------------------------------------
# Pure-JAX reference (same semantics as the PyTorch module in training mode)
# ---------------------------------------------------------------------------
def _reference_forward(x, params):
    dn = ("NCHW", "OIHW", "NCHW")

    def conv(v, w, stride, pad):
        return lax.conv_general_dilated(v, w, window_strides=stride, padding=pad,
                                        dimension_numbers=dn)

    def lrelu(v):
        return jnp.where(v >= 0, v, NEG_SLOPE * v)

    def bn(v, g, b):
        mean = jnp.mean(v, axis=(0, 2, 3), keepdims=True)
        var = jnp.mean((v - mean) ** 2, axis=(0, 2, 3), keepdims=True)
        return (v - mean) * lax.rsqrt(var + BN_EPS) * g.reshape(1, -1, 1, 1) \
               + b.reshape(1, -1, 1, 1)

    y = lrelu(conv(x, params["w1"], (2, 2), ((1, 1), (1, 1))))
    y = lrelu(bn(conv(y, params["w2"], (2, 2), ((1, 1), (1, 1))), params["g2"], params["b2"]))
    y = lrelu(bn(conv(y, params["w3"], (2, 2), ((1, 1), (1, 1))), params["g3"], params["b3"]))
    y = conv(y, params["w4"], (1, 1), ((0, 0), (0, 0)))
    return y


# ---------------------------------------------------------------------------
# main
# ---------------------------------------------------------------------------
if __name__ == "__main__":
    nc, ndf, nz = 3, 4, 8
    B, H, W = 2, 256, 16   # H=256 is required by the final (32,1) conv

    key = jax.random.PRNGKey(0)
    ks = jax.random.split(key, 7)
    params = {
        # PyTorch Conv2d weight layout: (Cout, Cin, kh, kw)
        "w1": 0.02 * jax.random.normal(ks[0], (ndf, nc, 4, 3), jnp.float32),
        "w2": 0.02 * jax.random.normal(ks[1], (ndf * 2, ndf, 4, 4), jnp.float32),
        "g2": 1.0 + 0.02 * jax.random.normal(ks[2], (ndf * 2,), jnp.float32),
        "b2": jnp.zeros((ndf * 2,), jnp.float32),
        "w3": 0.02 * jax.random.normal(ks[3], (ndf * 4, ndf * 2, 4, 4), jnp.float32),
        "g3": 1.0 + 0.02 * jax.random.normal(ks[4], (ndf * 4,), jnp.float32),
        "b3": jnp.zeros((ndf * 4,), jnp.float32),
        "w4": 0.02 * jax.random.normal(ks[5], (nz, ndf * 4, 32, 1), jnp.float32),
    }
    x = jax.random.normal(ks[6], (B, nc, H, W), jnp.float32)

    packed = prepack_encoder_params(params, B, H, W)       # host, once per param set
    fwd = jax.jit(encoder_forward)

    out = jax.block_until_ready(fwd(x, packed))

    # expected: H: 256->128->64->32->1, W: 16->8->4->2->2
    assert out.shape == (B, nz, 1, 2), out.shape
    assert out.dtype == jnp.float32
    assert bool(jnp.all(jnp.isfinite(out)))

    ref = jax.block_until_ready(jax.jit(_reference_forward)(x, params))
    assert bool(jnp.allclose(out, ref, atol=1e-3, rtol=1e-3)), \
        float(jnp.max(jnp.abs(out - ref)))

    print("KERNEL_OK")
</pallas_src>

<mosaic_0001>
module attributes {stable_mosaic.version = 11 : i64} {
  func.func @_encoder_kernel(%arg0: memref<34x768xf32, #tpu.memory_space<vmem>>, %arg1: memref<3x768x256xf32, #tpu.memory_space<vmem>>, %arg2: memref<3x256x128xf32, #tpu.memory_space<vmem>>, %arg3: memref<3x128x64xf32, #tpu.memory_space<vmem>>, %arg4: memref<1x8xf32, #tpu.memory_space<vmem>>, %arg5: memref<1x8xf32, #tpu.memory_space<vmem>>, %arg6: memref<128x8xf32, #tpu.memory_space<vmem>>, %arg7: memref<8x128xf32, #tpu.memory_space<vmem>>, %arg8: memref<1x16xf32, #tpu.memory_space<vmem>>, %arg9: memref<1x16xf32, #tpu.memory_space<vmem>>, %arg10: memref<64x16xf32, #tpu.memory_space<vmem>>, %arg11: memref<16x64xf32, #tpu.memory_space<vmem>>, %arg12: memref<128x32xf32, #tpu.memory_space<vmem>>, %arg13: memref<128x64xf32, #tpu.memory_space<vmem>>, %arg14: memref<8x128xf32, #tpu.memory_space<vmem>>, %arg15: memref<64x4xf32, #tpu.memory_space<vmem>>, %arg16: memref<8x4xf32, #tpu.memory_space<vmem>>, %arg17: memref<48x256xf32, #tpu.memory_space<vmem>>, %arg18: memref<48x128xf32, #tpu.memory_space<vmem>>) attributes {dimension_semantics = [], scalar_prefetch = 0 : i64, scratch_operands = 2 : i64, tpu.core_type = #tpu.core_type<tc>} {
    %c0 = arith.constant 0 : index
    %c0_0 = arith.constant 0 : index
    %0 = vector.load %arg0[%c0, %c0_0] : memref<34x768xf32, #tpu.memory_space<vmem>>, vector<32x768xf32>
    %c0_1 = arith.constant 0 : index
    %c0_2 = arith.constant 0 : index
    %c0_3 = arith.constant 0 : index
    %1 = vector.load %arg1[%c0_1, %c0_2, %c0_3] : memref<3x768x256xf32, #tpu.memory_space<vmem>>, vector<1x768x256xf32>
    %2 = vector.shape_cast %1 : vector<1x768x256xf32> to vector<768x256xf32>
    %cst = arith.constant dense<0.000000e+00> : vector<32x256xf32>
    %3 = tpu.matmul %0, %2, %cst {dimension_numbers = #tpu.dot_dimension_numbers<[1], [0], [0], [1], [0, 0, 1, 1], [], []>} : vector<32x768xf32>, vector<768x256xf32>, vector<32x256xf32> -> vector<32x256xf32>
    %c1 = arith.constant 1 : index
    %c0_4 = arith.constant 0 : index
    %4 = vector.load %arg0[%c1, %c0_4] : memref<34x768xf32, #tpu.memory_space<vmem>>, vector<32x768xf32>
    %c1_5 = arith.constant 1 : index
    %c0_6 = arith.constant 0 : index
    %c0_7 = arith.constant 0 : index
    %5 = vector.load %arg1[%c1_5, %c0_6, %c0_7] : memref<3x768x256xf32, #tpu.memory_space<vmem>>, vector<1x768x256xf32>
    %6 = vector.shape_cast %5 : vector<1x768x256xf32> to vector<768x256xf32>
    %cst_8 = arith.constant dense<0.000000e+00> : vector<32x256xf32>
    %7 = tpu.matmul %4, %6, %cst_8 {dimension_numbers = #tpu.dot_dimension_numbers<[1], [0], [0], [1], [0, 0, 1, 1], [], []>} : vector<32x768xf32>, vector<768x256xf32>, vector<32x256xf32> -> vector<32x256xf32>
    %8 = arith.addf %3, %7 : vector<32x256xf32>
    %c2 = arith.constant 2 : index
    %c0_9 = arith.constant 0 : index
    %9 = vector.load %arg0[%c2, %c0_9] : memref<34x768xf32, #tpu.memory_space<vmem>>, vector<32x768xf32>
    %c2_10 = arith.constant 2 : index
    %c0_11 = arith.constant 0 : index
    %c0_12 = arith.constant 0 : index
    %10 = vector.load %arg1[%c2_10, %c0_11, %c0_12] : memref<3x768x256xf32, #tpu.memory_space<vmem>>, vector<1x768x256xf32>
    %11 = vector.shape_cast %10 : vector<1x768x256xf32> to vector<768x256xf32>
    %cst_13 = arith.constant dense<0.000000e+00> : vector<32x256xf32>
    %12 = tpu.matmul %9, %11, %cst_13 {dimension_numbers = #tpu.dot_dimension_numbers<[1], [0], [0], [1], [0, 0, 1, 1], [], []>} : vector<32x768xf32>, vector<768x256xf32>, vector<32x256xf32> -> vector<32x256xf32>
    %13 = arith.addf %8, %12 : vector<32x256xf32>
    %cst_14 = arith.constant 0.000000e+00 : f32
    %14 = vector.broadcast %cst_14 : f32 to vector<32x256xf32>
    %15 = arith.cmpf oge, %13, %14 : vector<32x256xf32>
    %cst_15 = arith.constant 2.000000e-01 : f32
    %16 = vector.broadcast %cst_15 : f32 to vector<32x256xf32>
    %17 = arith.mulf %16, %13 : vector<32x256xf32>
    %18 = arith.select %15, %13, %17 : vector<32x256xi1>, vector<32x256xf32>
    %cst_16 = arith.constant 0.000000e+00 : f32
    %19 = vector.broadcast %cst_16 : f32 to vector<1x256xf32>
    %c7 = arith.constant 7 : index
    %c0_17 = arith.constant 0 : index
    %20 = vector.load %arg17[%c7, %c0_17] : memref<48x256xf32, #tpu.memory_space<vmem>>, vector<1x256xf32>
    tpu.vector_store %arg17[%c7, %c0_17], %19 {strides = array<i32>} : memref<48x256xf32, #tpu.memory_space<vmem>>, vector<1x256xf32>,
    %c40 = arith.constant 40 : index
    %c0_18 = arith.constant 0 : index
    %21 = vector.load %arg17[%c40, %c0_18] : memref<48x256xf32, #tpu.memory_space<vmem>>, vector<1x256xf32>
    tpu.vector_store %arg17[%c40, %c0_18], %19 {strides = array<i32>} : memref<48x256xf32, #tpu.memory_space<vmem>>, vector<1x256xf32>,
    %c8 = arith.constant 8 : index
    %c0_19 = arith.constant 0 : index
    %22 = vector.load %arg17[%c8, %c0_19] : memref<48x256xf32, #tpu.memory_space<vmem>>, vector<32x256xf32>
    tpu.vector_store %arg17[%c8, %c0_19], %18 {strides = array<i32>} : memref<48x256xf32, #tpu.memory_space<vmem>>, vector<32x256xf32>,
    %c7_20 = arith.constant 7 : index
    %c0_21 = arith.constant 0 : index
    %23 = vector.load %arg17[%c7_20, %c0_21] : memref<48x256xf32, #tpu.memory_space<vmem>>, vector<32x256xf32>
    %c0_22 = arith.constant 0 : index
    %c0_23 = arith.constant 0 : index
    %c0_24 = arith.constant 0 : index
    %24 = vector.load %arg2[%c0_22, %c0_23, %c0_24] : memref<3x256x128xf32, #tpu.memory_space<vmem>>, vector<1x256x128xf32>
    %25 = vector.shape_cast %24 : vector<1x256x128xf32> to vector<256x128xf32>
    %cst_25 = arith.constant dense<0.000000e+00> : vector<32x128xf32>
    %26 = tpu.matmul %23, %25, %cst_25 {dimension_numbers = #tpu.dot_dimension_numbers<[1], [0], [0], [1], [0, 0, 1, 1], [], []>} : vector<32x256xf32>, vector<256x128xf32>, vector<32x128xf32> -> vector<32x128xf32>
    %c8_26 = arith.constant 8 : index
    %c0_27 = arith.constant 0 : index
    %27 = vector.load %arg17[%c8_26, %c0_27] : memref<48x256xf32, #tpu.memory_space<vmem>>, vector<32x256xf32>
    %c1_28 = arith.constant 1 : index
    %c0_29 = arith.constant 0 : index
    %c0_30 = arith.constant 0 : index
    %28 = vector.load %arg2[%c1_28, %c0_29, %c0_30] : memref<3x256x128xf32, #tpu.memory_space<vmem>>, vector<1x256x128xf32>
    %29 = vector.shape_cast %28 : vector<1x256x128xf32> to vector<256x128xf32>
    %cst_31 = arith.constant dense<0.000000e+00> : vector<32x128xf32>
    %30 = tpu.matmul %27, %29, %cst_31 {dimension_numbers = #tpu.dot_dimension_numbers<[1], [0], [0], [1], [0, 0, 1, 1], [], []>} : vector<32x256xf32>, vector<256x128xf32>, vector<32x128xf32> -> vector<32x128xf32>
    %31 = arith.addf %26, %30 : vector<32x128xf32>
    %c9 = arith.constant 9 : index
    %c0_32 = arith.constant 0 : index
    %32 = vector.load %arg17[%c9, %c0_32] : memref<48x256xf32, #tpu.memory_space<vmem>>, vector<32x256xf32>
    %c2_33 = arith.constant 2 : index
    %c0_34 = arith.constant 0 : index
    %c0_35 = arith.constant 0 : index
    %33 = vector.load %arg2[%c2_33, %c0_34, %c0_35] : memref<3x256x128xf32, #tpu.memory_space<vmem>>, vector<1x256x128xf32>
    %34 = vector.shape_cast %33 : vector<1x256x128xf32> to vector<256x128xf32>
    %cst_36 = arith.constant dense<0.000000e+00> : vector<32x128xf32>
    %35 = tpu.matmul %32, %34, %cst_36 {dimension_numbers = #tpu.dot_dimension_numbers<[1], [0], [0], [1], [0, 0, 1, 1], [], []>} : vector<32x256xf32>, vector<256x128xf32>, vector<32x128xf32> -> vector<32x128xf32>
    %36 = arith.addf %31, %35 : vector<32x128xf32>
    %cst_37 = arith.constant dense<0.000000e+00> : vector<128xf32>
    %37 = vector.multi_reduction <add>, %36, %cst_37 [0] : vector<32x128xf32> to vector<128xf32>
    %38 = vector.shape_cast %37 : vector<128xf32> to vector<1x128xf32>
    %39 = arith.mulf %36, %36 : vector<32x128xf32>
    %cst_38 = arith.constant dense<0.000000e+00> : vector<128xf32>
    %40 = vector.multi_reduction <add>, %39, %cst_38 [0] : vector<32x128xf32> to vector<128xf32>
    %41 = vector.shape_cast %40 : vector<128xf32> to vector<1x128xf32>
    %c0_39 = arith.constant 0 : index
    %c0_40 = arith.constant 0 : index
    %42 = vector.load %arg6[%c0_39, %c0_40] : memref<128x8xf32, #tpu.memory_space<vmem>>, vector<128x8xf32>
    %cst_41 = arith.constant dense<0.000000e+00> : vector<1x8xf32>
    %43 = tpu.matmul %38, %42, %cst_41 {dimension_numbers = #tpu.dot_dimension_numbers<[1], [0], [0], [1], [0, 0, 1, 1], [], []>} : vector<1x128xf32>, vector<128x8xf32>, vector<1x8xf32> -> vector<1x8xf32>
    %cst_42 = arith.constant 5.120000e+02 : f32
    %44 = vector.broadcast %cst_42 : f32 to vector<1x8xf32>
    %45 = arith.divf %43, %44 : vector<1x8xf32>
    %c0_43 = arith.constant 0 : index
    %c0_44 = arith.constant 0 : index
    %46 = vector.load %arg6[%c0_43, %c0_44] : memref<128x8xf32, #tpu.memory_space<vmem>>, vector<128x8xf32>
    %cst_45 = arith.constant dense<0.000000e+00> : vector<1x8xf32>
    %47 = tpu.matmul %41, %46, %cst_45 {dimension_numbers = #tpu.dot_dimension_numbers<[1], [0], [0], [1], [0, 0, 1, 1], [], []>} : vector<1x128xf32>, vector<128x8xf32>, vector<1x8xf32> -> vector<1x8xf32>
    %cst_46 = arith.constant 5.120000e+02 : f32
    %48 = vector.broadcast %cst_46 : f32 to vector<1x8xf32>
    %49 = arith.divf %47, %48 : vector<1x8xf32>
    %50 = arith.mulf %45, %45 : vector<1x8xf32>
    %51 = arith.subf %49, %50 : vector<1x8xf32>
    %c0_47 = arith.constant 0 : index
    %c0_48 = arith.constant 0 : index
    %52 = vector.load %arg4[%c0_47, %c0_48] : memref<1x8xf32, #tpu.memory_space<vmem>>, vector<1x8xf32>
    %cst_49 = arith.constant 9.99999974E-6 : f32
    %53 = vector.broadcast %cst_49 : f32 to vector<1x8xf32>
    %54 = arith.addf %51, %53 : vector<1x8xf32>
    %55 = math.rsqrt %54 : vector<1x8xf32>
    %56 = arith.mulf %52, %55 : vector<1x8xf32>
    %c0_50 = arith.constant 0 : index
    %c0_51 = arith.constant 0 : index
    %57 = vector.load %arg5[%c0_50, %c0_51] : memref<1x8xf32, #tpu.memory_space<vmem>>, vector<1x8xf32>
    %58 = arith.mulf %45, %56 : vector<1x8xf32>
    %59 = arith.subf %57, %58 : vector<1x8xf32>
    %c0_52 = arith.constant 0 : index
    %c0_53 = arith.constant 0 : index
    %60 = vector.load %arg7[%c0_52, %c0_53] : memref<8x128xf32, #tpu.memory_space<vmem>>, vector<8x128xf32>
    %cst_54 = arith.constant dense<0.000000e+00> : vector<1x128xf32>
    %61 = tpu.matmul %56, %60, %cst_54 {dimension_numbers = #tpu.dot_dimension_numbers<[1], [0], [0], [1], [0, 0, 1, 1], [], []>} : vector<1x8xf32>, vector<8x128xf32>, vector<1x128xf32> -> vector<1x128xf32>
    %c0_55 = arith.constant 0 : index
    %c0_56 = arith.constant 0 : index
    %62 = vector.load %arg7[%c0_55, %c0_56] : memref<8x128xf32, #tpu.memory_space<vmem>>, vector<8x128xf32>
    %cst_57 = arith.constant dense<0.000000e+00> : vector<1x128xf32>
    %63 = tpu.matmul %59, %62, %cst_57 {dimension_numbers = #tpu.dot_dimension_numbers<[1], [0], [0], [1], [0, 0, 1, 1], [], []>} : vector<1x8xf32>, vector<8x128xf32>, vector<1x128xf32> -> vector<1x128xf32>
    %64 = vector.broadcast %61 : vector<1x128xf32> to vector<32x128xf32>
    %65 = arith.mulf %36, %64 : vector<32x128xf32>
    %66 = vector.broadcast %63 : vector<1x128xf32> to vector<32x128xf32>
    %67 = arith.addf %65, %66 : vector<32x128xf32>
    %cst_58 = arith.constant 0.000000e+00 : f32
    %68 = vector.broadcast %cst_58 : f32 to vector<32x128xf32>
    %69 = arith.cmpf oge, %67, %68 : vector<32x128xf32>
    %cst_59 = arith.constant 2.000000e-01 : f32
    %70 = vector.broadcast %cst_59 : f32 to vector<32x128xf32>
    %71 = arith.mulf %70, %67 : vector<32x128xf32>
    %72 = arith.select %69, %67, %71 : vector<32x128xi1>, vector<32x128xf32>
    %cst_60 = arith.constant 0.000000e+00 : f32
    %73 = vector.broadcast %cst_60 : f32 to vector<1x128xf32>
    %c7_61 = arith.constant 7 : index
    %c0_62 = arith.constant 0 : index
    %74 = vector.load %arg18[%c7_61, %c0_62] : memref<48x128xf32, #tpu.memory_space<vmem>>, vector<1x128xf32>
    tpu.vector_store %arg18[%c7_61, %c0_62], %73 {strides = array<i32>} : memref<48x128xf32, #tpu.memory_space<vmem>>, vector<1x128xf32>,
    %c40_63 = arith.constant 40 : index
    %c0_64 = arith.constant 0 : index
    %75 = vector.load %arg18[%c40_63, %c0_64] : memref<48x128xf32, #tpu.memory_space<vmem>>, vector<1x128xf32>
    tpu.vector_store %arg18[%c40_63, %c0_64], %73 {strides = array<i32>} : memref<48x128xf32, #tpu.memory_space<vmem>>, vector<1x128xf32>,
    %c8_65 = arith.constant 8 : index
    %c0_66 = arith.constant 0 : index
    %76 = vector.load %arg18[%c8_65, %c0_66] : memref<48x128xf32, #tpu.memory_space<vmem>>, vector<32x128xf32>
    tpu.vector_store %arg18[%c8_65, %c0_66], %72 {strides = array<i32>} : memref<48x128xf32, #tpu.memory_space<vmem>>, vector<32x128xf32>,
    %c7_67 = arith.constant 7 : index
    %c0_68 = arith.constant 0 : index
    %77 = vector.load %arg18[%c7_67, %c0_68] : memref<48x128xf32, #tpu.memory_space<vmem>>, vector<32x128xf32>
    %c0_69 = arith.constant 0 : index
    %c0_70 = arith.constant 0 : index
    %c0_71 = arith.constant 0 : index
    %78 = vector.load %arg3[%c0_69, %c0_70, %c0_71] : memref<3x128x64xf32, #tpu.memory_space<vmem>>, vector<1x128x64xf32>
    %79 = vector.shape_cast %78 : vector<1x128x64xf32> to vector<128x64xf32>
    %cst_72 = arith.constant dense<0.000000e+00> : vector<32x64xf32>
    %80 = tpu.matmul %77, %79, %cst_72 {dimension_numbers = #tpu.dot_dimension_numbers<[1], [0], [0], [1], [0, 0, 1, 1], [], []>} : vector<32x128xf32>, vector<128x64xf32>, vector<32x64xf32> -> vector<32x64xf32>
    %c8_73 = arith.constant 8 : index
    %c0_74 = arith.constant 0 : index
    %81 = vector.load %arg18[%c8_73, %c0_74] : memref<48x128xf32, #tpu.memory_space<vmem>>, vector<32x128xf32>
    %c1_75 = arith.constant 1 : index
    %c0_76 = arith.constant 0 : index
    %c0_77 = arith.constant 0 : index
    %82 = vector.load %arg3[%c1_75, %c0_76, %c0_77] : memref<3x128x64xf32, #tpu.memory_space<vmem>>, vector<1x128x64xf32>
    %83 = vector.shape_cast %82 : vector<1x128x64xf32> to vector<128x64xf32>
    %cst_78 = arith.constant dense<0.000000e+00> : vector<32x64xf32>
    %84 = tpu.matmul %81, %83, %cst_78 {dimension_numbers = #tpu.dot_dimension_numbers<[1], [0], [0], [1], [0, 0, 1, 1], [], []>} : vector<32x128xf32>, vector<128x64xf32>, vector<32x64xf32> -> vector<32x64xf32>
    %85 = arith.addf %80, %84 : vector<32x64xf32>
    %c9_79 = arith.constant 9 : index
    %c0_80 = arith.constant 0 : index
    %86 = vector.load %arg18[%c9_79, %c0_80] : memref<48x128xf32, #tpu.memory_space<vmem>>, vector<32x128xf32>
    %c2_81 = arith.constant 2 : index
    %c0_82 = arith.constant 0 : index
    %c0_83 = arith.constant 0 : index
    %87 = vector.load %arg3[%c2_81, %c0_82, %c0_83] : memref<3x128x64xf32, #tpu.memory_space<vmem>>, vector<1x128x64xf32>
    %88 = vector.shape_cast %87 : vector<1x128x64xf32> to vector<128x64xf32>
    %cst_84 = arith.constant dense<0.000000e+00> : vector<32x64xf32>
    %89 = tpu.matmul %86, %88, %cst_84 {dimension_numbers = #tpu.dot_dimension_numbers<[1], [0], [0], [1], [0, 0, 1, 1], [], []>} : vector<32x128xf32>, vector<128x64xf32>, vector<32x64xf32> -> vector<32x64xf32>
    %90 = arith.addf %85, %89 : vector<32x64xf32>
    %cst_85 = arith.constant dense<0.000000e+00> : vector<64xf32>
    %91 = vector.multi_reduction <add>, %90, %cst_85 [0] : vector<32x64xf32> to vector<64xf32>
    %92 = vector.shape_cast %91 : vector<64xf32> to vector<1x64xf32>
    %93 = arith.mulf %90, %90 : vector<32x64xf32>
    %cst_86 = arith.constant dense<0.000000e+00> : vector<64xf32>
    %94 = vector.multi_reduction <add>, %93, %cst_86 [0] : vector<32x64xf32> to vector<64xf32>
    %95 = vector.shape_cast %94 : vector<64xf32> to vector<1x64xf32>
    %c0_87 = arith.constant 0 : index
    %c0_88 = arith.constant 0 : index
    %96 = vector.load %arg10[%c0_87, %c0_88] : memref<64x16xf32, #tpu.memory_space<vmem>>, vector<64x16xf32>
    %cst_89 = arith.constant dense<0.000000e+00> : vector<1x16xf32>
    %97 = tpu.matmul %92, %96, %cst_89 {dimension_numbers = #tpu.dot_dimension_numbers<[1], [0], [0], [1], [0, 0, 1, 1], [], []>} : vector<1x64xf32>, vector<64x16xf32>, vector<1x16xf32> -> vector<1x16xf32>
    %cst_90 = arith.constant 1.280000e+02 : f32
    %98 = vector.broadcast %cst_90 : f32 to vector<1x16xf32>
    %99 = arith.divf %97, %98 : vector<1x16xf32>
    %c0_91 = arith.constant 0 : index
    %c0_92 = arith.constant 0 : index
    %100 = vector.load %arg10[%c0_91, %c0_92] : memref<64x16xf32, #tpu.memory_space<vmem>>, vector<64x16xf32>
    %cst_93 = arith.constant dense<0.000000e+00> : vector<1x16xf32>
    %101 = tpu.matmul %95, %100, %cst_93 {dimension_numbers = #tpu.dot_dimension_numbers<[1], [0], [0], [1], [0, 0, 1, 1], [], []>} : vector<1x64xf32>, vector<64x16xf32>, vector<1x16xf32> -> vector<1x16xf32>
    %cst_94 = arith.constant 1.280000e+02 : f32
    %102 = vector.broadcast %cst_94 : f32 to vector<1x16xf32>
    %103 = arith.divf %101, %102 : vector<1x16xf32>
    %104 = arith.mulf %99, %99 : vector<1x16xf32>
    %105 = arith.subf %103, %104 : vector<1x16xf32>
    %c0_95 = arith.constant 0 : index
    %c0_96 = arith.constant 0 : index
    %106 = vector.load %arg8[%c0_95, %c0_96] : memref<1x16xf32, #tpu.memory_space<vmem>>, vector<1x16xf32>
    %cst_97 = arith.constant 9.99999974E-6 : f32
    %107 = vector.broadcast %cst_97 : f32 to vector<1x16xf32>
    %108 = arith.addf %105, %107 : vector<1x16xf32>
    %109 = math.rsqrt %108 : vector<1x16xf32>
    %110 = arith.mulf %106, %109 : vector<1x16xf32>
    %c0_98 = arith.constant 0 : index
    %c0_99 = arith.constant 0 : index
    %111 = vector.load %arg9[%c0_98, %c0_99] : memref<1x16xf32, #tpu.memory_space<vmem>>, vector<1x16xf32>
    %112 = arith.mulf %99, %110 : vector<1x16xf32>
    %113 = arith.subf %111, %112 : vector<1x16xf32>
    %c0_100 = arith.constant 0 : index
    %c0_101 = arith.constant 0 : index
    %114 = vector.load %arg11[%c0_100, %c0_101] : memref<16x64xf32, #tpu.memory_space<vmem>>, vector<16x64xf32>
    %cst_102 = arith.constant dense<0.000000e+00> : vector<1x64xf32>
    %115 = tpu.matmul %110, %114, %cst_102 {dimension_numbers = #tpu.dot_dimension_numbers<[1], [0], [0], [1], [0, 0, 1, 1], [], []>} : vector<1x16xf32>, vector<16x64xf32>, vector<1x64xf32> -> vector<1x64xf32>
    %c0_103 = arith.constant 0 : index
    %c0_104 = arith.constant 0 : index
    %116 = vector.load %arg11[%c0_103, %c0_104] : memref<16x64xf32, #tpu.memory_space<vmem>>, vector<16x64xf32>
    %cst_105 = arith.constant dense<0.000000e+00> : vector<1x64xf32>
    %117 = tpu.matmul %113, %116, %cst_105 {dimension_numbers = #tpu.dot_dimension_numbers<[1], [0], [0], [1], [0, 0, 1, 1], [], []>} : vector<1x16xf32>, vector<16x64xf32>, vector<1x64xf32> -> vector<1x64xf32>
    %118 = vector.broadcast %115 : vector<1x64xf32> to vector<32x64xf32>
    %119 = arith.mulf %90, %118 : vector<32x64xf32>
    %120 = vector.broadcast %117 : vector<1x64xf32> to vector<32x64xf32>
    %121 = arith.addf %119, %120 : vector<32x64xf32>
    %cst_106 = arith.constant 0.000000e+00 : f32
    %122 = vector.broadcast %cst_106 : f32 to vector<32x64xf32>
    %123 = arith.cmpf oge, %121, %122 : vector<32x64xf32>
    %cst_107 = arith.constant 2.000000e-01 : f32
    %124 = vector.broadcast %cst_107 : f32 to vector<32x64xf32>
    %125 = arith.mulf %124, %121 : vector<32x64xf32>
    %126 = arith.select %123, %121, %125 : vector<32x64xi1>, vector<32x64xf32>
    %c0_108 = arith.constant 0 : index
    %c0_109 = arith.constant 0 : index
    %127 = vector.load %arg12[%c0_108, %c0_109] : memref<128x32xf32, #tpu.memory_space<vmem>>, vector<128x32xf32>
    %cst_110 = arith.constant dense<0.000000e+00> : vector<128x64xf32>
    %128 = tpu.matmul %127, %126, %cst_110 {dimension_numbers = #tpu.dot_dimension_numbers<[1], [0], [0], [1], [0, 0, 1, 1], [], []>} : vector<128x32xf32>, vector<32x64xf32>, vector<128x64xf32> -> vector<128x64xf32>
    %c0_111 = arith.constant 0 : index
    %c0_112 = arith.constant 0 : index
    %129 = vector.load %arg14[%c0_111, %c0_112] : memref<8x128xf32, #tpu.memory_space<vmem>>, vector<8x128xf32>
    %c0_113 = arith.constant 0 : index
    %c0_114 = arith.constant 0 : index
    %130 = vector.load %arg13[%c0_113, %c0_114] : memref<128x64xf32, #tpu.memory_space<vmem>>, vector<128x64xf32>
    %131 = arith.mulf %128, %130 : vector<128x64xf32>
    %cst_115 = arith.constant dense<0.000000e+00> : vector<8x64xf32>
    %132 = tpu.matmul %129, %131, %cst_115 {dimension_numbers = #tpu.dot_dimension_numbers<[1], [0], [0], [1], [0, 0, 1, 1], [], []>} : vector<8x128xf32>, vector<128x64xf32>, vector<8x64xf32> -> vector<8x64xf32>
    %c0_116 = arith.constant 0 : index
    %c0_117 = arith.constant 0 : index
    %133 = vector.load %arg15[%c0_116, %c0_117] : memref<64x4xf32, #tpu.memory_space<vmem>>, vector<64x4xf32>
    %cst_118 = arith.constant dense<0.000000e+00> : vector<8x4xf32>
    %134 = tpu.matmul %132, %133, %cst_118 {dimension_numbers = #tpu.dot_dimension_numbers<[1], [0], [0], [1], [0, 0, 1, 1], [], []>} : vector<8x64xf32>, vector<64x4xf32>, vector<8x4xf32> -> vector<8x4xf32>
    %c0_119 = arith.constant 0 : index
    %c0_120 = arith.constant 0 : index
    %135 = vector.load %arg16[%c0_119, %c0_120] : memref<8x4xf32, #tpu.memory_space<vmem>>, vector<8x4xf32>
    tpu.vector_store %arg16[%c0_119, %c0_120], %134 {strides = array<i32>} : memref<8x4xf32, #tpu.memory_space<vmem>>, vector<8x4xf32>,
    return
  }
}

</mosaic_0001>

<llo_original>
// kernel: encoder_forward.1
$region0: #{encoder_forward.1}
  #allocation0 [shape = 'u32[]', space=smem, size = 0x4, offset = 0x4, fixed_abs, tag = 'smem constant byte address 0x4 - core index']
  #allocation1 [shape = 'u32[144,128]{1,0:T(1,128)}', space=vmem, size = 0x12000, scoped, tag = 'internal scratch']
  #allocation2 [shape = 'f32[48,256]{1,0:T(8,128)}', space=vmem, size = 0xc000, scoped, tag = 'scratch operand']
  #allocation3 [shape = 'f32[48,128]{1,0:T(8,128)}', space=vmem, size = 0x6000, scoped, tag = 'scratch operand']
  %s0 = inlined_call_operand.vmem [shape: f32[34,768], index: 0, kind: input, shape index: {}]
  %s1 = inlined_call_operand.vmem [shape: f32[3,768,256], index: 1, kind: input, shape index: {}]
  %s2 = inlined_call_operand.vmem [shape: f32[3,256,128], index: 2, kind: input, shape index: {}]
  %s3 = inlined_call_operand.vmem [shape: f32[3,128,64], index: 3, kind: input, shape index: {}]
  %s4 = inlined_call_operand.vmem [shape: f32[1,8], index: 4, kind: input, shape index: {}]
  %s5 = inlined_call_operand.vmem [shape: f32[1,8], index: 5, kind: input, shape index: {}]
  %s6 = inlined_call_operand.vmem [shape: f32[128,8], index: 6, kind: input, shape index: {}]
  %s7 = inlined_call_operand.vmem [shape: f32[8,128], index: 7, kind: input, shape index: {}]
  %s8 = inlined_call_operand.vmem [shape: f32[1,16], index: 8, kind: input, shape index: {}]
  %s9 = inlined_call_operand.vmem [shape: f32[1,16], index: 9, kind: input, shape index: {}]
  %s10 = inlined_call_operand.vmem [shape: f32[64,16], index: 10, kind: input, shape index: {}]
  %s11 = inlined_call_operand.vmem [shape: f32[16,64], index: 11, kind: input, shape index: {}]
  %s12 = inlined_call_operand.vmem [shape: f32[128,32], index: 12, kind: input, shape index: {}]
  %s13 = inlined_call_operand.vmem [shape: f32[128,64], index: 13, kind: input, shape index: {}]
  %s14 = inlined_call_operand.vmem [shape: f32[8,128], index: 14, kind: input, shape index: {}]
  %s15 = inlined_call_operand.vmem [shape: f32[64,4], index: 15, kind: input, shape index: {}]
  %s16 = inlined_call_operand.vmem [shape: f32[8,4], index: 16, kind: output, shape index: {}]
  %s17 = sld [smem:[#allocation0]]
  $region74: #{encoder_forward.1} parent=0
    _
  %s19 = ssub.s32 1, %s17
  %s20 = scalar_select 0, %s19, %s17
  // Predicated region
  $region2: #{encoder_forward.1} parent=0 // pred_check
    _
  $region3: #{encoder_forward.1} parent=0 // pred_check_branch
    %22 = sbr.rel (0) target = $region5
  $region4: #{encoder_forward.1} parent=0 // pred_region
    _
  $region5: #{encoder_forward.1} parent=0 // pred_fallthru
    _
  // Predicated region
  $region6: #{encoder_forward.1} parent=0 // pred_check
    _
  $region7: #{encoder_forward.1} parent=0 // pred_check_branch
    %24 = sbr.rel (0) target = $region9
  $region8: #{encoder_forward.1} parent=0 // pred_region
    _
  $region9: #{encoder_forward.1} parent=0 // pred_fallthru
    _
  // Predicated region
  $region10: #{encoder_forward.1} parent=0 // pred_check
    _
  $region11: #{encoder_forward.1} parent=0 // pred_check_branch
    %26 = sbr.rel (0) target = $region13
  $region12: #{encoder_forward.1} parent=0 // pred_region
    _
  $region13: #{encoder_forward.1} parent=0 // pred_fallthru
    _
  // Predicated region
  $region14: #{encoder_forward.1} parent=0 // pred_check
    _
  $region15: #{encoder_forward.1} parent=0 // pred_check_branch
    %28 = sbr.rel (0) target = $region17
  $region16: #{encoder_forward.1} parent=0 // pred_region
    _
  $region17: #{encoder_forward.1} parent=0 // pred_fallthru
    _
  // Predicated region
  $region18: #{encoder_forward.1} parent=0 // pred_check
    _
  $region19: #{encoder_forward.1} parent=0 // pred_check_branch
    %30 = sbr.rel (0) target = $region21
  $region20: #{encoder_forward.1} parent=0 // pred_region
    _
  $region21: #{encoder_forward.1} parent=0 // pred_fallthru
    _
  // Predicated region
  $region22: #{encoder_forward.1} parent=0 // pred_check
    _
  $region23: #{encoder_forward.1} parent=0 // pred_check_branch
    %32 = sbr.rel (0) target = $region25
  $region24: #{encoder_forward.1} parent=0 // pred_region
    _
  $region25: #{encoder_forward.1} parent=0 // pred_fallthru
    _
  // Predicated region
  $region26: #{encoder_forward.1} parent=0 // pred_check
    _
  $region27: #{encoder_forward.1} parent=0 // pred_check_branch
    %34 = sbr.rel (0) target = $region29
  $region28: #{encoder_forward.1} parent=0 // pred_region
    _
  $region29: #{encoder_forward.1} parent=0 // pred_fallthru
    _
  // Predicated region
  $region30: #{encoder_forward.1} parent=0 // pred_check
    _
  $region31: #{encoder_forward.1} parent=0 // pred_check_branch
    %36 = sbr.rel (0) target = $region33
  $region32: #{encoder_forward.1} parent=0 // pred_region
    _
  $region33: #{encoder_forward.1} parent=0 // pred_fallthru
    _
  // Predicated region
  $region34: #{encoder_forward.1} parent=0 // pred_check
    _
  $region35: #{encoder_forward.1} parent=0 // pred_check_branch
    %38 = sbr.rel (0) target = $region37
  $region36: #{encoder_forward.1} parent=0 // pred_region
    _
  $region37: #{encoder_forward.1} parent=0 // pred_fallthru
    _
  // Predicated region
  $region38: #{encoder_forward.1} parent=0 // pred_check
    _
  $region39: #{encoder_forward.1} parent=0 // pred_check_branch
    %40 = sbr.rel (0) target = $region41
  $region40: #{encoder_forward.1} parent=0 // pred_region
    _
  $region41: #{encoder_forward.1} parent=0 // pred_fallthru
    _
  // Predicated region
  $region42: #{encoder_forward.1} parent=0 // pred_check
    _
  $region43: #{encoder_forward.1} parent=0 // pred_check_branch
    %42 = sbr.rel (0) target = $region45
  $region44: #{encoder_forward.1} parent=0 // pred_region
    _
  $region45: #{encoder_forward.1} parent=0 // pred_fallthru
    _
  // Predicated region
  $region46: #{encoder_forward.1} parent=0 // pred_check
    _
  $region47: #{encoder_forward.1} parent=0 // pred_check_branch
    %44 = sbr.rel (0) target = $region49
  $region48: #{encoder_forward.1} parent=0 // pred_region
    _
  $region49: #{encoder_forward.1} parent=0 // pred_fallthru
    _
  // Predicated region
  $region50: #{encoder_forward.1} parent=0 // pred_check
    _
  $region51: #{encoder_forward.1} parent=0 // pred_check_branch
    %46 = sbr.rel (0) target = $region53
  $region52: #{encoder_forward.1} parent=0 // pred_region
    _
  $region53: #{encoder_forward.1} parent=0 // pred_fallthru
    _
  // Predicated region
  $region54: #{encoder_forward.1} parent=0 // pred_check
    _
  $region55: #{encoder_forward.1} parent=0 // pred_check_branch
    %48 = sbr.rel (0) target = $region57
  $region56: #{encoder_forward.1} parent=0 // pred_region
    _
  $region57: #{encoder_forward.1} parent=0 // pred_fallthru
    _
  // Predicated region
  $region58: #{encoder_forward.1} parent=0 // pred_check
    _
  $region59: #{encoder_forward.1} parent=0 // pred_check_branch
    %50 = sbr.rel (0) target = $region61
  $region60: #{encoder_forward.1} parent=0 // pred_region
    _
  $region61: #{encoder_forward.1} parent=0 // pred_fallthru
    _
  // Predicated region
  $region62: #{encoder_forward.1} parent=0 // pred_check
    _
  $region63: #{encoder_forward.1} parent=0 // pred_check_branch
    %52 = sbr.rel (0) target = $region65
  $region64: #{encoder_forward.1} parent=0 // pred_region
    _
  $region65: #{encoder_forward.1} parent=0 // pred_fallthru
    _
  %v53 = vld [vmem:[%s0] sm:$0xff]
  %v54 = vld [vmem:[%s0 + $0x8] sm:$0xff]
  %v55 = vld [vmem:[%s0 + $0x10] sm:$0xff]
  %v56 = vld [vmem:[%s0 + $0x18] sm:$0xff]
  %v57 = vld [vmem:[%s0 + $0x20] sm:$0xff]
  %v58 = vld [vmem:[%s0 + $0x28] sm:$0xff]
  %v59 = vld [vmem:[%s0 + $0x30] sm:$0xff]
  %v60 = vld [vmem:[%s0 + $0x38] sm:$0xff]
  %v61 = vld [vmem:[%s0 + $0x40] sm:$0xff]
  %v62 = vld [vmem:[%s0 + $0x48] sm:$0xff]
  %v63 = vld [vmem:[%s0 + $0x50] sm:$0xff]
  %v64 = vld [vmem:[%s0 + $0x58] sm:$0xff]
  %v65 = vld [vmem:[%s0 + $0x60] sm:$0xff]
  %v66 = vld [vmem:[%s0 + $0x68] sm:$0xff]
  %v67 = vld [vmem:[%s0 + $0x70] sm:$0xff]
  %v68 = vld [vmem:[%s0 + $0x78] sm:$0xff]
  %v69 = vld [vmem:[%s0 + $0x80] sm:$0xff]
  %v70 = vld [vmem:[%s0 + $0x88] sm:$0xff]
  %v71 = vld [vmem:[%s0 + $0x90] sm:$0xff]
  %v72 = vld [vmem:[%s0 + $0x98] sm:$0xff]
  %v73 = vld [vmem:[%s0 + $0xa0] sm:$0xff]
  %v74 = vld [vmem:[%s0 + $0xa8] sm:$0xff]
  %v75 = vld [vmem:[%s0 + $0xb0] sm:$0xff]
  %v76 = vld [vmem:[%s0 + $0xb8] sm:$0xff]
  %v77 = vld [vmem:[%s1] sm:$0xff]
  %v78 = vld [vmem:[%s1 + $0x8] sm:$0xff]
  %v79 = vld [vmem:[%s1 + $0x10] sm:$0xff]
  %v80 = vld [vmem:[%s1 + $0x18] sm:$0xff]
  %v81 = vld [vmem:[%s1 + $0x20] sm:$0xff]
  %v82 = vld [vmem:[%s1 + $0x28] sm:$0xff]
  %v83 = vld [vmem:[%s1 + $0x30] sm:$0xff]
  %v84 = vld [vmem:[%s1 + $0x38] sm:$0xff]
  %v85 = vld [vmem:[%s1 + $0x40] sm:$0xff]
  %v86 = vld [vmem:[%s1 + $0x48] sm:$0xff]
  %v87 = vld [vmem:[%s1 + $0x50] sm:$0xff]
  %v88 = vld [vmem:[%s1 + $0x58] sm:$0xff]
  %v89 = vld [vmem:[%s1 + $0x60] sm:$0xff]
  %v90 = vld [vmem:[%s1 + $0x68] sm:$0xff]
  %v91 = vld [vmem:[%s1 + $0x70] sm:$0xff]
  %v92 = vld [vmem:[%s1 + $0x78] sm:$0xff]
  %v93 = vld [vmem:[%s1 + $0x80] sm:$0xff]
  %v94 = vld [vmem:[%s1 + $0x88] sm:$0xff]
  %v95 = vld [vmem:[%s1 + $0x90] sm:$0xff]
  %v96 = vld [vmem:[%s1 + $0x98] sm:$0xff]
  %v97 = vld [vmem:[%s1 + $0xa0] sm:$0xff]
  %v98 = vld [vmem:[%s1 + $0xa8] sm:$0xff]
  %v99 = vld [vmem:[%s1 + $0xb0] sm:$0xff]
  %v100 = vld [vmem:[%s1 + $0xb8] sm:$0xff]
  %v101 = vld [vmem:[%s1 + $0xc0] sm:$0xff]
  %v102 = vld [vmem:[%s1 + $0xc8] sm:$0xff]
  %v103 = vld [vmem:[%s1 + $0xd0] sm:$0xff]
  %v104 = vld [vmem:[%s1 + $0xd8] sm:$0xff]
  %v105 = vld [vmem:[%s1 + $0xe0] sm:$0xff]
  %v106 = vld [vmem:[%s1 + $0xe8] sm:$0xff]
  %v107 = vld [vmem:[%s1 + $0xf0] sm:$0xff]
  %v108 = vld [vmem:[%s1 + $0xf8] sm:$0xff]
  %v109 = vld [vmem:[%s1 + $0x100] sm:$0xff]
  %v110 = vld [vmem:[%s1 + $0x108] sm:$0xff]
  %v111 = vld [vmem:[%s1 + $0x110] sm:$0xff]
  %v112 = vld [vmem:[%s1 + $0x118] sm:$0xff]
  %v113 = vld [vmem:[%s1 + $0x120] sm:$0xff]
  %v114 = vld [vmem:[%s1 + $0x128] sm:$0xff]
  %v115 = vld [vmem:[%s1 + $0x130] sm:$0xff]
  %v116 = vld [vmem:[%s1 + $0x138] sm:$0xff]
  %v117 = vld [vmem:[%s1 + $0x140] sm:$0xff]
  %v118 = vld [vmem:[%s1 + $0x148] sm:$0xff]
  %v119 = vld [vmem:[%s1 + $0x150] sm:$0xff]
  %v120 = vld [vmem:[%s1 + $0x158] sm:$0xff]
  %v121 = vld [vmem:[%s1 + $0x160] sm:$0xff]
  %v122 = vld [vmem:[%s1 + $0x168] sm:$0xff]
  %v123 = vld [vmem:[%s1 + $0x170] sm:$0xff]
  %v124 = vld [vmem:[%s1 + $0x178] sm:$0xff]
  %v125 = vld [vmem:[%s1 + $0x180] sm:$0xff]
  %v126 = vld [vmem:[%s1 + $0x188] sm:$0xff]
  %v127 = vld [vmem:[%s1 + $0x190] sm:$0xff]
  %v128 = vld [vmem:[%s1 + $0x198] sm:$0xff]
  %v129 = vld [vmem:[%s1 + $0x1a0] sm:$0xff]
  %v130 = vld [vmem:[%s1 + $0x1a8] sm:$0xff]
  %v131 = vld [vmem:[%s1 + $0x1b0] sm:$0xff]
  %v132 = vld [vmem:[%s1 + $0x1b8] sm:$0xff]
  %v133 = vld [vmem:[%s1 + $0x1c0] sm:$0xff]
  %v134 = vld [vmem:[%s1 + $0x1c8] sm:$0xff]
  %v135 = vld [vmem:[%s1 + $0x1d0] sm:$0xff]
  %v136 = vld [vmem:[%s1 + $0x1d8] sm:$0xff]
  %v137 = vld [vmem:[%s1 + $0x1e0] sm:$0xff]
  %v138 = vld [vmem:[%s1 + $0x1e8] sm:$0xff]
  %v139 = vld [vmem:[%s1 + $0x1f0] sm:$0xff]
  %v140 = vld [vmem:[%s1 + $0x1f8] sm:$0xff]
  %v141 = vld [vmem:[%s1 + $0x200] sm:$0xff]
  %v142 = vld [vmem:[%s1 + $0x208] sm:$0xff]
  %v143 = vld [vmem:[%s1 + $0x210] sm:$0xff]
  %v144 = vld [vmem:[%s1 + $0x218] sm:$0xff]
  %v145 = vld [vmem:[%s1 + $0x220] sm:$0xff]
  %v146 = vld [vmem:[%s1 + $0x228] sm:$0xff]
  %v147 = vld [vmem:[%s1 + $0x230] sm:$0xff]
  %v148 = vld [vmem:[%s1 + $0x238] sm:$0xff]
  %v149 = vld [vmem:[%s1 + $0x240] sm:$0xff]
  %v150 = vld [vmem:[%s1 + $0x248] sm:$0xff]
  %v151 = vld [vmem:[%s1 + $0x250] sm:$0xff]
  %v152 = vld [vmem:[%s1 + $0x258] sm:$0xff]
  %v153 = vld [vmem:[%s1 + $0x260] sm:$0xff]
  %v154 = vld [vmem:[%s1 + $0x268] sm:$0xff]
  %v155 = vld [vmem:[%s1 + $0x270] sm:$0xff]
  %v156 = vld [vmem:[%s1 + $0x278] sm:$0xff]
  %v157 = vld [vmem:[%s1 + $0x280] sm:$0xff]
  %v158 = vld [vmem:[%s1 + $0x288] sm:$0xff]
  %v159 = vld [vmem:[%s1 + $0x290] sm:$0xff]
  %v160 = vld [vmem:[%s1 + $0x298] sm:$0xff]
  %v161 = vld [vmem:[%s1 + $0x2a0] sm:$0xff]
  %v162 = vld [vmem:[%s1 + $0x2a8] sm:$0xff]
  %v163 = vld [vmem:[%s1 + $0x2b0] sm:$0xff]
  %v164 = vld [vmem:[%s1 + $0x2b8] sm:$0xff]
  %v165 = vld [vmem:[%s1 + $0x2c0] sm:$0xff]
  %v166 = vld [vmem:[%s1 + $0x2c8] sm:$0xff]
  %v167 = vld [vmem:[%s1 + $0x2d0] sm:$0xff]
  %v168 = vld [vmem:[%s1 + $0x2d8] sm:$0xff]
  %v169 = vld [vmem:[%s1 + $0x2e0] sm:$0xff]
  %v170 = vld [vmem:[%s1 + $0x2e8] sm:$0xff]
  %v171 = vld [vmem:[%s1 + $0x2f0] sm:$0xff]
  %v172 = vld [vmem:[%s1 + $0x2f8] sm:$0xff]
  %v173 = vld [vmem:[%s1 + $0x300] sm:$0xff]
  %v174 = vld [vmem:[%s1 + $0x308] sm:$0xff]
  %v175 = vld [vmem:[%s1 + $0x310] sm:$0xff]
  %v176 = vld [vmem:[%s1 + $0x318] sm:$0xff]
  %v177 = vld [vmem:[%s1 + $0x320] sm:$0xff]
  %v178 = vld [vmem:[%s1 + $0x328] sm:$0xff]
  %v179 = vld [vmem:[%s1 + $0x330] sm:$0xff]
  %v180 = vld [vmem:[%s1 + $0x338] sm:$0xff]
  %v181 = vld [vmem:[%s1 + $0x340] sm:$0xff]
  %v182 = vld [vmem:[%s1 + $0x348] sm:$0xff]
  %v183 = vld [vmem:[%s1 + $0x350] sm:$0xff]
  %v184 = vld [vmem:[%s1 + $0x358] sm:$0xff]
  %v185 = vld [vmem:[%s1 + $0x360] sm:$0xff]
  %v186 = vld [vmem:[%s1 + $0x368] sm:$0xff]
  %v187 = vld [vmem:[%s1 + $0x370] sm:$0xff]
  %v188 = vld [vmem:[%s1 + $0x378] sm:$0xff]
  %v189 = vld [vmem:[%s1 + $0x380] sm:$0xff]
  %v190 = vld [vmem:[%s1 + $0x388] sm:$0xff]
  %v191 = vld [vmem:[%s1 + $0x390] sm:$0xff]
  %v192 = vld [vmem:[%s1 + $0x398] sm:$0xff]
  %v193 = vld [vmem:[%s1 + $0x3a0] sm:$0xff]
  %v194 = vld [vmem:[%s1 + $0x3a8] sm:$0xff]
  %v195 = vld [vmem:[%s1 + $0x3b0] sm:$0xff]
  %v196 = vld [vmem:[%s1 + $0x3b8] sm:$0xff]
  %v197 = vld [vmem:[%s1 + $0x3c0] sm:$0xff]
  %v198 = vld [vmem:[%s1 + $0x3c8] sm:$0xff]
  %v199 = vld [vmem:[%s1 + $0x3d0] sm:$0xff]
  %v200 = vld [vmem:[%s1 + $0x3d8] sm:$0xff]
  %v201 = vld [vmem:[%s1 + $0x3e0] sm:$0xff]
  %v202 = vld [vmem:[%s1 + $0x3e8] sm:$0xff]
  %v203 = vld [vmem:[%s1 + $0x3f0] sm:$0xff]
  %v204 = vld [vmem:[%s1 + $0x3f8] sm:$0xff]
  %v205 = vld [vmem:[%s1 + $0x400] sm:$0xff]
  %v206 = vld [vmem:[%s1 + $0x408] sm:$0xff]
  %v207 = vld [vmem:[%s1 + $0x410] sm:$0xff]
  %v208 = vld [vmem:[%s1 + $0x418] sm:$0xff]
  %v209 = vld [vmem:[%s1 + $0x420] sm:$0xff]
  %v210 = vld [vmem:[%s1 + $0x428] sm:$0xff]
  %v211 = vld [vmem:[%s1 + $0x430] sm:$0xff]
  %v212 = vld [vmem:[%s1 + $0x438] sm:$0xff]
  %v213 = vld [vmem:[%s1 + $0x440] sm:$0xff]
  %v214 = vld [vmem:[%s1 + $0x448] sm:$0xff]
  %v215 = vld [vmem:[%s1 + $0x450] sm:$0xff]
  %v216 = vld [vmem:[%s1 + $0x458] sm:$0xff]
  %v217 = vld [vmem:[%s1 + $0x460] sm:$0xff]
  %v218 = vld [vmem:[%s1 + $0x468] sm:$0xff]
  %v219 = vld [vmem:[%s1 + $0x470] sm:$0xff]
  %v220 = vld [vmem:[%s1 + $0x478] sm:$0xff]
  %v221 = vld [vmem:[%s1 + $0x480] sm:$0xff]
  %v222 = vld [vmem:[%s1 + $0x488] sm:$0xff]
  %v223 = vld [vmem:[%s1 + $0x490] sm:$0xff]
  %v224 = vld [vmem:[%s1 + $0x498] sm:$0xff]
  %v225 = vld [vmem:[%s1 + $0x4a0] sm:$0xff]
  %v226 = vld [vmem:[%s1 + $0x4a8] sm:$0xff]
  %v227 = vld [vmem:[%s1 + $0x4b0] sm:$0xff]
  %v228 = vld [vmem:[%s1 + $0x4b8] sm:$0xff]
  %v229 = vld [vmem:[%s1 + $0x4c0] sm:$0xff]
  %v230 = vld [vmem:[%s1 + $0x4c8] sm:$0xff]
  %v231 = vld [vmem:[%s1 + $0x4d0] sm:$0xff]
  %v232 = vld [vmem:[%s1 + $0x4d8] sm:$0xff]
  %v233 = vld [vmem:[%s1 + $0x4e0] sm:$0xff]
  %v234 = vld [vmem:[%s1 + $0x4e8] sm:$0xff]
  %v235 = vld [vmem:[%s1 + $0x4f0] sm:$0xff]
  %v236 = vld [vmem:[%s1 + $0x4f8] sm:$0xff]
  %v237 = vld [vmem:[%s1 + $0x500] sm:$0xff]
  %v238 = vld [vmem:[%s1 + $0x508] sm:$0xff]
  %v239 = vld [vmem:[%s1 + $0x510] sm:$0xff]
  %v240 = vld [vmem:[%s1 + $0x518] sm:$0xff]
  %v241 = vld [vmem:[%s1 + $0x520] sm:$0xff]
  %v242 = vld [vmem:[%s1 + $0x528] sm:$0xff]
  %v243 = vld [vmem:[%s1 + $0x530] sm:$0xff]
  %v244 = vld [vmem:[%s1 + $0x538] sm:$0xff]
  %v245 = vld [vmem:[%s1 + $0x540] sm:$0xff]
  %v246 = vld [vmem:[%s1 + $0x548] sm:$0xff]
  %v247 = vld [vmem:[%s1 + $0x550] sm:$0xff]
  %v248 = vld [vmem:[%s1 + $0x558] sm:$0xff]
  %v249 = vld [vmem:[%s1 + $0x560] sm:$0xff]
  %v250 = vld [vmem:[%s1 + $0x568] sm:$0xff]
  %v251 = vld [vmem:[%s1 + $0x570] sm:$0xff]
  %v252 = vld [vmem:[%s1 + $0x578] sm:$0xff]
  %v253 = vld [vmem:[%s1 + $0x580] sm:$0xff]
  %v254 = vld [vmem:[%s1 + $0x588] sm:$0xff]
  %v255 = vld [vmem:[%s1 + $0x590] sm:$0xff]
  %v256 = vld [vmem:[%s1 + $0x598] sm:$0xff]
  %v257 = vld [vmem:[%s1 + $0x5a0] sm:$0xff]
  %v258 = vld [vmem:[%s1 + $0x5a8] sm:$0xff]
  %v259 = vld [vmem:[%s1 + $0x5b0] sm:$0xff]
  %v260 = vld [vmem:[%s1 + $0x5b8] sm:$0xff]
  %v261 = vld [vmem:[%s1 + $0x5c0] sm:$0xff]
  %v262 = vld [vmem:[%s1 + $0x5c8] sm:$0xff]
  %v263 = vld [vmem:[%s1 + $0x5d0] sm:$0xff]
  %v264 = vld [vmem:[%s1 + $0x5d8] sm:$0xff]
  %v265 = vld [vmem:[%s1 + $0x5e0] sm:$0xff]
  %v266 = vld [vmem:[%s1 + $0x5e8] sm:$0xff]
  %v267 = vld [vmem:[%s1 + $0x5f0] sm:$0xff]
  %v268 = vld [vmem:[%s1 + $0x5f8] sm:$0xff]
  %v269 = vld [vmem:[%s0] sm:$0xfe]
  %v270 = vld [vmem:[%s0 + $0x8] sm:$0xfe]
  %v271 = vld [vmem:[%s0 + $0x10] sm:$0xfe]
  %v272 = vld [vmem:[%s0 + $0x18] sm:$0xfe]
  %v273 = vld [vmem:[%s0 + $0x20] sm:$0xfe]
  %v274 = vld [vmem:[%s0 + $0x28] sm:$0xfe]
  %v275 = vld [vmem:[%s0 + $0xc0] sm:$0x1]
  %v276 = vld [vmem:[%s0 + $0xc8] sm:$0x1]
  %v277 = vld [vmem:[%s0 + $0xd0] sm:$0x1]
  %v278 = vld [vmem:[%s0 + $0xd8] sm:$0x1]
  %v279 = vld [vmem:[%s0 + $0xe0] sm:$0x1]
  %v280 = vld [vmem:[%s0 + $0xe8] sm:$0x1]
  %s281 = scalar_lea.vmem %s1, 1536
  %v282 = vld [vmem:[%s281] sm:$0xff]
  %v283 = vld [vmem:[%s281 + $0x8] sm:$0xff]
  %v284 = vld [vmem:[%s281 + $0x10] sm:$0xff]
  %v285 = vld [vmem:[%s281 + $0x18] sm:$0xff]
  %v286 = vld [vmem:[%s281 + $0x20] sm:$0xff]
  %v287 = vld [vmem:[%s281 + $0x28] sm:$0xff]
  %v288 = vld [vmem:[%s281 + $0x30] sm:$0xff]
  %v289 = vld [vmem:[%s281 + $0x38] sm:$0xff]
  %v290 = vld [vmem:[%s281 + $0x40] sm:$0xff]
  %v291 = vld [vmem:[%s281 + $0x48] sm:$0xff]
  %v292 = vld [vmem:[%s281 + $0x50] sm:$0xff]
  %v293 = vld [vmem:[%s281 + $0x58] sm:$0xff]
  %v294 = vld [vmem:[%s281 + $0x60] sm:$0xff]
  %v295 = vld [vmem:[%s281 + $0x68] sm:$0xff]
  %v296 = vld [vmem:[%s281 + $0x70] sm:$0xff]
  %v297 = vld [vmem:[%s281 + $0x78] sm:$0xff]
  %v298 = vld [vmem:[%s281 + $0x80] sm:$0xff]
  %v299 = vld [vmem:[%s281 + $0x88] sm:$0xff]
  %v300 = vld [vmem:[%s281 + $0x90] sm:$0xff]
  %v301 = vld [vmem:[%s281 + $0x98] sm:$0xff]
  %v302 = vld [vmem:[%s281 + $0xa0] sm:$0xff]
  %v303 = vld [vmem:[%s281 + $0xa8] sm:$0xff]
  %v304 = vld [vmem:[%s281 + $0xb0] sm:$0xff]
  %v305 = vld [vmem:[%s281 + $0xb8] sm:$0xff]
  %v306 = vld [vmem:[%s281 + $0xc0] sm:$0xff]
  %v307 = vld [vmem:[%s281 + $0xc8] sm:$0xff]
  %v308 = vld [vmem:[%s281 + $0xd0] sm:$0xff]
  %v309 = vld [vmem:[%s281 + $0xd8] sm:$0xff]
  %v310 = vld [vmem:[%s281 + $0xe0] sm:$0xff]
  %v311 = vld [vmem:[%s281 + $0xe8] sm:$0xff]
  %v312 = vld [vmem:[%s281 + $0xf0] sm:$0xff]
  %v313 = vld [vmem:[%s281 + $0xf8] sm:$0xff]
  %v314 = vld [vmem:[%s281 + $0x100] sm:$0xff]
  %v315 = vld [vmem:[%s281 + $0x108] sm:$0xff]
  %v316 = vld [vmem:[%s281 + $0x110] sm:$0xff]
  %v317 = vld [vmem:[%s281 + $0x118] sm:$0xff]
  %v318 = vld [vmem:[%s281 + $0x120] sm:$0xff]
  %v319 = vld [vmem:[%s281 + $0x128] sm:$0xff]
  %v320 = vld [vmem:[%s281 + $0x130] sm:$0xff]
  %v321 = vld [vmem:[%s281 + $0x138] sm:$0xff]
  %v322 = vld [vmem:[%s281 + $0x140] sm:$0xff]
  %v323 = vld [vmem:[%s281 + $0x148] sm:$0xff]
  %v324 = vld [vmem:[%s281 + $0x150] sm:$0xff]
  %v325 = vld [vmem:[%s281 + $0x158] sm:$0xff]
  %v326 = vld [vmem:[%s281 + $0x160] sm:$0xff]
  %v327 = vld [vmem:[%s281 + $0x168] sm:$0xff]
  %v328 = vld [vmem:[%s281 + $0x170] sm:$0xff]
  %v329 = vld [vmem:[%s281 + $0x178] sm:$0xff]
  %v330 = vld [vmem:[%s281 + $0x180] sm:$0xff]
  %v331 = vld [vmem:[%s281 + $0x188] sm:$0xff]
  %v332 = vld [vmem:[%s281 + $0x190] sm:$0xff]
  %v333 = vld [vmem:[%s281 + $0x198] sm:$0xff]
  %v334 = vld [vmem:[%s281 + $0x1a0] sm:$0xff]
  %v335 = vld [vmem:[%s281 + $0x1a8] sm:$0xff]
  %v336 = vld [vmem:[%s281 + $0x1b0] sm:$0xff]
  %v337 = vld [vmem:[%s281 + $0x1b8] sm:$0xff]
  %v338 = vld [vmem:[%s281 + $0x1c0] sm:$0xff]
  %v339 = vld [vmem:[%s281 + $0x1c8] sm:$0xff]
  %v340 = vld [vmem:[%s281 + $0x1d0] sm:$0xff]
  %v341 = vld [vmem:[%s281 + $0x1d8] sm:$0xff]
  %v342 = vld [vmem:[%s281 + $0x1e0] sm:$0xff]
  %v343 = vld [vmem:[%s281 + $0x1e8] sm:$0xff]
  %v344 = vld [vmem:[%s281 + $0x1f0] sm:$0xff]
  %v345 = vld [vmem:[%s281 + $0x1f8] sm:$0xff]
  %v346 = vld [vmem:[%s281 + $0x200] sm:$0xff]
  %v347 = vld [vmem:[%s281 + $0x208] sm:$0xff]
  %v348 = vld [vmem:[%s281 + $0x210] sm:$0xff]
  %v349 = vld [vmem:[%s281 + $0x218] sm:$0xff]
  %v350 = vld [vmem:[%s281 + $0x220] sm:$0xff]
  %v351 = vld [vmem:[%s281 + $0x228] sm:$0xff]
  %v352 = vld [vmem:[%s281 + $0x230] sm:$0xff]
  %v353 = vld [vmem:[%s281 + $0x238] sm:$0xff]
  %v354 = vld [vmem:[%s281 + $0x240] sm:$0xff]
  %v355 = vld [vmem:[%s281 + $0x248] sm:$0xff]
  %v356 = vld [vmem:[%s281 + $0x250] sm:$0xff]
  %v357 = vld [vmem:[%s281 + $0x258] sm:$0xff]
  %v358 = vld [vmem:[%s281 + $0x260] sm:$0xff]
  %v359 = vld [vmem:[%s281 + $0x268] sm:$0xff]
  %v360 = vld [vmem:[%s281 + $0x270] sm:$0xff]
  %v361 = vld [vmem:[%s281 + $0x278] sm:$0xff]
  %v362 = vld [vmem:[%s281 + $0x280] sm:$0xff]
  %v363 = vld [vmem:[%s281 + $0x288] sm:$0xff]
  %v364 = vld [vmem:[%s281 + $0x290] sm:$0xff]
  %v365 = vld [vmem:[%s281 + $0x298] sm:$0xff]
  %v366 = vld [vmem:[%s281 + $0x2a0] sm:$0xff]
  %v367 = vld [vmem:[%s281 + $0x2a8] sm:$0xff]
  %v368 = vld [vmem:[%s281 + $0x2b0] sm:$0xff]
  %v369 = vld [vmem:[%s281 + $0x2b8] sm:$0xff]
  %v370 = vld [vmem:[%s281 + $0x2c0] sm:$0xff]
  %v371 = vld [vmem:[%s281 + $0x2c8] sm:$0xff]
  %v372 = vld [vmem:[%s281 + $0x2d0] sm:$0xff]
  %v373 = vld [vmem:[%s281 + $0x2d8] sm:$0xff]
  %v374 = vld [vmem:[%s281 + $0x2e0] sm:$0xff]
  %v375 = vld [vmem:[%s281 + $0x2e8] sm:$0xff]
  %v376 = vld [vmem:[%s281 + $0x2f0] sm:$0xff]
  %v377 = vld [vmem:[%s281 + $0x2f8] sm:$0xff]
  %v378 = vld [vmem:[%s281 + $0x300] sm:$0xff]
  %v379 = vld [vmem:[%s281 + $0x308] sm:$0xff]
  %v380 = vld [vmem:[%s281 + $0x310] sm:$0xff]
  %v381 = vld [vmem:[%s281 + $0x318] sm:$0xff]
  %v382 = vld [vmem:[%s281 + $0x320] sm:$0xff]
  %v383 = vld [vmem:[%s281 + $0x328] sm:$0xff]
  %v384 = vld [vmem:[%s281 + $0x330] sm:$0xff]
  %v385 = vld [vmem:[%s281 + $0x338] sm:$0xff]
  %v386 = vld [vmem:[%s281 + $0x340] sm:$0xff]
  %v387 = vld [vmem:[%s281 + $0x348] sm:$0xff]
  %v388 = vld [vmem:[%s281 + $0x350] sm:$0xff]
  %v389 = vld [vmem:[%s281 + $0x358] sm:$0xff]
  %v390 = vld [vmem:[%s281 + $0x360] sm:$0xff]
  %v391 = vld [vmem:[%s281 + $0x368] sm:$0xff]
  %v392 = vld [vmem:[%s281 + $0x370] sm:$0xff]
  %v393 = vld [vmem:[%s281 + $0x378] sm:$0xff]
  %v394 = vld [vmem:[%s281 + $0x380] sm:$0xff]
  %v395 = vld [vmem:[%s281 + $0x388] sm:$0xff]
  %v396 = vld [vmem:[%s281 + $0x390] sm:$0xff]
  %v397 = vld [vmem:[%s281 + $0x398] sm:$0xff]
  %v398 = vld [vmem:[%s281 + $0x3a0] sm:$0xff]
  %v399 = vld [vmem:[%s281 + $0x3a8] sm:$0xff]
  %v400 = vld [vmem:[%s281 + $0x3b0] sm:$0xff]
  %v401 = vld [vmem:[%s281 + $0x3b8] sm:$0xff]
  %v402 = vld [vmem:[%s281 + $0x3c0] sm:$0xff]
  %v403 = vld [vmem:[%s281 + $0x3c8] sm:$0xff]
  %v404 = vld [vmem:[%s281 + $0x3d0] sm:$0xff]
  %v405 = vld [vmem:[%s281 + $0x3d8] sm:$0xff]
  %v406 = vld [vmem:[%s281 + $0x3e0] sm:$0xff]
  %v407 = vld [vmem:[%s281 + $0x3e8] sm:$0xff]
  %v408 = vld [vmem:[%s281 + $0x3f0] sm:$0xff]
  %v409 = vld [vmem:[%s281 + $0x3f8] sm:$0xff]
  %v410 = vld [vmem:[%s281 + $0x400] sm:$0xff]
  %v411 = vld [vmem:[%s281 + $0x408] sm:$0xff]
  %v412 = vld [vmem:[%s281 + $0x410] sm:$0xff]
  %v413 = vld [vmem:[%s281 + $0x418] sm:$0xff]
  %v414 = vld [vmem:[%s281 + $0x420] sm:$0xff]
  %v415 = vld [vmem:[%s281 + $0x428] sm:$0xff]
  %v416 = vld [vmem:[%s281 + $0x430] sm:$0xff]
  %v417 = vld [vmem:[%s281 + $0x438] sm:$0xff]
  %v418 = vld [vmem:[%s281 + $0x440] sm:$0xff]
  %v419 = vld [vmem:[%s281 + $0x448] sm:$0xff]
  %v420 = vld [vmem:[%s281 + $0x450] sm:$0xff]
  %v421 = vld [vmem:[%s281 + $0x458] sm:$0xff]
  %v422 = vld [vmem:[%s281 + $0x460] sm:$0xff]
  %v423 = vld [vmem:[%s281 + $0x468] sm:$0xff]
  %v424 = vld [vmem:[%s281 + $0x470] sm:$0xff]
  %v425 = vld [vmem:[%s281 + $0x478] sm:$0xff]
  %v426 = vld [vmem:[%s281 + $0x480] sm:$0xff]
  %v427 = vld [vmem:[%s281 + $0x488] sm:$0xff]
  %v428 = vld [vmem:[%s281 + $0x490] sm:$0xff]
  %v429 = vld [vmem:[%s281 + $0x498] sm:$0xff]
  %v430 = vld [vmem:[%s281 + $0x4a0] sm:$0xff]
  %v431 = vld [vmem:[%s281 + $0x4a8] sm:$0xff]
  %v432 = vld [vmem:[%s281 + $0x4b0] sm:$0xff]
  %v433 = vld [vmem:[%s281 + $0x4b8] sm:$0xff]
  %v434 = vld [vmem:[%s281 + $0x4c0] sm:$0xff]
  %v435 = vld [vmem:[%s281 + $0x4c8] sm:$0xff]
  %v436 = vld [vmem:[%s281 + $0x4d0] sm:$0xff]
  %v437 = vld [vmem:[%s281 + $0x4d8] sm:$0xff]
  %v438 = vld [vmem:[%s281 + $0x4e0] sm:$0xff]
  %v439 = vld [vmem:[%s281 + $0x4e8] sm:$0xff]
  %v440 = vld [vmem:[%s281 + $0x4f0] sm:$0xff]
  %v441 = vld [vmem:[%s281 + $0x4f8] sm:$0xff]
  %v442 = vld [vmem:[%s281 + $0x500] sm:$0xff]
  %v443 = vld [vmem:[%s281 + $0x508] sm:$0xff]
  %v444 = vld [vmem:[%s281 + $0x510] sm:$0xff]
  %v445 = vld [vmem:[%s281 + $0x518] sm:$0xff]
  %v446 = vld [vmem:[%s281 + $0x520] sm:$0xff]
  %v447 = vld [vmem:[%s281 + $0x528] sm:$0xff]
  %v448 = vld [vmem:[%s281 + $0x530] sm:$0xff]
  %v449 = vld [vmem:[%s281 + $0x538] sm:$0xff]
  %v450 = vld [vmem:[%s281 + $0x540] sm:$0xff]
  %v451 = vld [vmem:[%s281 + $0x548] sm:$0xff]
  %v452 = vld [vmem:[%s281 + $0x550] sm:$0xff]
  %v453 = vld [vmem:[%s281 + $0x558] sm:$0xff]
  %v454 = vld [vmem:[%s281 + $0x560] sm:$0xff]
  %v455 = vld [vmem:[%s281 + $0x568] sm:$0xff]
  %v456 = vld [vmem:[%s281 + $0x570] sm:$0xff]
  %v457 = vld [vmem:[%s281 + $0x578] sm:$0xff]
  %v458 = vld [vmem:[%s281 + $0x580] sm:$0xff]
  %v459 = vld [vmem:[%s281 + $0x588] sm:$0xff]
  %v460 = vld [vmem:[%s281 + $0x590] sm:$0xff]
  %v461 = vld [vmem:[%s281 + $0x598] sm:$0xff]
  %v462 = vld [vmem:[%s281 + $0x5a0] sm:$0xff]
  %v463 = vld [vmem:[%s281 + $0x5a8] sm:$0xff]
  %v464 = vld [vmem:[%s281 + $0x5b0] sm:$0xff]
  %v465 = vld [vmem:[%s281 + $0x5b8] sm:$0xff]
  %v466 = vld [vmem:[%s281 + $0x5c0] sm:$0xff]
  %v467 = vld [vmem:[%s281 + $0x5c8] sm:$0xff]
  %v468 = vld [vmem:[%s281 + $0x5d0] sm:$0xff]
  %v469 = vld [vmem:[%s281 + $0x5d8] sm:$0xff]
  %v470 = vld [vmem:[%s281 + $0x5e0] sm:$0xff]
  %v471 = vld [vmem:[%s281 + $0x5e8] sm:$0xff]
  %v472 = vld [vmem:[%s281 + $0x5f0] sm:$0xff]
  %v473 = vld [vmem:[%s281 + $0x5f8] sm:$0xff]
  %vm504 = vcmask 1046528
  %v505 = vrot.slane %v269, 1
  %v506 = vrot.slane %v59, 1
  %v507 = vsel %vm504, %v505, %v506
  %v508 = vrot.slane %v270, 1
  %v509 = vrot.slane %v60, 1
  %v510 = vsel %vm504, %v508, %v509
  %v511 = vrot.slane %v271, 1
  %v512 = vrot.slane %v61, 1
  %v513 = vsel %vm504, %v511, %v512
  %v514 = vrot.slane %v272, 1
  %v515 = vrot.slane %v62, 1
  %v516 = vsel %vm504, %v514, %v515
  %v517 = vrot.slane %v273, 1
  %v518 = vrot.slane %v63, 1
  %v519 = vsel %vm504, %v517, %v518
  %v520 = vrot.slane %v274, 1
  %v521 = vrot.slane %v64, 1
  %v522 = vsel %vm504, %v520, %v521
  %v523 = vrot.slane %v65, 1
  %v524 = vsel %vm504, %v506, %v523
  %v525 = vrot.slane %v66, 1
  %v526 = vsel %vm504, %v509, %v525
  %v527 = vrot.slane %v67, 1
  %v528 = vsel %vm504, %v512, %v527
  %v529 = vrot.slane %v68, 1
  %v530 = vsel %vm504, %v515, %v529
  %v531 = vrot.slane %v69, 1
  %v532 = vsel %vm504, %v518, %v531
  %v533 = vrot.slane %v70, 1
  %v534 = vsel %vm504, %v521, %v533
  %v535 = vrot.slane %v71, 1
  %v536 = vsel %vm504, %v523, %v535
  %v537 = vrot.slane %v72, 1
  %v538 = vsel %vm504, %v525, %v537
  %v539 = vrot.slane %v73, 1
  %v540 = vsel %vm504, %v527, %v539
  %v541 = vrot.slane %v74, 1
  %v542 = vsel %vm504, %v529, %v541
  %v543 = vrot.slane %v75, 1
  %v544 = vsel %vm504, %v531, %v543
  %v545 = vrot.slane %v76, 1
  %v546 = vsel %vm504, %v533, %v545
  %v547 = vrot.slane %v275, 1
  %v548 = vsel %vm504, %v535, %v547
  %v549 = vrot.slane %v276, 1
  %v550 = vsel %vm504, %v537, %v549
  %v551 = vrot.slane %v277, 1
  %v552 = vsel %vm504, %v539, %v551
  %v553 = vrot.slane %v278, 1
  %v554 = vsel %vm504, %v541, %v553
  %v555 = vrot.slane %v279, 1
  %v556 = vsel %vm504, %v543, %v555
  %v557 = vrot.slane %v280, 1
  %v558 = vsel %vm504, %v545, %v557
  %583 = vmatprep.subr.mxu0 %v313
  %584 = vmatpush1.msra.mxu0 %v312
  %585 = vmatprep.subr.mxu0 %v311
  %586 = vmatpush1.msra.mxu0 %v310
  %587 = vmatprep.subr.mxu0 %v309
  %588 = vmatpush1.msra.mxu0 %v308
  %589 = vmatprep.subr.mxu0 %v307
  %590 = vmatpush1.msra.mxu0 %v306
  %591 = vmatprep.subr.mxu0 %v305
  %592 = vmatpush1.msra.mxu0 %v304
  %593 = vmatprep.subr.mxu0 %v303
  %594 = vmatpush1.msra.mxu0 %v302
  %595 = vmatprep.subr.mxu0 %v301
  %596 = vmatpush1.msra.mxu0 %v300
  %597 = vmatprep.subr.mxu0 %v299
  %598 = vmatpush1.msra.mxu0 %v298
  %599 = vmatprep.subr.mxu0 %v297
  %600 = vmatpush1.msra.mxu0 %v296
  %601 = vmatprep.subr.mxu0 %v295
  %602 = vmatpush1.msra.mxu0 %v294
  %603 = vmatprep.subr.mxu0 %v293
  %604 = vmatpush1.msra.mxu0 %v292
  %605 = vmatprep.subr.mxu0 %v291
  %606 = vmatpush1.msra.mxu0 %v290
  %607 = vmatprep.subr.mxu0 %v289
  %608 = vmatpush1.msra.mxu0 %v288
  %609 = vmatprep.subr.mxu0 %v287
  %610 = vmatpush1.msra.mxu0 %v286
  %611 = vmatprep.subr.mxu0 %v285
  %612 = vmatpush1.msra.mxu0 %v284
  %613 = vmatprep.subr.mxu0 %v283
  %614 = vmatpush1.msra.mxu0 %v282
  %615 = vmatprep.subr.mxu0 %v345
  %616 = vmatpush2.msra.mxu0 %v344
  %617 = vmatprep.subr.mxu0 %v343
  %618 = vmatpush2.msra.mxu0 %v342
  %619 = vmatprep.subr.mxu0 %v341
  %620 = vmatpush2.msra.mxu0 %v340
  %621 = vmatprep.subr.mxu0 %v339
  %622 = vmatpush2.msra.mxu0 %v338
  %623 = vmatprep.subr.mxu0 %v337
  %624 = vmatpush2.msra.mxu0 %v336
  %625 = vmatprep.subr.mxu0 %v335
  %626 = vmatpush2.msra.mxu0 %v334
  %627 = vmatprep.subr.mxu0 %v333
  %628 = vmatpush2.msra.mxu0 %v332
  %629 = vmatprep.subr.mxu0 %v331
  %630 = vmatpush2.msra.mxu0 %v330
  %631 = vmatprep.subr.mxu0 %v329
  %632 = vmatpush2.msra.mxu0 %v328
  %633 = vmatprep.subr.mxu0 %v327
  %634 = vmatpush2.msra.mxu0 %v326
  %635 = vmatprep.subr.mxu0 %v325
  %636 = vmatpush2.msra.mxu0 %v324
  %637 = vmatprep.subr.mxu0 %v323
  %638 = vmatpush2.msra.mxu0 %v322
  %639 = vmatprep.subr.mxu0 %v321
  %640 = vmatpush2.msra.mxu0 %v320
  %641 = vmatprep.subr.mxu0 %v319
  %642 = vmatpush2.msra.mxu0 %v318
  %643 = vmatprep.subr.mxu0 %v317
  %644 = vmatpush2.msra.mxu0 %v316
  %645 = vmatprep.subr.mxu0 %v315
  %646 = vmatpush2.msra.mxu0 %v314
  %647 = vmatprep.mubr.f32.mxu0 %v510
  %648 = vmatmul.mubr.f32.gmra.mxu0 %v507
  %v649 = vpop.f32.mrf.mxu0
  %v650 = vadd.f32 0.0, %v649
  %v651 = vpop.f32.mrf.mxu0
  %v652 = vadd.f32 0.0, %v651
  %653 = vmatprep.mubr.f32.mxu0 %v526
  %654 = vmatmul.mubr.f32.gmra.mxu0 %v524
  %v655 = vpop.f32.mrf.mxu0
  %v656 = vadd.f32 0.0, %v655
  %v657 = vpop.f32.mrf.mxu0
  %v658 = vadd.f32 0.0, %v657
  %659 = vmatprep.mubr.f32.mxu0 %v538
  %660 = vmatmul.mubr.f32.gmra.mxu0 %v536
  %v661 = vpop.f32.mrf.mxu0
  %v662 = vadd.f32 0.0, %v661
  %v663 = vpop.f32.mrf.mxu0
  %v664 = vadd.f32 0.0, %v663
  %665 = vmatprep.mubr.f32.mxu0 %v550
  %666 = vmatmul.mubr.f32.gmra.mxu0 %v548
  %v667 = vpop.f32.mrf.mxu0
  %v668 = vadd.f32 0.0, %v667
  %v669 = vpop.f32.mrf.mxu0
  %v670 = vadd.f32 0.0, %v669
  %671 = vdwg.mxu0
  %672 = vmatprep.subr.mxu0 %v377
  %673 = vmatpush1.msra.mxu0 %v376
  %674 = vmatprep.subr.mxu0 %v375
  %675 = vmatpush1.msra.mxu0 %v374
  %676 = vmatprep.subr.mxu0 %v373
  %677 = vmatpush1.msra.mxu0 %v372
  %678 = vmatprep.subr.mxu0 %v371
  %679 = vmatpush1.msra.mxu0 %v370
  %680 = vmatprep.subr.mxu0 %v369
  %681 = vmatpush1.msra.mxu0 %v368
  %682 = vmatprep.subr.mxu0 %v367
  %683 = vmatpush1.msra.mxu0 %v366
  %684 = vmatprep.subr.mxu0 %v365
  %685 = vmatpush1.msra.mxu0 %v364
  %686 = vmatprep.subr.mxu0 %v363
  %687 = vmatpush1.msra.mxu0 %v362
  %688 = vmatprep.subr.mxu0 %v361
  %689 = vmatpush1.msra.mxu0 %v360
  %690 = vmatprep.subr.mxu0 %v359
  %691 = vmatpush1.msra.mxu0 %v358
  %692 = vmatprep.subr.mxu0 %v357
  %693 = vmatpush1.msra.mxu0 %v356
  %694 = vmatprep.subr.mxu0 %v355
  %695 = vmatpush1.msra.mxu0 %v354
  %696 = vmatprep.subr.mxu0 %v353
  %697 = vmatpush1.msra.mxu0 %v352
  %698 = vmatprep.subr.mxu0 %v351
  %699 = vmatpush1.msra.mxu0 %v350
  %700 = vmatprep.subr.mxu0 %v349
  %701 = vmatpush1.msra.mxu0 %v348
  %702 = vmatprep.subr.mxu0 %v347
  %703 = vmatpush1.msra.mxu0 %v346
  %704 = vmatprep.subr.mxu0 %v409
  %705 = vmatpush2.msra.mxu0 %v408
  %706 = vmatprep.subr.mxu0 %v407
  %707 = vmatpush2.msra.mxu0 %v406
  %708 = vmatprep.subr.mxu0 %v405
  %709 = vmatpush2.msra.mxu0 %v404
  %710 = vmatprep.subr.mxu0 %v403
  %711 = vmatpush2.msra.mxu0 %v402
  %712 = vmatprep.subr.mxu0 %v401
  %713 = vmatpush2.msra.mxu0 %v400
  %714 = vmatprep.subr.mxu0 %v399
  %715 = vmatpush2.msra.mxu0 %v398
  %716 = vmatprep.subr.mxu0 %v397
  %717 = vmatpush2.msra.mxu0 %v396
  %718 = vmatprep.subr.mxu0 %v395
  %719 = vmatpush2.msra.mxu0 %v394
  %720 = vmatprep.subr.mxu0 %v393
  %721 = vmatpush2.msra.mxu0 %v392
  %722 = vmatprep.subr.mxu0 %v391
  %723 = vmatpush2.msra.mxu0 %v390
  %724 = vmatprep.subr.mxu0 %v389
  %725 = vmatpush2.msra.mxu0 %v388
  %726 = vmatprep.subr.mxu0 %v387
  %727 = vmatpush2.msra.mxu0 %v386
  %728 = vmatprep.subr.mxu0 %v385
  %729 = vmatpush2.msra.mxu0 %v384
  %730 = vmatprep.subr.mxu0 %v383
  %731 = vmatpush2.msra.mxu0 %v382
  %732 = vmatprep.subr.mxu0 %v381
  %733 = vmatpush2.msra.mxu0 %v380
  %734 = vmatprep.subr.mxu0 %v379
  %735 = vmatpush2.msra.mxu0 %v378
  %736 = vmatprep.mubr.f32.mxu0 %v516
  %737 = vmatmul.mubr.f32.gmra.mxu0 %v513
  %v738 = vpop.f32.mrf.mxu0
  %v739 = vadd.f32 %v650, %v738
  %v740 = vpop.f32.mrf.mxu0
  %v741 = vadd.f32 %v652, %v740
  %742 = vmatprep.mubr.f32.mxu0 %v530
  %743 = vmatmul.mubr.f32.gmra.mxu0 %v528
  %v744 = vpop.f32.mrf.mxu0
  %v745 = vadd.f32 %v656, %v744
  %v746 = vpop.f32.mrf.mxu0
  %v747 = vadd.f32 %v658, %v746
  %748 = vmatprep.mubr.f32.mxu0 %v542
  %749 = vmatmul.mubr.f32.gmra.mxu0 %v540
  %v750 = vpop.f32.mrf.mxu0
  %v751 = vadd.f32 %v662, %v750
  %v752 = vpop.f32.mrf.mxu0
  %v753 = vadd.f32 %v664, %v752
  %754 = vmatprep.mubr.f32.mxu0 %v554
  %755 = vmatmul.mubr.f32.gmra.mxu0 %v552
  %v756 = vpop.f32.mrf.mxu0
  %v757 = vadd.f32 %v668, %v756
  %v758 = vpop.f32.mrf.mxu0
  %v759 = vadd.f32 %v670, %v758
  %760 = vdwg.mxu0
  %761 = vmatprep.subr.mxu0 %v441
  %762 = vmatpush1.msra.mxu0 %v440
  %763 = vmatprep.subr.mxu0 %v439
  %764 = vmatpush1.msra.mxu0 %v438
  %765 = vmatprep.subr.mxu0 %v437
  %766 = vmatpush1.msra.mxu0 %v436
  %767 = vmatprep.subr.mxu0 %v435
  %768 = vmatpush1.msra.mxu0 %v434
  %769 = vmatprep.subr.mxu0 %v433
  %770 = vmatpush1.msra.mxu0 %v432
  %771 = vmatprep.subr.mxu0 %v431
  %772 = vmatpush1.msra.mxu0 %v430
  %773 = vmatprep.subr.mxu0 %v429
  %774 = vmatpush1.msra.mxu0 %v428
  %775 = vmatprep.subr.mxu0 %v427
  %776 = vmatpush1.msra.mxu0 %v426
  %777 = vmatprep.subr.mxu0 %v425
  %778 = vmatpush1.msra.mxu0 %v424
  %779 = vmatprep.subr.mxu0 %v423
  %780 = vmatpush1.msra.mxu0 %v422
  %781 = vmatprep.subr.mxu0 %v421
  %782 = vmatpush1.msra.mxu0 %v420
  %783 = vmatprep.subr.mxu0 %v419
  %784 = vmatpush1.msra.mxu0 %v418
  %785 = vmatprep.subr.mxu0 %v417
  %786 = vmatpush1.msra.mxu0 %v416
  %787 = vmatprep.subr.mxu0 %v415
  %788 = vmatpush1.msra.mxu0 %v414
  %789 = vmatprep.subr.mxu0 %v413
  %790 = vmatpush1.msra.mxu0 %v412
  %791 = vmatprep.subr.mxu0 %v411
  %792 = vmatpush1.msra.mxu0 %v410
  %793 = vmatprep.subr.mxu0 %v473
  %794 = vmatpush2.msra.mxu0 %v472
  %795 = vmatprep.subr.mxu0 %v471
  %796 = vmatpush2.msra.mxu0 %v470
  %797 = vmatprep.subr.mxu0 %v469
  %798 = vmatpush2.msra.mxu0 %v468
  %799 = vmatprep.subr.mxu0 %v467
  %800 = vmatpush2.msra.mxu0 %v466
  %801 = vmatprep.subr.mxu0 %v465
  %802 = vmatpush2.msra.mxu0 %v464
  %803 = vmatprep.subr.mxu0 %v463
  %804 = vmatpush2.msra.mxu0 %v462
  %805 = vmatprep.subr.mxu0 %v461
  %806 = vmatpush2.msra.mxu0 %v460
  %807 = vmatprep.subr.mxu0 %v459
  %808 = vmatpush2.msra.mxu0 %v458
  %809 = vmatprep.subr.mxu0 %v457
  %810 = vmatpush2.msra.mxu0 %v456
  %811 = vmatprep.subr.mxu0 %v455
  %812 = vmatpush2.msra.mxu0 %v454
  %813 = vmatprep.subr.mxu0 %v453
  %814 = vmatpush2.msra.mxu0 %v452
  %815 = vmatprep.subr.mxu0 %v451
  %816 = vmatpush2.msra.mxu0 %v450
  %817 = vmatprep.subr.mxu0 %v449
  %818 = vmatpush2.msra.mxu0 %v448
  %819 = vmatprep.subr.mxu0 %v447
  %820 = vmatpush2.msra.mxu0 %v446
  %821 = vmatprep.subr.mxu0 %v445
  %822 = vmatpush2.msra.mxu0 %v444
  %823 = vmatprep.subr.mxu0 %v443
  %824 = vmatpush2.msra.mxu0 %v442
  %825 = vmatprep.mubr.f32.mxu0 %v522
  %826 = vmatmul.mubr.f32.gmra.mxu0 %v519
  %v827 = vpop.f32.mrf.mxu0
  %v828 = vadd.f32 %v739, %v827
  %v829 = vpop.f32.mrf.mxu0
  %v830 = vadd.f32 %v741, %v829
  %831 = vmatprep.mubr.f32.mxu0 %v534
  %832 = vmatmul.mubr.f32.gmra.mxu0 %v532
  %v833 = vpop.f32.mrf.mxu0
  %v834 = vadd.f32 %v745, %v833
  %v835 = vpop.f32.mrf.mxu0
  %v836 = vadd.f32 %v747, %v835
  %837 = vmatprep.mubr.f32.mxu0 %v546
  %838 = vmatmul.mubr.f32.gmra.mxu0 %v544
  %v839 = vpop.f32.mrf.mxu0
  %v840 = vadd.f32 %v751, %v839
  %v841 = vpop.f32.mrf.mxu0
  %v842 = vadd.f32 %v753, %v841
  %843 = vmatprep.mubr.f32.mxu0 %v558
  %844 = vmatmul.mubr.f32.gmra.mxu0 %v556
  %v845 = vpop.f32.mrf.mxu0
  %v846 = vadd.f32 %v757, %v845
  %v847 = vpop.f32.mrf.mxu0
  %v848 = vadd.f32 %v759, %v847
  %849 = vdwg.mxu0
  %850 = vmatprep.subr.mxu0 %v108
  %851 = vmatpush1.msra.mxu0 %v107
  %852 = vmatprep.subr.mxu0 %v106
  %853 = vmatpush1.msra.mxu0 %v105
  %854 = vmatprep.subr.mxu0 %v104
  %855 = vmatpush1.msra.mxu0 %v103
  %856 = vmatprep.subr.mxu0 %v102
  %857 = vmatpush1.msra.mxu0 %v101
  %858 = vmatprep.subr.mxu0 %v100
  %859 = vmatpush1.msra.mxu0 %v99
  %860 = vmatprep.subr.mxu0 %v98
  %861 = vmatpush1.msra.mxu0 %v97
  %862 = vmatprep.subr.mxu0 %v96
  %863 = vmatpush1.msra.mxu0 %v95
  %864 = vmatprep.subr.mxu0 %v94
  %865 = vmatpush1.msra.mxu0 %v93
  %866 = vmatprep.subr.mxu0 %v92
  %867 = vmatpush1.msra.mxu0 %v91
  %868 = vmatprep.subr.mxu0 %v90
  %869 = vmatpush1.msra.mxu0 %v89
  %870 = vmatprep.subr.mxu0 %v88
  %871 = vmatpush1.msra.mxu0 %v87
  %872 = vmatprep.subr.mxu0 %v86
  %873 = vmatpush1.msra.mxu0 %v85
  %874 = vmatprep.subr.mxu0 %v84
  %875 = vmatpush1.msra.mxu0 %v83
  %876 = vmatprep.subr.mxu0 %v82
  %877 = vmatpush1.msra.mxu0 %v81
  %878 = vmatprep.subr.mxu0 %v80
  %879 = vmatpush1.msra.mxu0 %v79
  %880 = vmatprep.subr.mxu0 %v78
  %881 = vmatpush1.msra.mxu0 %v77
  %882 = vmatprep.subr.mxu0 %v140
  %883 = vmatpush2.msra.mxu0 %v139
  %884 = vmatprep.subr.mxu0 %v138
  %885 = vmatpush2.msra.mxu0 %v137
  %886 = vmatprep.subr.mxu0 %v136
  %887 = vmatpush2.msra.mxu0 %v135
  %888 = vmatprep.subr.mxu0 %v134
  %889 = vmatpush2.msra.mxu0 %v133
  %890 = vmatprep.subr.mxu0 %v132
  %891 = vmatpush2.msra.mxu0 %v131
  %892 = vmatprep.subr.mxu0 %v130
  %893 = vmatpush2.msra.mxu0 %v129
  %894 = vmatprep.subr.mxu0 %v128
  %895 = vmatpush2.msra.mxu0 %v127
  %896 = vmatprep.subr.mxu0 %v126
  %897 = vmatpush2.msra.mxu0 %v125
  %898 = vmatprep.subr.mxu0 %v124
  %899 = vmatpush2.msra.mxu0 %v123
  %900 = vmatprep.subr.mxu0 %v122
  %901 = vmatpush2.msra.mxu0 %v121
  %902 = vmatprep.subr.mxu0 %v120
  %903 = vmatpush2.msra.mxu0 %v119
  %904 = vmatprep.subr.mxu0 %v118
  %905 = vmatpush2.msra.mxu0 %v117
  %906 = vmatprep.subr.mxu0 %v116
  %907 = vmatpush2.msra.mxu0 %v115
  %908 = vmatprep.subr.mxu0 %v114
  %909 = vmatpush2.msra.mxu0 %v113
  %910 = vmatprep.subr.mxu0 %v112
  %911 = vmatpush2.msra.mxu0 %v111
  %912 = vmatprep.subr.mxu0 %v110
  %913 = vmatpush2.msra.mxu0 %v109
  %914 = vmatprep.mubr.f32.mxu0 %v54
  %915 = vmatmul.mubr.f32.gmra.mxu0 %v53
  %v916 = vpop.f32.mrf.mxu0
  %v917 = vadd.f32 %v828, %v916
  %v918 = vpop.f32.mrf.mxu0
  %v919 = vadd.f32 %v830, %v918
  %920 = vmatprep.mubr.f32.mxu0 %v60
  %921 = vmatmul.mubr.f32.gmra.mxu0 %v59
  %v922 = vpop.f32.mrf.mxu0
  %v923 = vadd.f32 %v834, %v922
  %v924 = vpop.f32.mrf.mxu0
  %v925 = vadd.f32 %v836, %v924
  %926 = vmatprep.mubr.f32.mxu0 %v66
  %927 = vmatmul.mubr.f32.gmra.mxu0 %v65
  %v928 = vpop.f32.mrf.mxu0
  %v929 = vadd.f32 %v840, %v928
  %v930 = vpop.f32.mrf.mxu0
  %v931 = vadd.f32 %v842, %v930
  %932 = vmatprep.mubr.f32.mxu0 %v72
  %933 = vmatmul.mubr.f32.gmra.mxu0 %v71
  %v934 = vpop.f32.mrf.mxu0
  %v935 = vadd.f32 %v846, %v934
  %v936 = vpop.f32.mrf.mxu0
  %v937 = vadd.f32 %v848, %v936
  %938 = vdwg.mxu0
  %939 = vmatprep.subr.mxu0 %v172
  %940 = vmatpush1.msra.mxu0 %v171
  %941 = vmatprep.subr.mxu0 %v170
  %942 = vmatpush1.msra.mxu0 %v169
  %943 = vmatprep.subr.mxu0 %v168
  %944 = vmatpush1.msra.mxu0 %v167
  %945 = vmatprep.subr.mxu0 %v166
  %946 = vmatpush1.msra.mxu0 %v165
  %947 = vmatprep.subr.mxu0 %v164
  %948 = vmatpush1.msra.mxu0 %v163
  %949 = vmatprep.subr.mxu0 %v162
  %950 = vmatpush1.msra.mxu0 %v161
  %951 = vmatprep.subr.mxu0 %v160
  %952 = vmatpush1.msra.mxu0 %v159
  %953 = vmatprep.subr.mxu0 %v158
  %954 = vmatpush1.msra.mxu0 %v157
  %955 = vmatprep.subr.mxu0 %v156
  %956 = vmatpush1.msra.mxu0 %v155
  %957 = vmatprep.subr.mxu0 %v154
  %958 = vmatpush1.msra.mxu0 %v153
  %959 = vmatprep.subr.mxu0 %v152
  %960 = vmatpush1.msra.mxu0 %v151
  %961 = vmatprep.subr.mxu0 %v150
  %962 = vmatpush1.msra.mxu0 %v149
  %963 = vmatprep.subr.mxu0 %v148
  %964 = vmatpush1.msra.mxu0 %v147
  %965 = vmatprep.subr.mxu0 %v146
  %966 = vmatpush1.msra.mxu0 %v145
  %967 = vmatprep.subr.mxu0 %v144
  %968 = vmatpush1.msra.mxu0 %v143
  %969 = vmatprep.subr.mxu0 %v142
  %970 = vmatpush1.msra.mxu0 %v141
  %971 = vmatprep.subr.mxu0 %v204
  %972 = vmatpush2.msra.mxu0 %v203
  %973 = vmatprep.subr.mxu0 %v202
  %974 = vmatpush2.msra.mxu0 %v201
  %975 = vmatprep.subr.mxu0 %v200
  %976 = vmatpush2.msra.mxu0 %v199
  %977 = vmatprep.subr.mxu0 %v198
  %978 = vmatpush2.msra.mxu0 %v197
  %979 = vmatprep.subr.mxu0 %v196
  %980 = vmatpush2.msra.mxu0 %v195
  %981 = vmatprep.subr.mxu0 %v194
  %982 = vmatpush2.msra.mxu0 %v193
  %983 = vmatprep.subr.mxu0 %v192
  %984 = vmatpush2.msra.mxu0 %v191
  %985 = vmatprep.subr.mxu0 %v190
  %986 = vmatpush2.msra.mxu0 %v189
  %987 = vmatprep.subr.mxu0 %v188
  %988 = vmatpush2.msra.mxu0 %v187
  %989 = vmatprep.subr.mxu0 %v186
  %990 = vmatpush2.msra.mxu0 %v185
  %991 = vmatprep.subr.mxu0 %v184
  %992 = vmatpush2.msra.mxu0 %v183
  %993 = vmatprep.subr.mxu0 %v182
  %994 = vmatpush2.msra.mxu0 %v181
  %995 = vmatprep.subr.mxu0 %v180
  %996 = vmatpush2.msra.mxu0 %v179
  %997 = vmatprep.subr.mxu0 %v178
  %998 = vmatpush2.msra.mxu0 %v177
  %999 = vmatprep.subr.mxu0 %v176
  %1000 = vmatpush2.msra.mxu0 %v175
  %1001 = vmatprep.subr.mxu0 %v174
  %1002 = vmatpush2.msra.mxu0 %v173
  %1003 = vmatprep.mubr.f32.mxu0 %v56
  %1004 = vmatmul.mubr.f32.gmra.mxu0 %v55
  %v1005 = vpop.f32.mrf.mxu0
  %v1006 = vadd.f32 %v917, %v1005
  %v1007 = vpop.f32.mrf.mxu0
  %v1008 = vadd.f32 %v919, %v1007
  %1009 = vmatprep.mubr.f32.mxu0 %v62
  %1010 = vmatmul.mubr.f32.gmra.mxu0 %v61
  %v1011 = vpop.f32.mrf.mxu0
  %v1012 = vadd.f32 %v923, %v1011
  %v1013 = vpop.f32.mrf.mxu0
  %v1014 = vadd.f32 %v925, %v1013
  %1015 = vmatprep.mubr.f32.mxu0 %v68
  %1016 = vmatmul.mubr.f32.gmra.mxu0 %v67
  %v1017 = vpop.f32.mrf.mxu0
  %v1018 = vadd.f32 %v929, %v1017
  %v1019 = vpop.f32.mrf.mxu0
  %v1020 = vadd.f32 %v931, %v1019
  %1021 = vmatprep.mubr.f32.mxu0 %v74
  %1022 = vmatmul.mubr.f32.gmra.mxu0 %v73
  %v1023 = vpop.f32.mrf.mxu0
  %v1024 = vadd.f32 %v935, %v1023
  %v1025 = vpop.f32.mrf.mxu0
  %v1026 = vadd.f32 %v937, %v1025
  %1027 = vdwg.mxu0
  %1028 = vmatprep.subr.mxu0 %v236
  %1029 = vmatpush1.msra.mxu0 %v235
  %1030 = vmatprep.subr.mxu0 %v234
  %1031 = vmatpush1.msra.mxu0 %v233
  %1032 = vmatprep.subr.mxu0 %v232
  %1033 = vmatpush1.msra.mxu0 %v231
  %1034 = vmatprep.subr.mxu0 %v230
  %1035 = vmatpush1.msra.mxu0 %v229
  %1036 = vmatprep.subr.mxu0 %v228
  %1037 = vmatpush1.msra.mxu0 %v227
  %1038 = vmatprep.subr.mxu0 %v226
  %1039 = vmatpush1.msra.mxu0 %v225
  %1040 = vmatprep.subr.mxu0 %v224
  %1041 = vmatpush1.msra.mxu0 %v223
  %1042 = vmatprep.subr.mxu0 %v222
  %1043 = vmatpush1.msra.mxu0 %v221
  %1044 = vmatprep.subr.mxu0 %v220
  %1045 = vmatpush1.msra.mxu0 %v219
  %1046 = vmatprep.subr.mxu0 %v218
  %1047 = vmatpush1.msra.mxu0 %v217
  %1048 = vmatprep.subr.mxu0 %v216
  %1049 = vmatpush1.msra.mxu0 %v215
  %1050 = vmatprep.subr.mxu0 %v214
  %1051 = vmatpush1.msra.mxu0 %v213
  %1052 = vmatprep.subr.mxu0 %v212
  %1053 = vmatpush1.msra.mxu0 %v211
  %1054 = vmatprep.subr.mxu0 %v210
  %1055 = vmatpush1.msra.mxu0 %v209
  %1056 = vmatprep.subr.mxu0 %v208
  %1057 = vmatpush1.msra.mxu0 %v207
  %1058 = vmatprep.subr.mxu0 %v206
  %1059 = vmatpush1.msra.mxu0 %v205
  %1060 = vmatprep.subr.mxu0 %v268
  %1061 = vmatpush2.msra.mxu0 %v267
  %1062 = vmatprep.subr.mxu0 %v266
  %1063 = vmatpush2.msra.mxu0 %v265
  %1064 = vmatprep.subr.mxu0 %v264
  %1065 = vmatpush2.msra.mxu0 %v263
  %1066 = vmatprep.subr.mxu0 %v262
  %1067 = vmatpush2.msra.mxu0 %v261
  %1068 = vmatprep.subr.mxu0 %v260
  %1069 = vmatpush2.msra.mxu0 %v259
  %1070 = vmatprep.subr.mxu0 %v258
  %1071 = vmatpush2.msra.mxu0 %v257
  %1072 = vmatprep.subr.mxu0 %v256
  %1073 = vmatpush2.msra.mxu0 %v255
  %1074 = vmatprep.subr.mxu0 %v254
  %1075 = vmatpush2.msra.mxu0 %v253
  %1076 = vmatprep.subr.mxu0 %v252
  %1077 = vmatpush2.msra.mxu0 %v251
  %1078 = vmatprep.subr.mxu0 %v250
  %1079 = vmatpush2.msra.mxu0 %v249
  %1080 = vmatprep.subr.mxu0 %v248
  %1081 = vmatpush2.msra.mxu0 %v247
  %1082 = vmatprep.subr.mxu0 %v246
  %1083 = vmatpush2.msra.mxu0 %v245
  %1084 = vmatprep.subr.mxu0 %v244
  %1085 = vmatpush2.msra.mxu0 %v243
  %1086 = vmatprep.subr.mxu0 %v242
  %1087 = vmatpush2.msra.mxu0 %v241
  %1088 = vmatprep.subr.mxu0 %v240
  %1089 = vmatpush2.msra.mxu0 %v239
  %1090 = vmatprep.subr.mxu0 %v238
  %1091 = vmatpush2.msra.mxu0 %v237
  %1092 = vmatprep.mubr.f32.mxu0 %v58
  %1093 = vmatmul.mubr.f32.gmra.mxu0 %v57
  %v1094 = vpop.f32.mrf.mxu0
  %v1095 = vadd.f32 %v1006, %v1094
  %v1096 = vpop.f32.mrf.mxu0
  %v1097 = vadd.f32 %v1008, %v1096
  %1098 = vmatprep.mubr.f32.mxu0 %v64
  %1099 = vmatmul.mubr.f32.gmra.mxu0 %v63
  %v1100 = vpop.f32.mrf.mxu0
  %v1101 = vadd.f32 %v1012, %v1100
  %v1102 = vpop.f32.mrf.mxu0
  %v1103 = vadd.f32 %v1014, %v1102
  %1104 = vmatprep.mubr.f32.mxu0 %v70
  %1105 = vmatmul.mubr.f32.gmra.mxu0 %v69
  %v1106 = vpop.f32.mrf.mxu0
  %v1107 = vadd.f32 %v1018, %v1106
  %v1108 = vpop.f32.mrf.mxu0
  %v1109 = vadd.f32 %v1020, %v1108
  %1110 = vmatprep.mubr.f32.mxu0 %v76
  %1111 = vmatmul.mubr.f32.gmra.mxu0 %v75
  %v1112 = vpop.f32.mrf.mxu0
  %v1113 = vadd.f32 %v1024, %v1112
  %v1114 = vpop.f32.mrf.mxu0
  %v1115 = vadd.f32 %v1026, %v1114
  %1116 = vdwg.mxu0
  %v1117 = vld [vmem:[%s0] sm:$0xfc]
  %v1118 = vld [vmem:[%s0 + $0x8] sm:$0xfc]
  %v1119 = vld [vmem:[%s0 + $0x10] sm:$0xfc]
  %v1120 = vld [vmem:[%s0 + $0x18] sm:$0xfc]
  %v1121 = vld [vmem:[%s0 + $0x20] sm:$0xfc]
  %v1122 = vld [vmem:[%s0 + $0x28] sm:$0xfc]
  %v1123 = vld [vmem:[%s0 + $0xc0] sm:$0x3]
  %v1124 = vld [vmem:[%s0 + $0xc8] sm:$0x3]
  %v1125 = vld [vmem:[%s0 + $0xd0] sm:$0x3]
  %v1126 = vld [vmem:[%s0 + $0xd8] sm:$0x3]
  %v1127 = vld [vmem:[%s0 + $0xe0] sm:$0x3]
  %v1128 = vld [vmem:[%s0 + $0xe8] sm:$0x3]
  %s1129 = scalar_lea.vmem %s1, 3072
  %v1130 = vld [vmem:[%s1129] sm:$0xff]
  %v1131 = vld [vmem:[%s1129 + $0x8] sm:$0xff]
  %v1132 = vld [vmem:[%s1129 + $0x10] sm:$0xff]
  %v1133 = vld [vmem:[%s1129 + $0x18] sm:$0xff]
  %v1134 = vld [vmem:[%s1129 + $0x20] sm:$0xff]
  %v1135 = vld [vmem:[%s1129 + $0x28] sm:$0xff]
  %v1136 = vld [vmem:[%s1129 + $0x30] sm:$0xff]
  %v1137 = vld [vmem:[%s1129 + $0x38] sm:$0xff]
  %v1138 = vld [vmem:[%s1129 + $0x40] sm:$0xff]
  %v1139 = vld [vmem:[%s1129 + $0x48] sm:$0xff]
  %v1140 = vld [vmem:[%s1129 + $0x50] sm:$0xff]
  %v1141 = vld [vmem:[%s1129 + $0x58] sm:$0xff]
  %v1142 = vld [vmem:[%s1129 + $0x60] sm:$0xff]
  %v1143 = vld [vmem:[%s1129 + $0x68] sm:$0xff]
  %v1144 = vld [vmem:[%s1129 + $0x70] sm:$0xff]
  %v1145 = vld [vmem:[%s1129 + $0x78] sm:$0xff]
  %v1146 = vld [vmem:[%s1129 + $0x80] sm:$0xff]
  %v1147 = vld [vmem:[%s1129 + $0x88] sm:$0xff]
  %v1148 = vld [vmem:[%s1129 + $0x90] sm:$0xff]
  %v1149 = vld [vmem:[%s1129 + $0x98] sm:$0xff]
  %v1150 = vld [vmem:[%s1129 + $0xa0] sm:$0xff]
  %v1151 = vld [vmem:[%s1129 + $0xa8] sm:$0xff]
  %v1152 = vld [vmem:[%s1129 + $0xb0] sm:$0xff]
  %v1153 = vld [vmem:[%s1129 + $0xb8] sm:$0xff]
  %v1154 = vld [vmem:[%s1129 + $0xc0] sm:$0xff]
  %v1155 = vld [vmem:[%s1129 + $0xc8] sm:$0xff]
  %v1156 = vld [vmem:[%s1129 + $0xd0] sm:$0xff]
  %v1157 = vld [vmem:[%s1129 + $0xd8] sm:$0xff]
  %v1158 = vld [vmem:[%s1129 + $0xe0] sm:$0xff]
  %v1159 = vld [vmem:[%s1129 + $0xe8] sm:$0xff]
  %v1160 = vld [vmem:[%s1129 + $0xf0] sm:$0xff]
  %v1161 = vld [vmem:[%s1129 + $0xf8] sm:$0xff]
  %v1162 = vld [vmem:[%s1129 + $0x100] sm:$0xff]
  %v1163 = vld [vmem:[%s1129 + $0x108] sm:$0xff]
  %v1164 = vld [vmem:[%s1129 + $0x110] sm:$0xff]
  %v1165 = vld [vmem:[%s1129 + $0x118] sm:$0xff]
  %v1166 = vld [vmem:[%s1129 + $0x120] sm:$0xff]
  %v1167 = vld [vmem:[%s1129 + $0x128] sm:$0xff]
  %v1168 = vld [vmem:[%s1129 + $0x130] sm:$0xff]
  %v1169 = vld [vmem:[%s1129 + $0x138] sm:$0xff]
  %v1170 = vld [vmem:[%s1129 + $0x140] sm:$0xff]
  %v1171 = vld [vmem:[%s1129 + $0x148] sm:$0xff]
  %v1172 = vld [vmem:[%s1129 + $0x150] sm:$0xff]
  %v1173 = vld [vmem:[%s1129 + $0x158] sm:$0xff]
  %v1174 = vld [vmem:[%s1129 + $0x160] sm:$0xff]
  %v1175 = vld [vmem:[%s1129 + $0x168] sm:$0xff]
  %v1176 = vld [vmem:[%s1129 + $0x170] sm:$0xff]
  %v1177 = vld [vmem:[%s1129 + $0x178] sm:$0xff]
  %v1178 = vld [vmem:[%s1129 + $0x180] sm:$0xff]
  %v1179 = vld [vmem:[%s1129 + $0x188] sm:$0xff]
  %v1180 = vld [vmem:[%s1129 + $0x190] sm:$0xff]
  %v1181 = vld [vmem:[%s1129 + $0x198] sm:$0xff]
  %v1182 = vld [vmem:[%s1129 + $0x1a0] sm:$0xff]
  %v1183 = vld [vmem:[%s1129 + $0x1a8] sm:$0xff]
  %v1184 = vld [vmem:[%s1129 + $0x1b0] sm:$0xff]
  %v1185 = vld [vmem:[%s1129 + $0x1b8] sm:$0xff]
  %v1186 = vld [vmem:[%s1129 + $0x1c0] sm:$0xff]
  %v1187 = vld [vmem:[%s1129 + $0x1c8] sm:$0xff]
  %v1188 = vld [vmem:[%s1129 + $0x1d0] sm:$0xff]
  %v1189 = vld [vmem:[%s1129 + $0x1d8] sm:$0xff]
  %v1190 = vld [vmem:[%s1129 + $0x1e0] sm:$0xff]
  %v1191 = vld [vmem:[%s1129 + $0x1e8] sm:$0xff]
  %v1192 = vld [vmem:[%s1129 + $0x1f0] sm:$0xff]
  %v1193 = vld [vmem:[%s1129 + $0x1f8] sm:$0xff]
  %v1194 = vld [vmem:[%s1129 + $0x200] sm:$0xff]
  %v1195 = vld [vmem:[%s1129 + $0x208] sm:$0xff]
  %v1196 = vld [vmem:[%s1129 + $0x210] sm:$0xff]
  %v1197 = vld [vmem:[%s1129 + $0x218] sm:$0xff]
  %v1198 = vld [vmem:[%s1129 + $0x220] sm:$0xff]
  %v1199 = vld [vmem:[%s1129 + $0x228] sm:$0xff]
  %v1200 = vld [vmem:[%s1129 + $0x230] sm:$0xff]
  %v1201 = vld [vmem:[%s1129 + $0x238] sm:$0xff]
  %v1202 = vld [vmem:[%s1129 + $0x240] sm:$0xff]
  %v1203 = vld [vmem:[%s1129 + $0x248] sm:$0xff]
  %v1204 = vld [vmem:[%s1129 + $0x250] sm:$0xff]
  %v1205 = vld [vmem:[%s1129 + $0x258] sm:$0xff]
  %v1206 = vld [vmem:[%s1129 + $0x260] sm:$0xff]
  %v1207 = vld [vmem:[%s1129 + $0x268] sm:$0xff]
  %v1208 = vld [vmem:[%s1129 + $0x270] sm:$0xff]
  %v1209 = vld [vmem:[%s1129 + $0x278] sm:$0xff]
  %v1210 = vld [vmem:[%s1129 + $0x280] sm:$0xff]
  %v1211 = vld [vmem:[%s1129 + $0x288] sm:$0xff]
  %v1212 = vld [vmem:[%s1129 + $0x290] sm:$0xff]
  %v1213 = vld [vmem:[%s1129 + $0x298] sm:$0xff]
  %v1214 = vld [vmem:[%s1129 + $0x2a0] sm:$0xff]
  %v1215 = vld [vmem:[%s1129 + $0x2a8] sm:$0xff]
  %v1216 = vld [vmem:[%s1129 + $0x2b0] sm:$0xff]
  %v1217 = vld [vmem:[%s1129 + $0x2b8] sm:$0xff]
  %v1218 = vld [vmem:[%s1129 + $0x2c0] sm:$0xff]
  %v1219 = vld [vmem:[%s1129 + $0x2c8] sm:$0xff]
  %v1220 = vld [vmem:[%s1129 + $0x2d0] sm:$0xff]
  %v1221 = vld [vmem:[%s1129 + $0x2d8] sm:$0xff]
  %v1222 = vld [vmem:[%s1129 + $0x2e0] sm:$0xff]
  %v1223 = vld [vmem:[%s1129 + $0x2e8] sm:$0xff]
  %v1224 = vld [vmem:[%s1129 + $0x2f0] sm:$0xff]
  %v1225 = vld [vmem:[%s1129 + $0x2f8] sm:$0xff]
  %v1226 = vld [vmem:[%s1129 + $0x300] sm:$0xff]
  %v1227 = vld [vmem:[%s1129 + $0x308] sm:$0xff]
  %v1228 = vld [vmem:[%s1129 + $0x310] sm:$0xff]
  %v1229 = vld [vmem:[%s1129 + $0x318] sm:$0xff]
  %v1230 = vld [vmem:[%s1129 + $0x320] sm:$0xff]
  %v1231 = vld [vmem:[%s1129 + $0x328] sm:$0xff]
  %v1232 = vld [vmem:[%s1129 + $0x330] sm:$0xff]
  %v1233 = vld [vmem:[%s1129 + $0x338] sm:$0xff]
  %v1234 = vld [vmem:[%s1129 + $0x340] sm:$0xff]
  %v1235 = vld [vmem:[%s1129 + $0x348] sm:$0xff]
  %v1236 = vld [vmem:[%s1129 + $0x350] sm:$0xff]
  %v1237 = vld [vmem:[%s1129 + $0x358] sm:$0xff]
  %v1238 = vld [vmem:[%s1129 + $0x360] sm:$0xff]
  %v1239 = vld [vmem:[%s1129 + $0x368] sm:$0xff]
  %v1240 = vld [vmem:[%s1129 + $0x370] sm:$0xff]
  %v1241 = vld [vmem:[%s1129 + $0x378] sm:$0xff]
  %v1242 = vld [vmem:[%s1129 + $0x380] sm:$0xff]
  %v1243 = vld [vmem:[%s1129 + $0x388] sm:$0xff]
  %v1244 = vld [vmem:[%s1129 + $0x390] sm:$0xff]
  %v1245 = vld [vmem:[%s1129 + $0x398] sm:$0xff]
  %v1246 = vld [vmem:[%s1129 + $0x3a0] sm:$0xff]
  %v1247 = vld [vmem:[%s1129 + $0x3a8] sm:$0xff]
  %v1248 = vld [vmem:[%s1129 + $0x3b0] sm:$0xff]
  %v1249 = vld [vmem:[%s1129 + $0x3b8] sm:$0xff]
  %v1250 = vld [vmem:[%s1129 + $0x3c0] sm:$0xff]
  %v1251 = vld [vmem:[%s1129 + $0x3c8] sm:$0xff]
  %v1252 = vld [vmem:[%s1129 + $0x3d0] sm:$0xff]
  %v1253 = vld [vmem:[%s1129 + $0x3d8] sm:$0xff]
  %v1254 = vld [vmem:[%s1129 + $0x3e0] sm:$0xff]
  %v1255 = vld [vmem:[%s1129 + $0x3e8] sm:$0xff]
  %v1256 = vld [vmem:[%s1129 + $0x3f0] sm:$0xff]
  %v1257 = vld [vmem:[%s1129 + $0x3f8] sm:$0xff]
  %v1258 = vld [vmem:[%s1129 + $0x400] sm:$0xff]
  %v1259 = vld [vmem:[%s1129 + $0x408] sm:$0xff]
  %v1260 = vld [vmem:[%s1129 + $0x410] sm:$0xff]
  %v1261 = vld [vmem:[%s1129 + $0x418] sm:$0xff]
  %v1262 = vld [vmem:[%s1129 + $0x420] sm:$0xff]
  %v1263 = vld [vmem:[%s1129 + $0x428] sm:$0xff]
  %v1264 = vld [vmem:[%s1129 + $0x430] sm:$0xff]
  %v1265 = vld [vmem:[%s1129 + $0x438] sm:$0xff]
  %v1266 = vld [vmem:[%s1129 + $0x440] sm:$0xff]
  %v1267 = vld [vmem:[%s1129 + $0x448] sm:$0xff]
  %v1268 = vld [vmem:[%s1129 + $0x450] sm:$0xff]
  %v1269 = vld [vmem:[%s1129 + $0x458] sm:$0xff]
  %v1270 = vld [vmem:[%s1129 + $0x460] sm:$0xff]
  %v1271 = vld [vmem:[%s1129 + $0x468] sm:$0xff]
  %v1272 = vld [vmem:[%s1129 + $0x470] sm:$0xff]
  %v1273 = vld [vmem:[%s1129 + $0x478] sm:$0xff]
  %v1274 = vld [vmem:[%s1129 + $0x480] sm:$0xff]
  %v1275 = vld [vmem:[%s1129 + $0x488] sm:$0xff]
  %v1276 = vld [vmem:[%s1129 + $0x490] sm:$0xff]
  %v1277 = vld [vmem:[%s1129 + $0x498] sm:$0xff]
  %v1278 = vld [vmem:[%s1129 + $0x4a0] sm:$0xff]
  %v1279 = vld [vmem:[%s1129 + $0x4a8] sm:$0xff]
  %v1280 = vld [vmem:[%s1129 + $0x4b0] sm:$0xff]
  %v1281 = vld [vmem:[%s1129 + $0x4b8] sm:$0xff]
  %v1282 = vld [vmem:[%s1129 + $0x4c0] sm:$0xff]
  %v1283 = vld [vmem:[%s1129 + $0x4c8] sm:$0xff]
  %v1284 = vld [vmem:[%s1129 + $0x4d0] sm:$0xff]
  %v1285 = vld [vmem:[%s1129 + $0x4d8] sm:$0xff]
  %v1286 = vld [vmem:[%s1129 + $0x4e0] sm:$0xff]
  %v1287 = vld [vmem:[%s1129 + $0x4e8] sm:$0xff]
  %v1288 = vld [vmem:[%s1129 + $0x4f0] sm:$0xff]
  %v1289 = vld [vmem:[%s1129 + $0x4f8] sm:$0xff]
  %v1290 = vld [vmem:[%s1129 + $0x500] sm:$0xff]
  %v1291 = vld [vmem:[%s1129 + $0x508] sm:$0xff]
  %v1292 = vld [vmem:[%s1129 + $0x510] sm:$0xff]
  %v1293 = vld [vmem:[%s1129 + $0x518] sm:$0xff]
  %v1294 = vld [vmem:[%s1129 + $0x520] sm:$0xff]
  %v1295 = vld [vmem:[%s1129 + $0x528] sm:$0xff]
  %v1296 = vld [vmem:[%s1129 + $0x530] sm:$0xff]
  %v1297 = vld [vmem:[%s1129 + $0x538] sm:$0xff]
  %v1298 = vld [vmem:[%s1129 + $0x540] sm:$0xff]
  %v1299 = vld [vmem:[%s1129 + $0x548] sm:$0xff]
  %v1300 = vld [vmem:[%s1129 + $0x550] sm:$0xff]
  %v1301 = vld [vmem:[%s1129 + $0x558] sm:$0xff]
  %v1302 = vld [vmem:[%s1129 + $0x560] sm:$0xff]
  %v1303 = vld [vmem:[%s1129 + $0x568] sm:$0xff]
  %v1304 = vld [vmem:[%s1129 + $0x570] sm:$0xff]
  %v1305 = vld [vmem:[%s1129 + $0x578] sm:$0xff]
  %v1306 = vld [vmem:[%s1129 + $0x580] sm:$0xff]
  %v1307 = vld [vmem:[%s1129 + $0x588] sm:$0xff]
  %v1308 = vld [vmem:[%s1129 + $0x590] sm:$0xff]
  %v1309 = vld [vmem:[%s1129 + $0x598] sm:$0xff]
  %v1310 = vld [vmem:[%s1129 + $0x5a0] sm:$0xff]
  %v1311 = vld [vmem:[%s1129 + $0x5a8] sm:$0xff]
  %v1312 = vld [vmem:[%s1129 + $0x5b0] sm:$0xff]
  %v1313 = vld [vmem:[%s1129 + $0x5b8] sm:$0xff]
  %v1314 = vld [vmem:[%s1129 + $0x5c0] sm:$0xff]
  %v1315 = vld [vmem:[%s1129 + $0x5c8] sm:$0xff]
  %v1316 = vld [vmem:[%s1129 + $0x5d0] sm:$0xff]
  %v1317 = vld [vmem:[%s1129 + $0x5d8] sm:$0xff]
  %v1318 = vld [vmem:[%s1129 + $0x5e0] sm:$0xff]
  %v1319 = vld [vmem:[%s1129 + $0x5e8] sm:$0xff]
  %v1320 = vld [vmem:[%s1129 + $0x5f0] sm:$0xff]
  %v1321 = vld [vmem:[%s1129 + $0x5f8] sm:$0xff]
  %vm1334 = vcmask 1045504
  %v1335 = vrot.slane %v1117, 2
  %v1336 = vrot.slane %v59, 2
  %v1337 = vsel %vm1334, %v1335, %v1336
  %v1338 = vrot.slane %v1118, 2
  %v1339 = vrot.slane %v60, 2
  %v1340 = vsel %vm1334, %v1338, %v1339
  %v1341 = vrot.slane %v1119, 2
  %v1342 = vrot.slane %v61, 2
  %v1343 = vsel %vm1334, %v1341, %v1342
  %v1344 = vrot.slane %v1120, 2
  %v1345 = vrot.slane %v62, 2
  %v1346 = vsel %vm1334, %v1344, %v1345
  %v1347 = vrot.slane %v1121, 2
  %v1348 = vrot.slane %v63, 2
  %v1349 = vsel %vm1334, %v1347, %v1348
  %v1350 = vrot.slane %v1122, 2
  %v1351 = vrot.slane %v64, 2
  %v1352 = vsel %vm1334, %v1350, %v1351
  %v1353 = vrot.slane %v65, 2
  %v1354 = vsel %vm1334, %v1336, %v1353
  %v1355 = vrot.slane %v66, 2
  %v1356 = vsel %vm1334, %v1339, %v1355
  %v1357 = vrot.slane %v67, 2
  %v1358 = vsel %vm1334, %v1342, %v1357
  %v1359 = vrot.slane %v68, 2
  %v1360 = vsel %vm1334, %v1345, %v1359
  %v1361 = vrot.slane %v69, 2
  %v1362 = vsel %vm1334, %v1348, %v1361
  %v1363 = vrot.slane %v70, 2
  %v1364 = vsel %vm1334, %v1351, %v1363
  %v1365 = vrot.slane %v71, 2
  %v1366 = vsel %vm1334, %v1353, %v1365
  %v1367 = vrot.slane %v72, 2
  %v1368 = vsel %vm1334, %v1355, %v1367
  %v1369 = vrot.slane %v73, 2
  %v1370 = vsel %vm1334, %v1357, %v1369
  %v1371 = vrot.slane %v74, 2
  %v1372 = vsel %vm1334, %v1359, %v1371
  %v1373 = vrot.slane %v75, 2
  %v1374 = vsel %vm1334, %v1361, %v1373
  %v1375 = vrot.slane %v76, 2
  %v1376 = vsel %vm1334, %v1363, %v1375
  %v1377 = vrot.slane %v1123, 2
  %v1378 = vsel %vm1334, %v1365, %v1377
  %v1379 = vrot.slane %v1124, 2
  %v1380 = vsel %vm1334, %v1367, %v1379
  %v1381 = vrot.slane %v1125, 2
  %v1382 = vsel %vm1334, %v1369, %v1381
  %v1383 = vrot.slane %v1126, 2
  %v1384 = vsel %vm1334, %v1371, %v1383
  %v1385 = vrot.slane %v1127, 2
  %v1386 = vsel %vm1334, %v1373, %v1385
  %v1387 = vrot.slane %v1128, 2
  %v1388 = vsel %vm1334, %v1375, %v1387
  %1413 = vmatprep.subr.mxu0 %v1161
  %1414 = vmatpush1.msra.mxu0 %v1160
  %1415 = vmatprep.subr.mxu0 %v1159
  %1416 = vmatpush1.msra.mxu0 %v1158
  %1417 = vmatprep.subr.mxu0 %v1157
  %1418 = vmatpush1.msra.mxu0 %v1156
  %1419 = vmatprep.subr.mxu0 %v1155
  %1420 = vmatpush1.msra.mxu0 %v1154
  %1421 = vmatprep.subr.mxu0 %v1153
  %1422 = vmatpush1.msra.mxu0 %v1152
  %1423 = vmatprep.subr.mxu0 %v1151
  %1424 = vmatpush1.msra.mxu0 %v1150
  %1425 = vmatprep.subr.mxu0 %v1149
  %1426 = vmatpush1.msra.mxu0 %v1148
  %1427 = vmatprep.subr.mxu0 %v1147
  %1428 = vmatpush1.msra.mxu0 %v1146
  %1429 = vmatprep.subr.mxu0 %v1145
  %1430 = vmatpush1.msra.mxu0 %v1144
  %1431 = vmatprep.subr.mxu0 %v1143
  %1432 = vmatpush1.msra.mxu0 %v1142
  %1433 = vmatprep.subr.mxu0 %v1141
  %1434 = vmatpush1.msra.mxu0 %v1140
  %1435 = vmatprep.subr.mxu0 %v1139
  %1436 = vmatpush1.msra.mxu0 %v1138
  %1437 = vmatprep.subr.mxu0 %v1137
  %1438 = vmatpush1.msra.mxu0 %v1136
  %1439 = vmatprep.subr.mxu0 %v1135
  %1440 = vmatpush1.msra.mxu0 %v1134
  %1441 = vmatprep.subr.mxu0 %v1133
  %1442 = vmatpush1.msra.mxu0 %v1132
  %1443 = vmatprep.subr.mxu0 %v1131
  %1444 = vmatpush1.msra.mxu0 %v1130
  %1445 = vmatprep.subr.mxu0 %v1193
  %1446 = vmatpush2.msra.mxu0 %v1192
  %1447 = vmatprep.subr.mxu0 %v1191
  %1448 = vmatpush2.msra.mxu0 %v1190
  %1449 = vmatprep.subr.mxu0 %v1189
  %1450 = vmatpush2.msra.mxu0 %v1188
  %1451 = vmatprep.subr.mxu0 %v1187
  %1452 = vmatpush2.msra.mxu0 %v1186
  %1453 = vmatprep.subr.mxu0 %v1185
  %1454 = vmatpush2.msra.mxu0 %v1184
  %1455 = vmatprep.subr.mxu0 %v1183
  %1456 = vmatpush2.msra.mxu0 %v1182
  %1457 = vmatprep.subr.mxu0 %v1181
  %1458 = vmatpush2.msra.mxu0 %v1180
  %1459 = vmatprep.subr.mxu0 %v1179
  %1460 = vmatpush2.msra.mxu0 %v1178
  %1461 = vmatprep.subr.mxu0 %v1177
  %1462 = vmatpush2.msra.mxu0 %v1176
  %1463 = vmatprep.subr.mxu0 %v1175
  %1464 = vmatpush2.msra.mxu0 %v1174
  %1465 = vmatprep.subr.mxu0 %v1173
  %1466 = vmatpush2.msra.mxu0 %v1172
  %1467 = vmatprep.subr.mxu0 %v1171
  %1468 = vmatpush2.msra.mxu0 %v1170
  %1469 = vmatprep.subr.mxu0 %v1169
  %1470 = vmatpush2.msra.mxu0 %v1168
  %1471 = vmatprep.subr.mxu0 %v1167
  %1472 = vmatpush2.msra.mxu0 %v1166
  %1473 = vmatprep.subr.mxu0 %v1165
  %1474 = vmatpush2.msra.mxu0 %v1164
  %1475 = vmatprep.subr.mxu0 %v1163
  %1476 = vmatpush2.msra.mxu0 %v1162
  %1477 = vmatprep.mubr.f32.mxu0 %v1340
  %1478 = vmatmul.mubr.f32.gmra.mxu0 %v1337
  %v1479 = vpop.f32.mrf.mxu0
  %v1480 = vadd.f32 0.0, %v1479
  %v1481 = vpop.f32.mrf.mxu0
  %v1482 = vadd.f32 0.0, %v1481
  %1483 = vmatprep.mubr.f32.mxu0 %v1356
  %1484 = vmatmul.mubr.f32.gmra.mxu0 %v1354
  %v1485 = vpop.f32.mrf.mxu0
  %v1486 = vadd.f32 0.0, %v1485
  %v1487 = vpop.f32.mrf.mxu0
  %v1488 = vadd.f32 0.0, %v1487
  %1489 = vmatprep.mubr.f32.mxu0 %v1368
  %1490 = vmatmul.mubr.f32.gmra.mxu0 %v1366
  %v1491 = vpop.f32.mrf.mxu0
  %v1492 = vadd.f32 0.0, %v1491
  %v1493 = vpop.f32.mrf.mxu0
  %v1494 = vadd.f32 0.0, %v1493
  %1495 = vmatprep.mubr.f32.mxu0 %v1380
  %1496 = vmatmul.mubr.f32.gmra.mxu0 %v1378
  %v1497 = vpop.f32.mrf.mxu0
  %v1498 = vadd.f32 0.0, %v1497
  %v1499 = vpop.f32.mrf.mxu0
  %v1500 = vadd.f32 0.0, %v1499
  %1501 = vdwg.mxu0
  %1502 = vmatprep.subr.mxu0 %v1225
  %1503 = vmatpush1.msra.mxu0 %v1224
  %1504 = vmatprep.subr.mxu0 %v1223
  %1505 = vmatpush1.msra.mxu0 %v1222
  %1506 = vmatprep.subr.mxu0 %v1221
  %1507 = vmatpush1.msra.mxu0 %v1220
  %1508 = vmatprep.subr.mxu0 %v1219
  %1509 = vmatpush1.msra.mxu0 %v1218
  %1510 = vmatprep.subr.mxu0 %v1217
  %1511 = vmatpush1.msra.mxu0 %v1216
  %1512 = vmatprep.subr.mxu0 %v1215
  %1513 = vmatpush1.msra.mxu0 %v1214
  %1514 = vmatprep.subr.mxu0 %v1213
  %1515 = vmatpush1.msra.mxu0 %v1212
  %1516 = vmatprep.subr.mxu0 %v1211
  %1517 = vmatpush1.msra.mxu0 %v1210
  %1518 = vmatprep.subr.mxu0 %v1209
  %1519 = vmatpush1.msra.mxu0 %v1208
  %1520 = vmatprep.subr.mxu0 %v1207
  %1521 = vmatpush1.msra.mxu0 %v1206
  %1522 = vmatprep.subr.mxu0 %v1205
  %1523 = vmatpush1.msra.mxu0 %v1204
  %1524 = vmatprep.subr.mxu0 %v1203
  %1525 = vmatpush1.msra.mxu0 %v1202
  %1526 = vmatprep.subr.mxu0 %v1201
  %1527 = vmatpush1.msra.mxu0 %v1200
  %1528 = vmatprep.subr.mxu0 %v1199
  %1529 = vmatpush1.msra.mxu0 %v1198
  %1530 = vmatprep.subr.mxu0 %v1197
  %1531 = vmatpush1.msra.mxu0 %v1196
  %1532 = vmatprep.subr.mxu0 %v1195
  %1533 = vmatpush1.msra.mxu0 %v1194
  %1534 = vmatprep.subr.mxu0 %v1257
  %1535 = vmatpush2.msra.mxu0 %v1256
  %1536 = vmatprep.subr.mxu0 %v1255
  %1537 = vmatpush2.msra.mxu0 %v1254
  %1538 = vmatprep.subr.mxu0 %v1253
  %1539 = vmatpush2.msra.mxu0 %v1252
  %1540 = vmatprep.subr.mxu0 %v1251
  %1541 = vmatpush2.msra.mxu0 %v1250
  %1542 = vmatprep.subr.mxu0 %v1249
  %1543 = vmatpush2.msra.mxu0 %v1248
  %1544 = vmatprep.subr.mxu0 %v1247
  %1545 = vmatpush2.msra.mxu0 %v1246
  %1546 = vmatprep.subr.mxu0 %v1245
  %1547 = vmatpush2.msra.mxu0 %v1244
  %1548 = vmatprep.subr.mxu0 %v1243
  %1549 = vmatpush2.msra.mxu0 %v1242
  %1550 = vmatprep.subr.mxu0 %v1241
  %1551 = vmatpush2.msra.mxu0 %v1240
  %1552 = vmatprep.subr.mxu0 %v1239
  %1553 = vmatpush2.msra.mxu0 %v1238
  %1554 = vmatprep.subr.mxu0 %v1237
  %1555 = vmatpush2.msra.mxu0 %v1236
  %1556 = vmatprep.subr.mxu0 %v1235
  %1557 = vmatpush2.msra.mxu0 %v1234
  %1558 = vmatprep.subr.mxu0 %v1233
  %1559 = vmatpush2.msra.mxu0 %v1232
  %1560 = vmatprep.subr.mxu0 %v1231
  %1561 = vmatpush2.msra.mxu0 %v1230
  %1562 = vmatprep.subr.mxu0 %v1229
  %1563 = vmatpush2.msra.mxu0 %v1228
  %1564 = vmatprep.subr.mxu0 %v1227
  %1565 = vmatpush2.msra.mxu0 %v1226
  %1566 = vmatprep.mubr.f32.mxu0 %v1346
  %1567 = vmatmul.mubr.f32.gmra.mxu0 %v1343
  %v1568 = vpop.f32.mrf.mxu0
  %v1569 = vadd.f32 %v1480, %v1568
  %v1570 = vpop.f32.mrf.mxu0
  %v1571 = vadd.f32 %v1482, %v1570
  %1572 = vmatprep.mubr.f32.mxu0 %v1360
  %1573 = vmatmul.mubr.f32.gmra.mxu0 %v1358
  %v1574 = vpop.f32.mrf.mxu0
  %v1575 = vadd.f32 %v1486, %v1574
  %v1576 = vpop.f32.mrf.mxu0
  %v1577 = vadd.f32 %v1488, %v1576
  %1578 = vmatprep.mubr.f32.mxu0 %v1372
  %1579 = vmatmul.mubr.f32.gmra.mxu0 %v1370
  %v1580 = vpop.f32.mrf.mxu0
  %v1581 = vadd.f32 %v1492, %v1580
  %v1582 = vpop.f32.mrf.mxu0
  %v1583 = vadd.f32 %v1494, %v1582
  %1584 = vmatprep.mubr.f32.mxu0 %v1384
  %1585 = vmatmul.mubr.f32.gmra.mxu0 %v1382
  %v1586 = vpop.f32.mrf.mxu0
  %v1587 = vadd.f32 %v1498, %v1586
  %v1588 = vpop.f32.mrf.mxu0
  %v1589 = vadd.f32 %v1500, %v1588
  %1590 = vdwg.mxu0
  %1591 = vmatprep.subr.mxu0 %v1289
  %1592 = vmatpush1.msra.mxu0 %v1288
  %1593 = vmatprep.subr.mxu0 %v1287
  %1594 = vmatpush1.msra.mxu0 %v1286
  %1595 = vmatprep.subr.mxu0 %v1285
  %1596 = vmatpush1.msra.mxu0 %v1284
  %1597 = vmatprep.subr.mxu0 %v1283
  %1598 = vmatpush1.msra.mxu0 %v1282
  %1599 = vmatprep.subr.mxu0 %v1281
  %1600 = vmatpush1.msra.mxu0 %v1280
  %1601 = vmatprep.subr.mxu0 %v1279
  %1602 = vmatpush1.msra.mxu0 %v1278
  %1603 = vmatprep.subr.mxu0 %v1277
  %1604 = vmatpush1.msra.mxu0 %v1276
  %1605 = vmatprep.subr.mxu0 %v1275
  %1606 = vmatpush1.msra.mxu0 %v1274
  %1607 = vmatprep.subr.mxu0 %v1273
  %1608 = vmatpush1.msra.mxu0 %v1272
  %1609 = vmatprep.subr.mxu0 %v1271
  %1610 = vmatpush1.msra.mxu0 %v1270
  %1611 = vmatprep.subr.mxu0 %v1269
  %1612 = vmatpush1.msra.mxu0 %v1268
  %1613 = vmatprep.subr.mxu0 %v1267
  %1614 = vmatpush1.msra.mxu0 %v1266
  %1615 = vmatprep.subr.mxu0 %v1265
  %1616 = vmatpush1.msra.mxu0 %v1264
  %1617 = vmatprep.subr.mxu0 %v1263
  %1618 = vmatpush1.msra.mxu0 %v1262
  %1619 = vmatprep.subr.mxu0 %v1261
  %1620 = vmatpush1.msra.mxu0 %v1260
  %1621 = vmatprep.subr.mxu0 %v1259
  %1622 = vmatpush1.msra.mxu0 %v1258
  %1623 = vmatprep.subr.mxu0 %v1321
  %1624 = vmatpush2.msra.mxu0 %v1320
  %1625 = vmatprep.subr.mxu0 %v1319
  %1626 = vmatpush2.msra.mxu0 %v1318
  %1627 = vmatprep.subr.mxu0 %v1317
  %1628 = vmatpush2.msra.mxu0 %v1316
  %1629 = vmatprep.subr.mxu0 %v1315
  %1630 = vmatpush2.msra.mxu0 %v1314
  %1631 = vmatprep.subr.mxu0 %v1313
  %1632 = vmatpush2.msra.mxu0 %v1312
  %1633 = vmatprep.subr.mxu0 %v1311
  %1634 = vmatpush2.msra.mxu0 %v1310
  %1635 = vmatprep.subr.mxu0 %v1309
  %1636 = vmatpush2.msra.mxu0 %v1308
  %1637 = vmatprep.subr.mxu0 %v1307
  %1638 = vmatpush2.msra.mxu0 %v1306
  %1639 = vmatprep.subr.mxu0 %v1305
  %1640 = vmatpush2.msra.mxu0 %v1304
  %1641 = vmatprep.subr.mxu0 %v1303
  %1642 = vmatpush2.msra.mxu0 %v1302
  %1643 = vmatprep.subr.mxu0 %v1301
  %1644 = vmatpush2.msra.mxu0 %v1300
  %1645 = vmatprep.subr.mxu0 %v1299
  %1646 = vmatpush2.msra.mxu0 %v1298
  %1647 = vmatprep.subr.mxu0 %v1297
  %1648 = vmatpush2.msra.mxu0 %v1296
  %1649 = vmatprep.subr.mxu0 %v1295
  %1650 = vmatpush2.msra.mxu0 %v1294
  %1651 = vmatprep.subr.mxu0 %v1293
  %1652 = vmatpush2.msra.mxu0 %v1292
  %1653 = vmatprep.subr.mxu0 %v1291
  %1654 = vmatpush2.msra.mxu0 %v1290
  %1655 = vmatprep.mubr.f32.mxu0 %v1352
  %1656 = vmatmul.mubr.f32.gmra.mxu0 %v1349
  %v1657 = vpop.f32.mrf.mxu0
  %v1658 = vadd.f32 %v1569, %v1657
  %v1659 = vpop.f32.mrf.mxu0
  %v1660 = vadd.f32 %v1571, %v1659
  %1661 = vmatprep.mubr.f32.mxu0 %v1364
  %1662 = vmatmul.mubr.f32.gmra.mxu0 %v1362
  %v1663 = vpop.f32.mrf.mxu0
  %v1664 = vadd.f32 %v1575, %v1663
  %v1665 = vpop.f32.mrf.mxu0
  %v1666 = vadd.f32 %v1577, %v1665
  %1667 = vmatprep.mubr.f32.mxu0 %v1376
  %1668 = vmatmul.mubr.f32.gmra.mxu0 %v1374
  %v1669 = vpop.f32.mrf.mxu0
  %v1670 = vadd.f32 %v1581, %v1669
  %v1671 = vpop.f32.mrf.mxu0
  %v1672 = vadd.f32 %v1583, %v1671
  %1673 = vmatprep.mubr.f32.mxu0 %v1388
  %1674 = vmatmul.mubr.f32.gmra.mxu0 %v1386
  %v1675 = vpop.f32.mrf.mxu0
  %v1676 = vadd.f32 %v1587, %v1675
  %v1677 = vpop.f32.mrf.mxu0
  %v1678 = vadd.f32 %v1589, %v1677
  %1679 = vdwg.mxu0
  %v1680 = vadd.f32 %v1095, %v1658
  %v1681 = vadd.f32 %v1097, %v1660
  %v1682 = vadd.f32 %v1101, %v1664
  %v1683 = vadd.f32 %v1103, %v1666
  %v1684 = vadd.f32 %v1107, %v1670
  %v1685 = vadd.f32 %v1109, %v1672
  %v1686 = vadd.f32 %v1113, %v1676
  %v1687 = vadd.f32 %v1115, %v1678
  %vm1688 = vcmp.ge.f32.partialorder %v1680, 0.0
  %vm1689 = vcmp.ge.f32.partialorder %v1681, 0.0
  %vm1690 = vcmp.ge.f32.partialorder %v1682, 0.0
  %vm1691 = vcmp.ge.f32.partialorder %v1683, 0.0
  %vm1692 = vcmp.ge.f32.partialorder %v1684, 0.0
  %vm1693 = vcmp.ge.f32.partialorder %v1685, 0.0
  %vm1694 = vcmp.ge.f32.partialorder %v1686, 0.0
  %vm1695 = vcmp.ge.f32.partialorder %v1687, 0.0
  %v1696 = vmul.f32 %v1680, 0.2
  %v1697 = vmul.f32 %v1681, 0.2
  %v1698 = vmul.f32 %v1682, 0.2
  %v1699 = vmul.f32 %v1683, 0.2
  %v1700 = vmul.f32 %v1684, 0.2
  %v1701 = vmul.f32 %v1685, 0.2
  %v1702 = vmul.f32 %v1686, 0.2
  %v1703 = vmul.f32 %v1687, 0.2
  %v1704 = vsel %vm1688, %v1680, %v1696
  %v1705 = vsel %vm1689, %v1681, %v1697
  %v1706 = vsel %vm1690, %v1682, %v1698
  %v1707 = vsel %vm1691, %v1683, %v1699
  %v1708 = vsel %vm1692, %v1684, %v1700
  %v1709 = vsel %vm1693, %v1685, %v1701
  %v1710 = vsel %vm1694, %v1686, %v1702
  %v1711 = vsel %vm1695, %v1687, %v1703
  %v1712 = vlaneseq
  %vm1713 = vcmp.ge.s32.totalorder %v1712, 0
  %vm1714 = vcmp.lt.s32.totalorder %v1712, 256
  %vm1715 = vmand %vm1713, %vm1714
  %s1716 = scalar_lea.vmem [#allocation2], 7
  %1717 = vst.msk [vmem:[%s1716] ss:$8 sm:$0x3] %vm1715, 0.0
  %1718 = vst.msk [vmem:[%s1716] ss:$8 sm:$0x0] %vm1715, 0.0
  %s1719 = scalar_lea.vmem [#allocation2], 80
  %1720 = vst.msk [vmem:[%s1719] ss:$8 sm:$0x3] %vm1715, 0.0
  %1721 = vst.msk [vmem:[%s1719] ss:$8 sm:$0x0] %vm1715, 0.0
  %1722 = vst [vmem:[#allocation2 + $0x10] sm:$0xff] %v1704
  %1723 = vst [vmem:[#allocation2 + $0x18] sm:$0xff] %v1705
  %1724 = vst [vmem:[#allocation2 + $0x20] sm:$0xff] %v1706
  %1725 = vst [vmem:[#allocation2 + $0x28] sm:$0xff] %v1707
  %1726 = vst [vmem:[#allocation2 + $0x30] sm:$0xff] %v1708
  %1727 = vst [vmem:[#allocation2 + $0x38] sm:$0xff] %v1709
  %1728 = vst [vmem:[#allocation2 + $0x40] sm:$0xff] %v1710
  %1729 = vst [vmem:[#allocation2 + $0x48] sm:$0xff] %v1711
  %v1730 = vld [vmem:[#allocation2] sm:$0x80]
  %v1731 = vld [vmem:[#allocation2 + $0x8] sm:$0x80]
  %v1732 = vld [vmem:[#allocation2 + $0x10] sm:$0xff]
  %v1733 = vld [vmem:[#allocation2 + $0x18] sm:$0xff]
  %v1734 = vld [vmem:[#allocation2 + $0x20] sm:$0xff]
  %v1735 = vld [vmem:[#allocation2 + $0x28] sm:$0xff]
  %v1736 = vld [vmem:[#allocation2 + $0x30] sm:$0xff]
  %v1737 = vld [vmem:[#allocation2 + $0x38] sm:$0xff]
  %v1738 = vld [vmem:[#allocation2 + $0x40] sm:$0x7f]
  %v1739 = vld [vmem:[#allocation2 + $0x48] sm:$0x7f]
  %v1740 = vld [vmem:[%s2] sm:$0xff]
  %v1741 = vld [vmem:[%s2 + $0x8] sm:$0xff]
  %v1742 = vld [vmem:[%s2 + $0x10] sm:$0xff]
  %v1743 = vld [vmem:[%s2 + $0x18] sm:$0xff]
  %v1744 = vld [vmem:[%s2 + $0x20] sm:$0xff]
  %v1745 = vld [vmem:[%s2 + $0x28] sm:$0xff]
  %v1746 = vld [vmem:[%s2 + $0x30] sm:$0xff]
  %v1747 = vld [vmem:[%s2 + $0x38] sm:$0xff]
  %v1748 = vld [vmem:[%s2 + $0x40] sm:$0xff]
  %v1749 = vld [vmem:[%s2 + $0x48] sm:$0xff]
  %v1750 = vld [vmem:[%s2 + $0x50] sm:$0xff]
  %v1751 = vld [vmem:[%s2 + $0x58] sm:$0xff]
  %v1752 = vld [vmem:[%s2 + $0x60] sm:$0xff]
  %v1753 = vld [vmem:[%s2 + $0x68] sm:$0xff]
  %v1754 = vld [vmem:[%s2 + $0x70] sm:$0xff]
  %v1755 = vld [vmem:[%s2 + $0x78] sm:$0xff]
  %v1756 = vld [vmem:[%s2 + $0x80] sm:$0xff]
  %v1757 = vld [vmem:[%s2 + $0x88] sm:$0xff]
  %v1758 = vld [vmem:[%s2 + $0x90] sm:$0xff]
  %v1759 = vld [vmem:[%s2 + $0x98] sm:$0xff]
  %v1760 = vld [vmem:[%s2 + $0xa0] sm:$0xff]
  %v1761 = vld [vmem:[%s2 + $0xa8] sm:$0xff]
  %v1762 = vld [vmem:[%s2 + $0xb0] sm:$0xff]
  %v1763 = vld [vmem:[%s2 + $0xb8] sm:$0xff]
  %v1764 = vld [vmem:[%s2 + $0xc0] sm:$0xff]
  %v1765 = vld [vmem:[%s2 + $0xc8] sm:$0xff]
  %v1766 = vld [vmem:[%s2 + $0xd0] sm:$0xff]
  %v1767 = vld [vmem:[%s2 + $0xd8] sm:$0xff]
  %v1768 = vld [vmem:[%s2 + $0xe0] sm:$0xff]
  %v1769 = vld [vmem:[%s2 + $0xe8] sm:$0xff]
  %v1770 = vld [vmem:[%s2 + $0xf0] sm:$0xff]
  %v1771 = vld [vmem:[%s2 + $0xf8] sm:$0xff]
  %v1772 = vld [vmem:[#allocation2 + $0x40] sm:$0xff]
  %v1773 = vld [vmem:[#allocation2 + $0x48] sm:$0xff]
  %s1774 = scalar_lea.vmem %s2, 256
  %v1775 = vld [vmem:[%s1774] sm:$0xff]
  %v1776 = vld [vmem:[%s1774 + $0x8] sm:$0xff]
  %v1777 = vld [vmem:[%s1774 + $0x10] sm:$0xff]
  %v1778 = vld [vmem:[%s1774 + $0x18] sm:$0xff]
  %v1779 = vld [vmem:[%s1774 + $0x20] sm:$0xff]
  %v1780 = vld [vmem:[%s1774 + $0x28] sm:$0xff]
  %v1781 = vld [vmem:[%s1774 + $0x30] sm:$0xff]
  %v1782 = vld [vmem:[%s1774 + $0x38] sm:$0xff]
  %v1783 = vld [vmem:[%s1774 + $0x40] sm:$0xff]
  %v1784 = vld [vmem:[%s1774 + $0x48] sm:$0xff]
  %v1785 = vld [vmem:[%s1774 + $0x50] sm:$0xff]
  %v1786 = vld [vmem:[%s1774 + $0x58] sm:$0xff]
  %v1787 = vld [vmem:[%s1774 + $0x60] sm:$0xff]
  %v1788 = vld [vmem:[%s1774 + $0x68] sm:$0xff]
  %v1789 = vld [vmem:[%s1774 + $0x70] sm:$0xff]
  %v1790 = vld [vmem:[%s1774 + $0x78] sm:$0xff]
  %v1791 = vld [vmem:[%s1774 + $0x80] sm:$0xff]
  %v1792 = vld [vmem:[%s1774 + $0x88] sm:$0xff]
  %v1793 = vld [vmem:[%s1774 + $0x90] sm:$0xff]
  %v1794 = vld [vmem:[%s1774 + $0x98] sm:$0xff]
  %v1795 = vld [vmem:[%s1774 + $0xa0] sm:$0xff]
  %v1796 = vld [vmem:[%s1774 + $0xa8] sm:$0xff]
  %v1797 = vld [vmem:[%s1774 + $0xb0] sm:$0xff]
  %v1798 = vld [vmem:[%s1774 + $0xb8] sm:$0xff]
  %v1799 = vld [vmem:[%s1774 + $0xc0] sm:$0xff]
  %v1800 = vld [vmem:[%s1774 + $0xc8] sm:$0xff]
  %v1801 = vld [vmem:[%s1774 + $0xd0] sm:$0xff]
  %v1802 = vld [vmem:[%s1774 + $0xd8] sm:$0xff]
  %v1803 = vld [vmem:[%s1774 + $0xe0] sm:$0xff]
  %v1804 = vld [vmem:[%s1774 + $0xe8] sm:$0xff]
  %v1805 = vld [vmem:[%s1774 + $0xf0] sm:$0xff]
  %v1806 = vld [vmem:[%s1774 + $0xf8] sm:$0xff]
  %1807 = vmatprep.subr.mxu0 0.0
  %1808 = vmatpush1.msra.mxu0 %v1790
  %1809 = vmatprep.subr.mxu0 0.0
  %1810 = vmatpush1.msra.mxu0 %v1789
  %1811 = vmatprep.subr.mxu0 0.0
  %1812 = vmatpush1.msra.mxu0 %v1788
  %1813 = vmatprep.subr.mxu0 0.0
  %1814 = vmatpush1.msra.mxu0 %v1787
  %1815 = vmatprep.subr.mxu0 0.0
  %1816 = vmatpush1.msra.mxu0 %v1786
  %1817 = vmatprep.subr.mxu0 0.0
  %1818 = vmatpush1.msra.mxu0 %v1785
  %1819 = vmatprep.subr.mxu0 0.0
  %1820 = vmatpush1.msra.mxu0 %v1784
  %1821 = vmatprep.subr.mxu0 0.0
  %1822 = vmatpush1.msra.mxu0 %v1783
  %1823 = vmatprep.subr.mxu0 0.0
  %1824 = vmatpush1.msra.mxu0 %v1782
  %1825 = vmatprep.subr.mxu0 0.0
  %1826 = vmatpush1.msra.mxu0 %v1781
  %1827 = vmatprep.subr.mxu0 0.0
  %1828 = vmatpush1.msra.mxu0 %v1780
  %1829 = vmatprep.subr.mxu0 0.0
  %1830 = vmatpush1.msra.mxu0 %v1779
  %1831 = vmatprep.subr.mxu0 0.0
  %1832 = vmatpush1.msra.mxu0 %v1778
  %1833 = vmatprep.subr.mxu0 0.0
  %1834 = vmatpush1.msra.mxu0 %v1777
  %1835 = vmatprep.subr.mxu0 0.0
  %1836 = vmatpush1.msra.mxu0 %v1776
  %1837 = vmatprep.subr.mxu0 0.0
  %1838 = vmatpush1.msra.mxu0 %v1775
  %1839 = vmatprep.subr.mxu0 0.0
  %1840 = vmatpush2.msra.mxu0 %v1806
  %1841 = vmatprep.subr.mxu0 0.0
  %1842 = vmatpush2.msra.mxu0 %v1805
  %1843 = vmatprep.subr.mxu0 0.0
  %1844 = vmatpush2.msra.mxu0 %v1804
  %1845 = vmatprep.subr.mxu0 0.0
  %1846 = vmatpush2.msra.mxu0 %v1803
  %1847 = vmatprep.subr.mxu0 0.0
  %1848 = vmatpush2.msra.mxu0 %v1802
  %1849 = vmatprep.subr.mxu0 0.0
  %1850 = vmatpush2.msra.mxu0 %v1801
  %1851 = vmatprep.subr.mxu0 0.0
  %1852 = vmatpush2.msra.mxu0 %v1800
  %1853 = vmatprep.subr.mxu0 0.0
  %1854 = vmatpush2.msra.mxu0 %v1799
  %1855 = vmatprep.subr.mxu0 0.0
  %1856 = vmatpush2.msra.mxu0 %v1798
  %1857 = vmatprep.subr.mxu0 0.0
  %1858 = vmatpush2.msra.mxu0 %v1797
  %1859 = vmatprep.subr.mxu0 0.0
  %1860 = vmatpush2.msra.mxu0 %v1796
  %1861 = vmatprep.subr.mxu0 0.0
  %1862 = vmatpush2.msra.mxu0 %v1795
  %1863 = vmatprep.subr.mxu0 0.0
  %1864 = vmatpush2.msra.mxu0 %v1794
  %1865 = vmatprep.subr.mxu0 0.0
  %1866 = vmatpush2.msra.mxu0 %v1793
  %1867 = vmatprep.subr.mxu0 0.0
  %1868 = vmatpush2.msra.mxu0 %v1792
  %1869 = vmatprep.subr.mxu0 0.0
  %1870 = vmatpush2.msra.mxu0 %v1791
  %1871 = vmatprep.mubr.f32.mxu0 %v1733
  %1872 = vmatmul.mubr.f32.gmra.mxu0 %v1732
  %v1873 = vpop.f32.mrf.mxu0
  %v1874 = vadd.f32 0.0, %v1873
  %v1875 = vpop.f32.mrf.mxu0
  %1876 = vmatprep.mubr.f32.mxu0 %v1735
  %1877 = vmatmul.mubr.f32.gmra.mxu0 %v1734
  %v1878 = vpop.f32.mrf.mxu0
  %v1879 = vadd.f32 0.0, %v1878
  %v1880 = vpop.f32.mrf.mxu0
  %1881 = vmatprep.mubr.f32.mxu0 %v1737
  %1882 = vmatmul.mubr.f32.gmra.mxu0 %v1736
  %v1883 = vpop.f32.mrf.mxu0
  %v1884 = vadd.f32 0.0, %v1883
  %v1885 = vpop.f32.mrf.mxu0
  %1886 = vmatprep.mubr.f32.mxu0 %v1773
  %1887 = vmatmul.mubr.f32.gmra.mxu0 %v1772
  %v1888 = vpop.f32.mrf.mxu0
  %v1889 = vadd.f32 0.0, %v1888
  %v1890 = vpop.f32.mrf.mxu0
  %1891 = vdwg.mxu0
  %vm1902 = vcmask 1040384
  %v1903 = vrot.slane %v1730, 7
  %v1904 = vrot.slane %v1732, 7
  %v1905 = vsel %vm1902, %v1903, %v1904
  %v1906 = vrot.slane %v1731, 7
  %v1907 = vrot.slane %v1733, 7
  %v1908 = vsel %vm1902, %v1906, %v1907
  %v1909 = vrot.slane %v1734, 7
  %v1910 = vsel %vm1902, %v1904, %v1909
  %v1911 = vrot.slane %v1735, 7
  %v1912 = vsel %vm1902, %v1907, %v1911
  %v1913 = vrot.slane %v1736, 7
  %v1914 = vsel %vm1902, %v1909, %v1913
  %v1915 = vrot.slane %v1737, 7
  %v1916 = vsel %vm1902, %v1911, %v1915
  %v1917 = vrot.slane %v1738, 7
  %v1918 = vsel %vm1902, %v1913, %v1917
  %v1919 = vrot.slane %v1739, 7
  %v1920 = vsel %vm1902, %v1915, %v1919
  %1929 = vmatprep.subr.mxu0 0.0
  %1930 = vmatpush1.msra.mxu0 %v1755
  %1931 = vmatprep.subr.mxu0 0.0
  %1932 = vmatpush1.msra.mxu0 %v1754
  %1933 = vmatprep.subr.mxu0 0.0
  %1934 = vmatpush1.msra.mxu0 %v1753
  %1935 = vmatprep.subr.mxu0 0.0
  %1936 = vmatpush1.msra.mxu0 %v1752
  %1937 = vmatprep.subr.mxu0 0.0
  %1938 = vmatpush1.msra.mxu0 %v1751
  %1939 = vmatprep.subr.mxu0 0.0
  %1940 = vmatpush1.msra.mxu0 %v1750
  %1941 = vmatprep.subr.mxu0 0.0
  %1942 = vmatpush1.msra.mxu0 %v1749
  %1943 = vmatprep.subr.mxu0 0.0
  %1944 = vmatpush1.msra.mxu0 %v1748
  %1945 = vmatprep.subr.mxu0 0.0
  %1946 = vmatpush1.msra.mxu0 %v1747
  %1947 = vmatprep.subr.mxu0 0.0
  %1948 = vmatpush1.msra.mxu0 %v1746
  %1949 = vmatprep.subr.mxu0 0.0
  %1950 = vmatpush1.msra.mxu0 %v1745
  %1951 = vmatprep.subr.mxu0 0.0
  %1952 = vmatpush1.msra.mxu0 %v1744
  %1953 = vmatprep.subr.mxu0 0.0
  %1954 = vmatpush1.msra.mxu0 %v1743
  %1955 = vmatprep.subr.mxu0 0.0
  %1956 = vmatpush1.msra.mxu0 %v1742
  %1957 = vmatprep.subr.mxu0 0.0
  %1958 = vmatpush1.msra.mxu0 %v1741
  %1959 = vmatprep.subr.mxu0 0.0
  %1960 = vmatpush1.msra.mxu0 %v1740
  %1961 = vmatprep.subr.mxu0 0.0
  %1962 = vmatpush2.msra.mxu0 %v1771
  %1963 = vmatprep.subr.mxu0 0.0
  %1964 = vmatpush2.msra.mxu0 %v1770
  %1965 = vmatprep.subr.mxu0 0.0
  %1966 = vmatpush2.msra.mxu0 %v1769
  %1967 = vmatprep.subr.mxu0 0.0
  %1968 = vmatpush2.msra.mxu0 %v1768
  %1969 = vmatprep.subr.mxu0 0.0
  %1970 = vmatpush2.msra.mxu0 %v1767
  %1971 = vmatprep.subr.mxu0 0.0
  %1972 = vmatpush2.msra.mxu0 %v1766
  %1973 = vmatprep.subr.mxu0 0.0
  %1974 = vmatpush2.msra.mxu0 %v1765
  %1975 = vmatprep.subr.mxu0 0.0
  %1976 = vmatpush2.msra.mxu0 %v1764
  %1977 = vmatprep.subr.mxu0 0.0
  %1978 = vmatpush2.msra.mxu0 %v1763
  %1979 = vmatprep.subr.mxu0 0.0
  %1980 = vmatpush2.msra.mxu0 %v1762
  %1981 = vmatprep.subr.mxu0 0.0
  %1982 = vmatpush2.msra.mxu0 %v1761
  %1983 = vmatprep.subr.mxu0 0.0
  %1984 = vmatpush2.msra.mxu0 %v1760
  %1985 = vmatprep.subr.mxu0 0.0
  %1986 = vmatpush2.msra.mxu0 %v1759
  %1987 = vmatprep.subr.mxu0 0.0
  %1988 = vmatpush2.msra.mxu0 %v1758
  %1989 = vmatprep.subr.mxu0 0.0
  %1990 = vmatpush2.msra.mxu0 %v1757
  %1991 = vmatprep.subr.mxu0 0.0
  %1992 = vmatpush2.msra.mxu0 %v1756
  %1993 = vmatprep.mubr.f32.mxu0 %v1908
  %1994 = vmatmul.mubr.f32.gmra.mxu0 %v1905
  %v1995 = vpop.f32.mrf.mxu0
  %v1996 = vadd.f32 %v1874, %v1995
  %v1997 = vpop.f32.mrf.mxu0
  %1998 = vmatprep.mubr.f32.mxu0 %v1912
  %1999 = vmatmul.mubr.f32.gmra.mxu0 %v1910
  %v2000 = vpop.f32.mrf.mxu0
  %v2001 = vadd.f32 %v1879, %v2000
  %v2002 = vpop.f32.mrf.mxu0
  %2003 = vmatprep.mubr.f32.mxu0 %v1916
  %2004 = vmatmul.mubr.f32.gmra.mxu0 %v1914
  %v2005 = vpop.f32.mrf.mxu0
  %v2006 = vadd.f32 %v1884, %v2005
  %v2007 = vpop.f32.mrf.mxu0
  %2008 = vmatprep.mubr.f32.mxu0 %v1920
  %2009 = vmatmul.mubr.f32.gmra.mxu0 %v1918
  %v2010 = vpop.f32.mrf.mxu0
  %v2011 = vadd.f32 %v1889, %v2010
  %v2012 = vpop.f32.mrf.mxu0
  %2013 = vdwg.mxu0
  %v2014 = vld [vmem:[#allocation2 + $0x10] sm:$0xfe]
  %v2015 = vld [vmem:[#allocation2 + $0x18] sm:$0xfe]
  %v2016 = vld [vmem:[#allocation2 + $0x20] sm:$0xff]
  %v2017 = vld [vmem:[#allocation2 + $0x28] sm:$0xff]
  %v2018 = vld [vmem:[#allocation2 + $0x30] sm:$0xff]
  %v2019 = vld [vmem:[#allocation2 + $0x38] sm:$0xff]
  %v2020 = vld [vmem:[#allocation2 + $0x40] sm:$0xff]
  %v2021 = vld [vmem:[#allocation2 + $0x48] sm:$0xff]
  %v2022 = vld [vmem:[#allocation2 + $0x50] sm:$0x1]
  %v2023 = vld [vmem:[#allocation2 + $0x58] sm:$0x1]
  %s2024 = scalar_lea.vmem %s2, 512
  %v2025 = vld [vmem:[%s2024] sm:$0xff]
  %v2026 = vld [vmem:[%s2024 + $0x8] sm:$0xff]
  %v2027 = vld [vmem:[%s2024 + $0x10] sm:$0xff]
  %v2028 = vld [vmem:[%s2024 + $0x18] sm:$0xff]
  %v2029 = vld [vmem:[%s2024 + $0x20] sm:$0xff]
  %v2030 = vld [vmem:[%s2024 + $0x28] sm:$0xff]
  %v2031 = vld [vmem:[%s2024 + $0x30] sm:$0xff]
  %v2032 = vld [vmem:[%s2024 + $0x38] sm:$0xff]
  %v2033 = vld [vmem:[%s2024 + $0x40] sm:$0xff]
  %v2034 = vld [vmem:[%s2024 + $0x48] sm:$0xff]
  %v2035 = vld [vmem:[%s2024 + $0x50] sm:$0xff]
  %v2036 = vld [vmem:[%s2024 + $0x58] sm:$0xff]
  %v2037 = vld [vmem:[%s2024 + $0x60] sm:$0xff]
  %v2038 = vld [vmem:[%s2024 + $0x68] sm:$0xff]
  %v2039 = vld [vmem:[%s2024 + $0x70] sm:$0xff]
  %v2040 = vld [vmem:[%s2024 + $0x78] sm:$0xff]
  %v2041 = vld [vmem:[%s2024 + $0x80] sm:$0xff]
  %v2042 = vld [vmem:[%s2024 + $0x88] sm:$0xff]
  %v2043 = vld [vmem:[%s2024 + $0x90] sm:$0xff]
  %v2044 = vld [vmem:[%s2024 + $0x98] sm:$0xff]
  %v2045 = vld [vmem:[%s2024 + $0xa0] sm:$0xff]
  %v2046 = vld [vmem:[%s2024 + $0xa8] sm:$0xff]
  %v2047 = vld [vmem:[%s2024 + $0xb0] sm:$0xff]
  %v2048 = vld [vmem:[%s2024 + $0xb8] sm:$0xff]
  %v2049 = vld [vmem:[%s2024 + $0xc0] sm:$0xff]
  %v2050 = vld [vmem:[%s2024 + $0xc8] sm:$0xff]
  %v2051 = vld [vmem:[%s2024 + $0xd0] sm:$0xff]
  %v2052 = vld [vmem:[%s2024 + $0xd8] sm:$0xff]
  %v2053 = vld [vmem:[%s2024 + $0xe0] sm:$0xff]
  %v2054 = vld [vmem:[%s2024 + $0xe8] sm:$0xff]
  %v2055 = vld [vmem:[%s2024 + $0xf0] sm:$0xff]
  %v2056 = vld [vmem:[%s2024 + $0xf8] sm:$0xff]
  %v2067 = vrot.slane %v2014, 1
  %v2068 = vrot.slane %v2016, 1
  %v2069 = vsel %vm504, %v2067, %v2068
  %v2070 = vrot.slane %v2015, 1
  %v2071 = vrot.slane %v2017, 1
  %v2072 = vsel %vm504, %v2070, %v2071
  %v2073 = vrot.slane %v2018, 1
  %v2074 = vsel %vm504, %v2068, %v2073
  %v2075 = vrot.slane %v2019, 1
  %v2076 = vsel %vm504, %v2071, %v2075
  %v2077 = vrot.slane %v2020, 1
  %v2078 = vsel %vm504, %v2073, %v2077
  %v2079 = vrot.slane %v2021, 1
  %v2080 = vsel %vm504, %v2075, %v2079
  %v2081 = vrot.slane %v2022, 1
  %v2082 = vsel %vm504, %v2077, %v2081
  %v2083 = vrot.slane %v2023, 1
  %v2084 = vsel %vm504, %v2079, %v2083
  %2093 = vmatprep.subr.mxu0 0.0
  %2094 = vmatpush1.msra.mxu0 %v2040
  %2095 = vmatprep.subr.mxu0 0.0
  %2096 = vmatpush1.msra.mxu0 %v2039
  %2097 = vmatprep.subr.mxu0 0.0
  %2098 = vmatpush1.msra.mxu0 %v2038
  %2099 = vmatprep.subr.mxu0 0.0
  %2100 = vmatpush1.msra.mxu0 %v2037
  %2101 = vmatprep.subr.mxu0 0.0
  %2102 = vmatpush1.msra.mxu0 %v2036
  %2103 = vmatprep.subr.mxu0 0.0
  %2104 = vmatpush1.msra.mxu0 %v2035
  %2105 = vmatprep.subr.mxu0 0.0
  %2106 = vmatpush1.msra.mxu0 %v2034
  %2107 = vmatprep.subr.mxu0 0.0
  %2108 = vmatpush1.msra.mxu0 %v2033
  %2109 = vmatprep.subr.mxu0 0.0
  %2110 = vmatpush1.msra.mxu0 %v2032
  %2111 = vmatprep.subr.mxu0 0.0
  %2112 = vmatpush1.msra.mxu0 %v2031
  %2113 = vmatprep.subr.mxu0 0.0
  %2114 = vmatpush1.msra.mxu0 %v2030
  %2115 = vmatprep.subr.mxu0 0.0
  %2116 = vmatpush1.msra.mxu0 %v2029
  %2117 = vmatprep.subr.mxu0 0.0
  %2118 = vmatpush1.msra.mxu0 %v2028
  %2119 = vmatprep.subr.mxu0 0.0
  %2120 = vmatpush1.msra.mxu0 %v2027
  %2121 = vmatprep.subr.mxu0 0.0
  %2122 = vmatpush1.msra.mxu0 %v2026
  %2123 = vmatprep.subr.mxu0 0.0
  %2124 = vmatpush1.msra.mxu0 %v2025
  %2125 = vmatprep.subr.mxu0 0.0
  %2126 = vmatpush2.msra.mxu0 %v2056
  %2127 = vmatprep.subr.mxu0 0.0
  %2128 = vmatpush2.msra.mxu0 %v2055
  %2129 = vmatprep.subr.mxu0 0.0
  %2130 = vmatpush2.msra.mxu0 %v2054
  %2131 = vmatprep.subr.mxu0 0.0
  %2132 = vmatpush2.msra.mxu0 %v2053
  %2133 = vmatprep.subr.mxu0 0.0
  %2134 = vmatpush2.msra.mxu0 %v2052
  %2135 = vmatprep.subr.mxu0 0.0
  %2136 = vmatpush2.msra.mxu0 %v2051
  %2137 = vmatprep.subr.mxu0 0.0
  %2138 = vmatpush2.msra.mxu0 %v2050
  %2139 = vmatprep.subr.mxu0 0.0
  %2140 = vmatpush2.msra.mxu0 %v2049
  %2141 = vmatprep.subr.mxu0 0.0
  %2142 = vmatpush2.msra.mxu0 %v2048
  %2143 = vmatprep.subr.mxu0 0.0
  %2144 = vmatpush2.msra.mxu0 %v2047
  %2145 = vmatprep.subr.mxu0 0.0
  %2146 = vmatpush2.msra.mxu0 %v2046
  %2147 = vmatprep.subr.mxu0 0.0
  %2148 = vmatpush2.msra.mxu0 %v2045
  %2149 = vmatprep.subr.mxu0 0.0
  %2150 = vmatpush2.msra.mxu0 %v2044
  %2151 = vmatprep.subr.mxu0 0.0
  %2152 = vmatpush2.msra.mxu0 %v2043
  %2153 = vmatprep.subr.mxu0 0.0
  %2154 = vmatpush2.msra.mxu0 %v2042
  %2155 = vmatprep.subr.mxu0 0.0
  %2156 = vmatpush2.msra.mxu0 %v2041
  %2157 = vmatprep.mubr.f32.mxu0 %v2072
  %2158 = vmatmul.mubr.f32.gmra.mxu0 %v2069
  %v2159 = vpop.f32.mrf.mxu0
  %v2160 = vadd.f32 0.0, %v2159
  %v2161 = vpop.f32.mrf.mxu0
  %2162 = vmatprep.mubr.f32.mxu0 %v2076
  %2163 = vmatmul.mubr.f32.gmra.mxu0 %v2074
  %v2164 = vpop.f32.mrf.mxu0
  %v2165 = vadd.f32 0.0, %v2164
  %v2166 = vpop.f32.mrf.mxu0
  %2167 = vmatprep.mubr.f32.mxu0 %v2080
  %2168 = vmatmul.mubr.f32.gmra.mxu0 %v2078
  %v2169 = vpop.f32.mrf.mxu0
  %v2170 = vadd.f32 0.0, %v2169
  %v2171 = vpop.f32.mrf.mxu0
  %2172 = vmatprep.mubr.f32.mxu0 %v2084
  %2173 = vmatmul.mubr.f32.gmra.mxu0 %v2082
  %v2174 = vpop.f32.mrf.mxu0
  %v2175 = vadd.f32 0.0, %v2174
  %v2176 = vpop.f32.mrf.mxu0
  %2177 = vdwg.mxu0
  %v2178 = vadd.f32 %v1996, %v2160
  %v2179 = vadd.f32 %v2001, %v2165
  %v2180 = vadd.f32 %v2006, %v2170
  %v2181 = vadd.f32 %v2011, %v2175
  %v2182 = vadd.f32 %v2178, %v2179
  %v2183 = vadd.f32 %v2182, %v2180
  %v2184 = vadd.f32 %v2183, %v2181
  %v2185 = vrot.slane %v2184, 4
  %v2186 = vadd.f32 %v2184, %v2185
  %v2187 = vrot.slane %v2186, 2
  %v2188 = vadd.f32 %v2186, %v2187
  %v2189 = vrot.slane %v2188, 1
  %v2190 = vadd.f32 %v2188, %v2189
  %v2191 = vmul.f32 %v2178, %v2178
  %v2192 = vmul.f32 %v2179, %v2179
  %v2193 = vmul.f32 %v2180, %v2180
  %v2194 = vmul.f32 %v2181, %v2181
  %v2195 = vadd.f32 %v2191, %v2192
  %v2196 = vadd.f32 %v2195, %v2193
  %v2197 = vadd.f32 %v2196, %v2194
  %v2198 = vrot.slane %v2197, 4
  %v2199 = vadd.f32 %v2197, %v2198
  %v2200 = vrot.slane %v2199, 2
  %v2201 = vadd.f32 %v2199, %v2200
  %v2202 = vrot.slane %v2201, 1
  %v2203 = vadd.f32 %v2201, %v2202
  %v2204 = vld [vmem:[%s6] sm:$0xff]
  %v2205 = vld [vmem:[%s6 + $0x8] sm:$0xff]
  %v2206 = vld [vmem:[%s6 + $0x10] sm:$0xff]
  %v2207 = vld [vmem:[%s6 + $0x18] sm:$0xff]
  %v2208 = vld [vmem:[%s6 + $0x20] sm:$0xff]
  %v2209 = vld [vmem:[%s6 + $0x28] sm:$0xff]
  %v2210 = vld [vmem:[%s6 + $0x30] sm:$0xff]
  %v2211 = vld [vmem:[%s6 + $0x38] sm:$0xff]
  %v2212 = vld [vmem:[%s6 + $0x40] sm:$0xff]
  %v2213 = vld [vmem:[%s6 + $0x48] sm:$0xff]
  %v2214 = vld [vmem:[%s6 + $0x50] sm:$0xff]
  %v2215 = vld [vmem:[%s6 + $0x58] sm:$0xff]
  %v2216 = vld [vmem:[%s6 + $0x60] sm:$0xff]
  %v2217 = vld [vmem:[%s6 + $0x68] sm:$0xff]
  %v2218 = vld [vmem:[%s6 + $0x70] sm:$0xff]
  %v2219 = vld [vmem:[%s6 + $0x78] sm:$0xff]
  %2220 = vmatprep.subr.mxu0 0.0
  %2221 = vmatpush1.msra.mxu0 %v2219
  %2222 = vmatprep.subr.mxu0 0.0
  %2223 = vmatpush1.msra.mxu0 %v2218
  %2224 = vmatprep.subr.mxu0 0.0
  %2225 = vmatpush1.msra.mxu0 %v2217
  %2226 = vmatprep.subr.mxu0 0.0
  %2227 = vmatpush1.msra.mxu0 %v2216
  %2228 = vmatprep.subr.mxu0 0.0
  %2229 = vmatpush1.msra.mxu0 %v2215
  %2230 = vmatprep.subr.mxu0 0.0
  %2231 = vmatpush1.msra.mxu0 %v2214
  %2232 = vmatprep.subr.mxu0 0.0
  %2233 = vmatpush1.msra.mxu0 %v2213
  %2234 = vmatprep.subr.mxu0 0.0
  %2235 = vmatpush1.msra.mxu0 %v2212
  %2236 = vmatprep.subr.mxu0 0.0
  %2237 = vmatpush1.msra.mxu0 %v2211
  %2238 = vmatprep.subr.mxu0 0.0
  %2239 = vmatpush1.msra.mxu0 %v2210
  %2240 = vmatprep.subr.mxu0 0.0
  %2241 = vmatpush1.msra.mxu0 %v2209
  %2242 = vmatprep.subr.mxu0 0.0
  %2243 = vmatpush1.msra.mxu0 %v2208
  %2244 = vmatprep.subr.mxu0 0.0
  %2245 = vmatpush1.msra.mxu0 %v2207
  %2246 = vmatprep.subr.mxu0 0.0
  %2247 = vmatpush1.msra.mxu0 %v2206
  %2248 = vmatprep.subr.mxu0 0.0
  %2249 = vmatpush1.msra.mxu0 %v2205
  %2250 = vmatprep.subr.mxu0 0.0
  %2251 = vmatpush1.msra.mxu0 %v2204
  %2252 = vmatprep.subr.mxu0 0.0
  %2253 = vmatpush2.msra.mxu0 0.0
  %2254 = vmatprep.subr.mxu0 0.0
  %2255 = vmatpush2.msra.mxu0 0.0
  %2256 = vmatprep.subr.mxu0 0.0
  %2257 = vmatpush2.msra.mxu0 0.0
  %2258 = vmatprep.subr.mxu0 0.0
  %2259 = vmatpush2.msra.mxu0 0.0
  %2260 = vmatprep.subr.mxu0 0.0
  %2261 = vmatpush2.msra.mxu0 0.0
  %2262 = vmatprep.subr.mxu0 0.0
  %2263 = vmatpush2.msra.mxu0 0.0
  %2264 = vmatprep.subr.mxu0 0.0
  %2265 = vmatpush2.msra.mxu0 0.0
  %2266 = vmatprep.subr.mxu0 0.0
  %2267 = vmatpush2.msra.mxu0 0.0
  %2268 = vmatprep.subr.mxu0 0.0
  %2269 = vmatpush2.msra.mxu0 0.0
  %2270 = vmatprep.subr.mxu0 0.0
  %2271 = vmatpush2.msra.mxu0 0.0
  %2272 = vmatprep.subr.mxu0 0.0
  %2273 = vmatpush2.msra.mxu0 0.0
  %2274 = vmatprep.subr.mxu0 0.0
  %2275 = vmatpush2.msra.mxu0 0.0
  %2276 = vmatprep.subr.mxu0 0.0
  %2277 = vmatpush2.msra.mxu0 0.0
  %2278 = vmatprep.subr.mxu0 0.0
  %2279 = vmatpush2.msra.mxu0 0.0
  %2280 = vmatprep.subr.mxu0 0.0
  %2281 = vmatpush2.msra.mxu0 0.0
  %2282 = vmatprep.subr.mxu0 0.0
  %2283 = vmatpush2.msra.mxu0 0.0
  %2284 = vmatprep.mubr.f32.mxu0 0.0
  %2285 = vmatmul.mubr.f32.gmra.mxu0 %v2190
  %v2286 = vpop.f32.mrf.mxu0
  %v2287 = vadd.f32 0.0, %v2286
  %v2288 = vpop.f32.mrf.mxu0
  %2289 = vdwg.mxu0
  %v2290 = vrcp.pop 512.0
  %v2291 = vmul.f32 %v2287, %v2290
  %2292 = vmatprep.subr.mxu0 0.0
  %2293 = vmatpush1.msra.mxu0 %v2219
  %2294 = vmatprep.subr.mxu0 0.0
  %2295 = vmatpush1.msra.mxu0 %v2218
  %2296 = vmatprep.subr.mxu0 0.0
  %2297 = vmatpush1.msra.mxu0 %v2217
  %2298 = vmatprep.subr.mxu0 0.0
  %2299 = vmatpush1.msra.mxu0 %v2216
  %2300 = vmatprep.subr.mxu0 0.0
  %2301 = vmatpush1.msra.mxu0 %v2215
  %2302 = vmatprep.subr.mxu0 0.0
  %2303 = vmatpush1.msra.mxu0 %v2214
  %2304 = vmatprep.subr.mxu0 0.0
  %2305 = vmatpush1.msra.mxu0 %v2213
  %2306 = vmatprep.subr.mxu0 0.0
  %2307 = vmatpush1.msra.mxu0 %v2212
  %2308 = vmatprep.subr.mxu0 0.0
  %2309 = vmatpush1.msra.mxu0 %v2211
  %2310 = vmatprep.subr.mxu0 0.0
  %2311 = vmatpush1.msra.mxu0 %v2210
  %2312 = vmatprep.subr.mxu0 0.0
  %2313 = vmatpush1.msra.mxu0 %v2209
  %2314 = vmatprep.subr.mxu0 0.0
  %2315 = vmatpush1.msra.mxu0 %v2208
  %2316 = vmatprep.subr.mxu0 0.0
  %2317 = vmatpush1.msra.mxu0 %v2207
  %2318 = vmatprep.subr.mxu0 0.0
  %2319 = vmatpush1.msra.mxu0 %v2206
  %2320 = vmatprep.subr.mxu0 0.0
  %2321 = vmatpush1.msra.mxu0 %v2205
  %2322 = vmatprep.subr.mxu0 0.0
  %2323 = vmatpush1.msra.mxu0 %v2204
  %2324 = vmatprep.subr.mxu0 0.0
  %2325 = vmatpush2.msra.mxu0 0.0
  %2326 = vmatprep.subr.mxu0 0.0
  %2327 = vmatpush2.msra.mxu0 0.0
  %2328 = vmatprep.subr.mxu0 0.0
  %2329 = vmatpush2.msra.mxu0 0.0
  %2330 = vmatprep.subr.mxu0 0.0
  %2331 = vmatpush2.msra.mxu0 0.0
  %2332 = vmatprep.subr.mxu0 0.0
  %2333 = vmatpush2.msra.mxu0 0.0
  %2334 = vmatprep.subr.mxu0 0.0
  %2335 = vmatpush2.msra.mxu0 0.0
  %2336 = vmatprep.subr.mxu0 0.0
  %2337 = vmatpush2.msra.mxu0 0.0
  %2338 = vmatprep.subr.mxu0 0.0
  %2339 = vmatpush2.msra.mxu0 0.0
  %2340 = vmatprep.subr.mxu0 0.0
  %2341 = vmatpush2.msra.mxu0 0.0
  %2342 = vmatprep.subr.mxu0 0.0
  %2343 = vmatpush2.msra.mxu0 0.0
  %2344 = vmatprep.subr.mxu0 0.0
  %2345 = vmatpush2.msra.mxu0 0.0
  %2346 = vmatprep.subr.mxu0 0.0
  %2347 = vmatpush2.msra.mxu0 0.0
  %2348 = vmatprep.subr.mxu0 0.0
  %2349 = vmatpush2.msra.mxu0 0.0
  %2350 = vmatprep.subr.mxu0 0.0
  %2351 = vmatpush2.msra.mxu0 0.0
  %2352 = vmatprep.subr.mxu0 0.0
  %2353 = vmatpush2.msra.mxu0 0.0
  %2354 = vmatprep.subr.mxu0 0.0
  %2355 = vmatpush2.msra.mxu0 0.0
  %2356 = vmatprep.mubr.f32.mxu0 0.0
  %2357 = vmatmul.mubr.f32.gmra.mxu0 %v2203
  %v2358 = vpop.f32.mrf.mxu0
  %v2359 = vadd.f32 0.0, %v2358
  %v2360 = vpop.f32.mrf.mxu0
  %2361 = vdwg.mxu0
  %v2362 = vmul.f32 %v2359, %v2290
  %v2363 = vmul.f32 %v2291, %v2291
  %v2364 = vsub.f32 %v2362, %v2363
  %v2365 = vld [vmem:[%s4] sm:$0x1]
  %v2366 = vadd.f32 %v2364, 1e-05
  %v2367 = vrsqrt.pop %v2366
  %v2368 = vmul.f32 %v2365, %v2367
  %v2369 = vld [vmem:[%s5] sm:$0x1]
  %v2370 = vmul.f32 %v2291, %v2368
  %v2371 = vsub.f32 %v2369, %v2370
  %v2372 = vld [vmem:[%s7] sm:$0xff]
  %vm2373 = vcmask 64512
  %v2375 = vsel %vm2373, %v2368, 0
  %2377 = vmatprep.subr.mxu0 0.0
  %2378 = vmatpush1.msra.mxu0 0.0
  %2379 = vmatprep.subr.mxu0 0.0
  %2380 = vmatpush1.msra.mxu0 0.0
  %2381 = vmatprep.subr.mxu0 0.0
  %2382 = vmatpush1.msra.mxu0 0.0
  %2383 = vmatprep.subr.mxu0 0.0
  %2384 = vmatpush1.msra.mxu0 0.0
  %2385 = vmatprep.subr.mxu0 0.0
  %2386 = vmatpush1.msra.mxu0 0.0
  %2387 = vmatprep.subr.mxu0 0.0
  %2388 = vmatpush1.msra.mxu0 0.0
  %2389 = vmatprep.subr.mxu0 0.0
  %2390 = vmatpush1.msra.mxu0 0.0
  %2391 = vmatprep.subr.mxu0 0.0
  %2392 = vmatpush1.msra.mxu0 0.0
  %2393 = vmatprep.subr.mxu0 0.0
  %2394 = vmatpush1.msra.mxu0 0.0
  %2395 = vmatprep.subr.mxu0 0.0
  %2396 = vmatpush1.msra.mxu0 0.0
  %2397 = vmatprep.subr.mxu0 0.0
  %2398 = vmatpush1.msra.mxu0 0.0
  %2399 = vmatprep.subr.mxu0 0.0
  %2400 = vmatpush1.msra.mxu0 0.0
  %2401 = vmatprep.subr.mxu0 0.0
  %2402 = vmatpush1.msra.mxu0 0.0
  %2403 = vmatprep.subr.mxu0 0.0
  %2404 = vmatpush1.msra.mxu0 0.0
  %2405 = vmatprep.subr.mxu0 0.0
  %2406 = vmatpush1.msra.mxu0 0.0
  %2407 = vmatprep.subr.mxu0 0.0
  %2408 = vmatpush1.msra.mxu0 %v2372
  %2409 = vmatprep.subr.mxu0 0.0
  %2410 = vmatpush2.msra.mxu0 0.0
  %2411 = vmatprep.subr.mxu0 0.0
  %2412 = vmatpush2.msra.mxu0 0.0
  %2413 = vmatprep.subr.mxu0 0.0
  %2414 = vmatpush2.msra.mxu0 0.0
  %2415 = vmatprep.subr.mxu0 0.0
  %2416 = vmatpush2.msra.mxu0 0.0
  %2417 = vmatprep.subr.mxu0 0.0
  %2418 = vmatpush2.msra.mxu0 0.0
  %2419 = vmatprep.subr.mxu0 0.0
  %2420 = vmatpush2.msra.mxu0 0.0
  %2421 = vmatprep.subr.mxu0 0.0
  %2422 = vmatpush2.msra.mxu0 0.0
  %2423 = vmatprep.subr.mxu0 0.0
  %2424 = vmatpush2.msra.mxu0 0.0
  %2425 = vmatprep.subr.mxu0 0.0
  %2426 = vmatpush2.msra.mxu0 0.0
  %2427 = vmatprep.subr.mxu0 0.0
  %2428 = vmatpush2.msra.mxu0 0.0
  %2429 = vmatprep.subr.mxu0 0.0
  %2430 = vmatpush2.msra.mxu0 0.0
  %2431 = vmatprep.subr.mxu0 0.0
  %2432 = vmatpush2.msra.mxu0 0.0
  %2433 = vmatprep.subr.mxu0 0.0
  %2434 = vmatpush2.msra.mxu0 0.0
  %2435 = vmatprep.subr.mxu0 0.0
  %2436 = vmatpush2.msra.mxu0 0.0
  %2437 = vmatprep.subr.mxu0 0.0
  %2438 = vmatpush2.msra.mxu0 0.0
  %2439 = vmatprep.subr.mxu0 0.0
  %2440 = vmatpush2.msra.mxu0 0.0
  %2441 = vmatprep.mubr.f32.mxu0 0.0
  %2442 = vmatmul.mubr.f32.gmra.mxu0 %v2375
  %v2443 = vpop.f32.mrf.mxu0
  %v2444 = vadd.f32 0.0, %v2443
  %v2445 = vpop.f32.mrf.mxu0
  %2446 = vdwg.mxu0
  %v2448 = vsel %vm2373, %v2371, 0
  %2450 = vmatprep.subr.mxu0 0.0
  %2451 = vmatpush1.msra.mxu0 0.0
  %2452 = vmatprep.subr.mxu0 0.0
  %2453 = vmatpush1.msra.mxu0 0.0
  %2454 = vmatprep.subr.mxu0 0.0
  %2455 = vmatpush1.msra.mxu0 0.0
  %2456 = vmatprep.subr.mxu0 0.0
  %2457 = vmatpush1.msra.mxu0 0.0
  %2458 = vmatprep.subr.mxu0 0.0
  %2459 = vmatpush1.msra.mxu0 0.0
  %2460 = vmatprep.subr.mxu0 0.0
  %2461 = vmatpush1.msra.mxu0 0.0
  %2462 = vmatprep.subr.mxu0 0.0
  %2463 = vmatpush1.msra.mxu0 0.0
  %2464 = vmatprep.subr.mxu0 0.0
  %2465 = vmatpush1.msra.mxu0 0.0
  %2466 = vmatprep.subr.mxu0 0.0
  %2467 = vmatpush1.msra.mxu0 0.0
  %2468 = vmatprep.subr.mxu0 0.0
  %2469 = vmatpush1.msra.mxu0 0.0
  %2470 = vmatprep.subr.mxu0 0.0
  %2471 = vmatpush1.msra.mxu0 0.0
  %2472 = vmatprep.subr.mxu0 0.0
  %2473 = vmatpush1.msra.mxu0 0.0
  %2474 = vmatprep.subr.mxu0 0.0
  %2475 = vmatpush1.msra.mxu0 0.0
  %2476 = vmatprep.subr.mxu0 0.0
  %2477 = vmatpush1.msra.mxu0 0.0
  %2478 = vmatprep.subr.mxu0 0.0
  %2479 = vmatpush1.msra.mxu0 0.0
  %2480 = vmatprep.subr.mxu0 0.0
  %2481 = vmatpush1.msra.mxu0 %v2372
  %2482 = vmatprep.subr.mxu0 0.0
  %2483 = vmatpush2.msra.mxu0 0.0
  %2484 = vmatprep.subr.mxu0 0.0
  %2485 = vmatpush2.msra.mxu0 0.0
  %2486 = vmatprep.subr.mxu0 0.0
  %2487 = vmatpush2.msra.mxu0 0.0
  %2488 = vmatprep.subr.mxu0 0.0
  %2489 = vmatpush2.msra.mxu0 0.0
  %2490 = vmatprep.subr.mxu0 0.0
  %2491 = vmatpush2.msra.mxu0 0.0
  %2492 = vmatprep.subr.mxu0 0.0
  %2493 = vmatpush2.msra.mxu0 0.0
  %2494 = vmatprep.subr.mxu0 0.0
  %2495 = vmatpush2.msra.mxu0 0.0
  %2496 = vmatprep.subr.mxu0 0.0
  %2497 = vmatpush2.msra.mxu0 0.0
  %2498 = vmatprep.subr.mxu0 0.0
  %2499 = vmatpush2.msra.mxu0 0.0
  %2500 = vmatprep.subr.mxu0 0.0
  %2501 = vmatpush2.msra.mxu0 0.0
  %2502 = vmatprep.subr.mxu0 0.0
  %2503 = vmatpush2.msra.mxu0 0.0
  %2504 = vmatprep.subr.mxu0 0.0
  %2505 = vmatpush2.msra.mxu0 0.0
  %2506 = vmatprep.subr.mxu0 0.0
  %2507 = vmatpush2.msra.mxu0 0.0
  %2508 = vmatprep.subr.mxu0 0.0
  %2509 = vmatpush2.msra.mxu0 0.0
  %2510 = vmatprep.subr.mxu0 0.0
  %2511 = vmatpush2.msra.mxu0 0.0
  %2512 = vmatprep.subr.mxu0 0.0
  %2513 = vmatpush2.msra.mxu0 0.0
  %2514 = vmatprep.mubr.f32.mxu0 0.0
  %2515 = vmatmul.mubr.f32.gmra.mxu0 %v2448
  %v2516 = vpop.f32.mrf.mxu0
  %v2517 = vadd.f32 0.0, %v2516
  %v2518 = vpop.f32.mrf.mxu0
  %2519 = vdwg.mxu0
  %v2520 = vlaneseq
  %v2521 = vshrl.u32 %v2520, 7
  %v2522 = vsub.s32 0, %v2521
  %v2523 = vrot.slane %v2444, %v2522
  %v2524 = vmul.f32 %v2178, %v2523
  %v2525 = vmul.f32 %v2179, %v2523
  %v2526 = vmul.f32 %v2180, %v2523
  %v2527 = vmul.f32 %v2181, %v2523
  %v2528 = vlaneseq
  %v2529 = vshrl.u32 %v2528, 7
  %v2530 = vsub.s32 0, %v2529
  %v2531 = vrot.slane %v2517, %v2530
  %v2532 = vadd.f32 %v2524, %v2531
  %v2533 = vadd.f32 %v2525, %v2531
  %v2534 = vadd.f32 %v2526, %v2531
  %v2535 = vadd.f32 %v2527, %v2531
  %vm2536 = vcmp.ge.f32.partialorder %v2532, 0.0
  %vm2537 = vcmp.ge.f32.partialorder %v2533, 0.0
  %vm2538 = vcmp.ge.f32.partialorder %v2534, 0.0
  %vm2539 = vcmp.ge.f32.partialorder %v2535, 0.0
  %v2540 = vmul.f32 %v2532, 0.2
  %v2541 = vmul.f32 %v2533, 0.2
  %v2542 = vmul.f32 %v2534, 0.2
  %v2543 = vmul.f32 %v2535, 0.2
  %v2544 = vsel %vm2536, %v2532, %v2540
  %v2545 = vsel %vm2537, %v2533, %v2541
  %v2546 = vsel %vm2538, %v2534, %v2542
  %v2547 = vsel %vm2539, %v2535, %v2543
  %2548 = vst [vmem:[#allocation3 + $0x7] sm:$0x1] 0.0
  %2549 = vst [vmem:[#allocation3 + $0x28] sm:$0x1] 0.0
  %2550 = vst [vmem:[#allocation3 + $0x8] sm:$0xff] %v2544
  %2551 = vst [vmem:[#allocation3 + $0x10] sm:$0xff] %v2545
  %2552 = vst [vmem:[#allocation3 + $0x18] sm:$0xff] %v2546
  %2553 = vst [vmem:[#allocation3 + $0x20] sm:$0xff] %v2547
  %v2554 = vld [vmem:[#allocation3 + $0x7] sm:$0xff]
  %v2555 = vld [vmem:[#allocation3 + $0xf] sm:$0xff]
  %v2556 = vld [vmem:[#allocation3 + $0x17] sm:$0xff]
  %v2557 = vld [vmem:[#allocation3 + $0x1f] sm:$0xff]
  %v2558 = vld [vmem:[%s3] sm:$0xff]
  %v2559 = vld [vmem:[%s3 + $0x8] sm:$0xff]
  %v2560 = vld [vmem:[%s3 + $0x10] sm:$0xff]
  %v2561 = vld [vmem:[%s3 + $0x18] sm:$0xff]
  %v2562 = vld [vmem:[%s3 + $0x20] sm:$0xff]
  %v2563 = vld [vmem:[%s3 + $0x28] sm:$0xff]
  %v2564 = vld [vmem:[%s3 + $0x30] sm:$0xff]
  %v2565 = vld [vmem:[%s3 + $0x38] sm:$0xff]
  %v2566 = vld [vmem:[%s3 + $0x40] sm:$0xff]
  %v2567 = vld [vmem:[%s3 + $0x48] sm:$0xff]
  %v2568 = vld [vmem:[%s3 + $0x50] sm:$0xff]
  %v2569 = vld [vmem:[%s3 + $0x58] sm:$0xff]
  %v2570 = vld [vmem:[%s3 + $0x60] sm:$0xff]
  %v2571 = vld [vmem:[%s3 + $0x68] sm:$0xff]
  %v2572 = vld [vmem:[%s3 + $0x70] sm:$0xff]
  %v2573 = vld [vmem:[%s3 + $0x78] sm:$0xff]
  %v2574 = vld [vmem:[#allocation3 + $0x8] sm:$0xff]
  %v2575 = vld [vmem:[#allocation3 + $0x10] sm:$0xff]
  %v2576 = vld [vmem:[#allocation3 + $0x18] sm:$0xff]
  %v2577 = vld [vmem:[#allocation3 + $0x20] sm:$0xff]
  %s2578 = scalar_lea.vmem %s3, 128
  %v2579 = vld [vmem:[%s2578] sm:$0xff]
  %v2580 = vld [vmem:[%s2578 + $0x8] sm:$0xff]
  %v2581 = vld [vmem:[%s2578 + $0x10] sm:$0xff]
  %v2582 = vld [vmem:[%s2578 + $0x18] sm:$0xff]
  %v2583 = vld [vmem:[%s2578 + $0x20] sm:$0xff]
  %v2584 = vld [vmem:[%s2578 + $0x28] sm:$0xff]
  %v2585 = vld [vmem:[%s2578 + $0x30] sm:$0xff]
  %v2586 = vld [vmem:[%s2578 + $0x38] sm:$0xff]
  %v2587 = vld [vmem:[%s2578 + $0x40] sm:$0xff]
  %v2588 = vld [vmem:[%s2578 + $0x48] sm:$0xff]
  %v2589 = vld [vmem:[%s2578 + $0x50] sm:$0xff]
  %v2590 = vld [vmem:[%s2578 + $0x58] sm:$0xff]
  %v2591 = vld [vmem:[%s2578 + $0x60] sm:$0xff]
  %v2592 = vld [vmem:[%s2578 + $0x68] sm:$0xff]
  %v2593 = vld [vmem:[%s2578 + $0x70] sm:$0xff]
  %v2594 = vld [vmem:[%s2578 + $0x78] sm:$0xff]
  %2595 = vmatprep.subr.mxu0 0.0
  %2596 = vmatpush1.msra.mxu0 %v2594
  %2597 = vmatprep.subr.mxu0 0.0
  %2598 = vmatpush1.msra.mxu0 %v2593
  %2599 = vmatprep.subr.mxu0 0.0
  %2600 = vmatpush1.msra.mxu0 %v2592
  %2601 = vmatprep.subr.mxu0 0.0
  %2602 = vmatpush1.msra.mxu0 %v2591
  %2603 = vmatprep.subr.mxu0 0.0
  %2604 = vmatpush1.msra.mxu0 %v2590
  %2605 = vmatprep.subr.mxu0 0.0
  %2606 = vmatpush1.msra.mxu0 %v2589
  %2607 = vmatprep.subr.mxu0 0.0
  %2608 = vmatpush1.msra.mxu0 %v2588
  %2609 = vmatprep.subr.mxu0 0.0
  %2610 = vmatpush1.msra.mxu0 %v2587
  %2611 = vmatprep.subr.mxu0 0.0
  %2612 = vmatpush1.msra.mxu0 %v2586
  %2613 = vmatprep.subr.mxu0 0.0
  %2614 = vmatpush1.msra.mxu0 %v2585
  %2615 = vmatprep.subr.mxu0 0.0
  %2616 = vmatpush1.msra.mxu0 %v2584
  %2617 = vmatprep.subr.mxu0 0.0
  %2618 = vmatpush1.msra.mxu0 %v2583
  %2619 = vmatprep.subr.mxu0 0.0
  %2620 = vmatpush1.msra.mxu0 %v2582
  %2621 = vmatprep.subr.mxu0 0.0
  %2622 = vmatpush1.msra.mxu0 %v2581
  %2623 = vmatprep.subr.mxu0 0.0
  %2624 = vmatpush1.msra.mxu0 %v2580
  %2625 = vmatprep.subr.mxu0 0.0
  %2626 = vmatpush1.msra.mxu0 %v2579
  %2627 = vmatprep.subr.mxu0 0.0
  %2628 = vmatpush2.msra.mxu0 0.0
  %2629 = vmatprep.subr.mxu0 0.0
  %2630 = vmatpush2.msra.mxu0 0.0
  %2631 = vmatprep.subr.mxu0 0.0
  %2632 = vmatpush2.msra.mxu0 0.0
  %2633 = vmatprep.subr.mxu0 0.0
  %2634 = vmatpush2.msra.mxu0 0.0
  %2635 = vmatprep.subr.mxu0 0.0
  %2636 = vmatpush2.msra.mxu0 0.0
  %2637 = vmatprep.subr.mxu0 0.0
  %2638 = vmatpush2.msra.mxu0 0.0
  %2639 = vmatprep.subr.mxu0 0.0
  %2640 = vmatpush2.msra.mxu0 0.0
  %2641 = vmatprep.subr.mxu0 0.0
  %2642 = vmatpush2.msra.mxu0 0.0
  %2643 = vmatprep.subr.mxu0 0.0
  %2644 = vmatpush2.msra.mxu0 0.0
  %2645 = vmatprep.subr.mxu0 0.0
  %2646 = vmatpush2.msra.mxu0 0.0
  %2647 = vmatprep.subr.mxu0 0.0
  %2648 = vmatpush2.msra.mxu0 0.0
  %2649 = vmatprep.subr.mxu0 0.0
  %2650 = vmatpush2.msra.mxu0 0.0
  %2651 = vmatprep.subr.mxu0 0.0
  %2652 = vmatpush2.msra.mxu0 0.0
  %2653 = vmatprep.subr.mxu0 0.0
  %2654 = vmatpush2.msra.mxu0 0.0
  %2655 = vmatprep.subr.mxu0 0.0
  %2656 = vmatpush2.msra.mxu0 0.0
  %2657 = vmatprep.subr.mxu0 0.0
  %2658 = vmatpush2.msra.mxu0 0.0
  %2659 = vmatprep.mubr.f32.mxu0 0.0
  %2660 = vmatmul.mubr.f32.gmra.mxu0 %v2574
  %v2661 = vpop.f32.mrf.mxu0
  %v2662 = vadd.f32 0.0, %v2661
  %v2663 = vpop.f32.mrf.mxu0
  %2664 = vmatprep.mubr.f32.mxu0 0.0
  %2665 = vmatmul.mubr.f32.gmra.mxu0 %v2575
  %v2666 = vpop.f32.mrf.mxu0
  %v2667 = vadd.f32 0.0, %v2666
  %v2668 = vpop.f32.mrf.mxu0
  %2669 = vmatprep.mubr.f32.mxu0 0.0
  %2670 = vmatmul.mubr.f32.gmra.mxu0 %v2576
  %v2671 = vpop.f32.mrf.mxu0
  %v2672 = vadd.f32 0.0, %v2671
  %v2673 = vpop.f32.mrf.mxu0
  %2674 = vmatprep.mubr.f32.mxu0 0.0
  %2675 = vmatmul.mubr.f32.gmra.mxu0 %v2577
  %v2676 = vpop.f32.mrf.mxu0
  %v2677 = vadd.f32 0.0, %v2676
  %v2678 = vpop.f32.mrf.mxu0
  %2679 = vdwg.mxu0
  %2680 = vmatprep.subr.mxu0 0.0
  %2681 = vmatpush1.msra.mxu0 %v2573
  %2682 = vmatprep.subr.mxu0 0.0
  %2683 = vmatpush1.msra.mxu0 %v2572
  %2684 = vmatprep.subr.mxu0 0.0
  %2685 = vmatpush1.msra.mxu0 %v2571
  %2686 = vmatprep.subr.mxu0 0.0
  %2687 = vmatpush1.msra.mxu0 %v2570
  %2688 = vmatprep.subr.mxu0 0.0
  %2689 = vmatpush1.msra.mxu0 %v2569
  %2690 = vmatprep.subr.mxu0 0.0
  %2691 = vmatpush1.msra.mxu0 %v2568
  %2692 = vmatprep.subr.mxu0 0.0
  %2693 = vmatpush1.msra.mxu0 %v2567
  %2694 = vmatprep.subr.mxu0 0.0
  %2695 = vmatpush1.msra.mxu0 %v2566
  %2696 = vmatprep.subr.mxu0 0.0
  %2697 = vmatpush1.msra.mxu0 %v2565
  %2698 = vmatprep.subr.mxu0 0.0
  %2699 = vmatpush1.msra.mxu0 %v2564
  %2700 = vmatprep.subr.mxu0 0.0
  %2701 = vmatpush1.msra.mxu0 %v2563
  %2702 = vmatprep.subr.mxu0 0.0
  %2703 = vmatpush1.msra.mxu0 %v2562
  %2704 = vmatprep.subr.mxu0 0.0
  %2705 = vmatpush1.msra.mxu0 %v2561
  %2706 = vmatprep.subr.mxu0 0.0
  %2707 = vmatpush1.msra.mxu0 %v2560
  %2708 = vmatprep.subr.mxu0 0.0
  %2709 = vmatpush1.msra.mxu0 %v2559
  %2710 = vmatprep.subr.mxu0 0.0
  %2711 = vmatpush1.msra.mxu0 %v2558
  %2712 = vmatprep.subr.mxu0 0.0
  %2713 = vmatpush2.msra.mxu0 0.0
  %2714 = vmatprep.subr.mxu0 0.0
  %2715 = vmatpush2.msra.mxu0 0.0
  %2716 = vmatprep.subr.mxu0 0.0
  %2717 = vmatpush2.msra.mxu0 0.0
  %2718 = vmatprep.subr.mxu0 0.0
  %2719 = vmatpush2.msra.mxu0 0.0
  %2720 = vmatprep.subr.mxu0 0.0
  %2721 = vmatpush2.msra.mxu0 0.0
  %2722 = vmatprep.subr.mxu0 0.0
  %2723 = vmatpush2.msra.mxu0 0.0
  %2724 = vmatprep.subr.mxu0 0.0
  %2725 = vmatpush2.msra.mxu0 0.0
  %2726 = vmatprep.subr.mxu0 0.0
  %2727 = vmatpush2.msra.mxu0 0.0
  %2728 = vmatprep.subr.mxu0 0.0
  %2729 = vmatpush2.msra.mxu0 0.0
  %2730 = vmatprep.subr.mxu0 0.0
  %2731 = vmatpush2.msra.mxu0 0.0
  %2732 = vmatprep.subr.mxu0 0.0
  %2733 = vmatpush2.msra.mxu0 0.0
  %2734 = vmatprep.subr.mxu0 0.0
  %2735 = vmatpush2.msra.mxu0 0.0
  %2736 = vmatprep.subr.mxu0 0.0
  %2737 = vmatpush2.msra.mxu0 0.0
  %2738 = vmatprep.subr.mxu0 0.0
  %2739 = vmatpush2.msra.mxu0 0.0
  %2740 = vmatprep.subr.mxu0 0.0
  %2741 = vmatpush2.msra.mxu0 0.0
  %2742 = vmatprep.subr.mxu0 0.0
  %2743 = vmatpush2.msra.mxu0 0.0
  %2744 = vmatprep.mubr.f32.mxu0 0.0
  %2745 = vmatmul.mubr.f32.gmra.mxu0 %v2554
  %v2746 = vpop.f32.mrf.mxu0
  %v2747 = vadd.f32 %v2662, %v2746
  %v2748 = vpop.f32.mrf.mxu0
  %2749 = vmatprep.mubr.f32.mxu0 0.0
  %2750 = vmatmul.mubr.f32.gmra.mxu0 %v2555
  %v2751 = vpop.f32.mrf.mxu0
  %v2752 = vadd.f32 %v2667, %v2751
  %v2753 = vpop.f32.mrf.mxu0
  %2754 = vmatprep.mubr.f32.mxu0 0.0
  %2755 = vmatmul.mubr.f32.gmra.mxu0 %v2556
  %v2756 = vpop.f32.mrf.mxu0
  %v2757 = vadd.f32 %v2672, %v2756
  %v2758 = vpop.f32.mrf.mxu0
  %2759 = vmatprep.mubr.f32.mxu0 0.0
  %2760 = vmatmul.mubr.f32.gmra.mxu0 %v2557
  %v2761 = vpop.f32.mrf.mxu0
  %v2762 = vadd.f32 %v2677, %v2761
  %v2763 = vpop.f32.mrf.mxu0
  %2764 = vdwg.mxu0
  %v2765 = vld [vmem:[#allocation3 + $0x9] sm:$0xff]
  %v2766 = vld [vmem:[#allocation3 + $0x11] sm:$0xff]
  %v2767 = vld [vmem:[#allocation3 + $0x19] sm:$0xff]
  %v2768 = vld [vmem:[#allocation3 + $0x21] sm:$0xff]
  %s2769 = scalar_lea.vmem %s3, 256
  %v2770 = vld [vmem:[%s2769] sm:$0xff]
  %v2771 = vld [vmem:[%s2769 + $0x8] sm:$0xff]
  %v2772 = vld [vmem:[%s2769 + $0x10] sm:$0xff]
  %v2773 = vld [vmem:[%s2769 + $0x18] sm:$0xff]
  %v2774 = vld [vmem:[%s2769 + $0x20] sm:$0xff]
  %v2775 = vld [vmem:[%s2769 + $0x28] sm:$0xff]
  %v2776 = vld [vmem:[%s2769 + $0x30] sm:$0xff]
  %v2777 = vld [vmem:[%s2769 + $0x38] sm:$0xff]
  %v2778 = vld [vmem:[%s2769 + $0x40] sm:$0xff]
  %v2779 = vld [vmem:[%s2769 + $0x48] sm:$0xff]
  %v2780 = vld [vmem:[%s2769 + $0x50] sm:$0xff]
  %v2781 = vld [vmem:[%s2769 + $0x58] sm:$0xff]
  %v2782 = vld [vmem:[%s2769 + $0x60] sm:$0xff]
  %v2783 = vld [vmem:[%s2769 + $0x68] sm:$0xff]
  %v2784 = vld [vmem:[%s2769 + $0x70] sm:$0xff]
  %v2785 = vld [vmem:[%s2769 + $0x78] sm:$0xff]
  %2786 = vmatprep.subr.mxu0 0.0
  %2787 = vmatpush1.msra.mxu0 %v2785
  %2788 = vmatprep.subr.mxu0 0.0
  %2789 = vmatpush1.msra.mxu0 %v2784
  %2790 = vmatprep.subr.mxu0 0.0
  %2791 = vmatpush1.msra.mxu0 %v2783
  %2792 = vmatprep.subr.mxu0 0.0
  %2793 = vmatpush1.msra.mxu0 %v2782
  %2794 = vmatprep.subr.mxu0 0.0
  %2795 = vmatpush1.msra.mxu0 %v2781
  %2796 = vmatprep.subr.mxu0 0.0
  %2797 = vmatpush1.msra.mxu0 %v2780
  %2798 = vmatprep.subr.mxu0 0.0
  %2799 = vmatpush1.msra.mxu0 %v2779
  %2800 = vmatprep.subr.mxu0 0.0
  %2801 = vmatpush1.msra.mxu0 %v2778
  %2802 = vmatprep.subr.mxu0 0.0
  %2803 = vmatpush1.msra.mxu0 %v2777
  %2804 = vmatprep.subr.mxu0 0.0
  %2805 = vmatpush1.msra.mxu0 %v2776
  %2806 = vmatprep.subr.mxu0 0.0
  %2807 = vmatpush1.msra.mxu0 %v2775
  %2808 = vmatprep.subr.mxu0 0.0
  %2809 = vmatpush1.msra.mxu0 %v2774
  %2810 = vmatprep.subr.mxu0 0.0
  %2811 = vmatpush1.msra.mxu0 %v2773
  %2812 = vmatprep.subr.mxu0 0.0
  %2813 = vmatpush1.msra.mxu0 %v2772
  %2814 = vmatprep.subr.mxu0 0.0
  %2815 = vmatpush1.msra.mxu0 %v2771
  %2816 = vmatprep.subr.mxu0 0.0
  %2817 = vmatpush1.msra.mxu0 %v2770
  %2818 = vmatprep.subr.mxu0 0.0
  %2819 = vmatpush2.msra.mxu0 0.0
  %2820 = vmatprep.subr.mxu0 0.0
  %2821 = vmatpush2.msra.mxu0 0.0
  %2822 = vmatprep.subr.mxu0 0.0
  %2823 = vmatpush2.msra.mxu0 0.0
  %2824 = vmatprep.subr.mxu0 0.0
  %2825 = vmatpush2.msra.mxu0 0.0
  %2826 = vmatprep.subr.mxu0 0.0
  %2827 = vmatpush2.msra.mxu0 0.0
  %2828 = vmatprep.subr.mxu0 0.0
  %2829 = vmatpush2.msra.mxu0 0.0
  %2830 = vmatprep.subr.mxu0 0.0
  %2831 = vmatpush2.msra.mxu0 0.0
  %2832 = vmatprep.subr.mxu0 0.0
  %2833 = vmatpush2.msra.mxu0 0.0
  %2834 = vmatprep.subr.mxu0 0.0
  %2835 = vmatpush2.msra.mxu0 0.0
  %2836 = vmatprep.subr.mxu0 0.0
  %2837 = vmatpush2.msra.mxu0 0.0
  %2838 = vmatprep.subr.mxu0 0.0
  %2839 = vmatpush2.msra.mxu0 0.0
  %2840 = vmatprep.subr.mxu0 0.0
  %2841 = vmatpush2.msra.mxu0 0.0
  %2842 = vmatprep.subr.mxu0 0.0
  %2843 = vmatpush2.msra.mxu0 0.0
  %2844 = vmatprep.subr.mxu0 0.0
  %2845 = vmatpush2.msra.mxu0 0.0
  %2846 = vmatprep.subr.mxu0 0.0
  %2847 = vmatpush2.msra.mxu0 0.0
  %2848 = vmatprep.subr.mxu0 0.0
  %2849 = vmatpush2.msra.mxu0 0.0
  %2850 = vmatprep.mubr.f32.mxu0 0.0
  %2851 = vmatmul.mubr.f32.gmra.mxu0 %v2765
  %v2852 = vpop.f32.mrf.mxu0
  %v2853 = vadd.f32 0.0, %v2852
  %v2854 = vpop.f32.mrf.mxu0
  %2855 = vmatprep.mubr.f32.mxu0 0.0
  %2856 = vmatmul.mubr.f32.gmra.mxu0 %v2766
  %v2857 = vpop.f32.mrf.mxu0
  %v2858 = vadd.f32 0.0, %v2857
  %v2859 = vpop.f32.mrf.mxu0
  %2860 = vmatprep.mubr.f32.mxu0 0.0
  %2861 = vmatmul.mubr.f32.gmra.mxu0 %v2767
  %v2862 = vpop.f32.mrf.mxu0
  %v2863 = vadd.f32 0.0, %v2862
  %v2864 = vpop.f32.mrf.mxu0
  %2865 = vmatprep.mubr.f32.mxu0 0.0
  %2866 = vmatmul.mubr.f32.gmra.mxu0 %v2768
  %v2867 = vpop.f32.mrf.mxu0
  %v2868 = vadd.f32 0.0, %v2867
  %v2869 = vpop.f32.mrf.mxu0
  %2870 = vdwg.mxu0
  %v2871 = vadd.f32 %v2747, %v2853
  %v2872 = vadd.f32 %v2752, %v2858
  %v2873 = vadd.f32 %v2757, %v2863
  %v2874 = vadd.f32 %v2762, %v2868
  %vm2875 = vcmask 523264
  %v2876 = vsel %vm2875, %v2871, 0.0
  %v2877 = vsel %vm2875, %v2872, 0.0
  %v2878 = vadd.f32 %v2876, %v2877
  %v2879 = vsel %vm2875, %v2873, 0.0
  %v2880 = vadd.f32 %v2878, %v2879
  %v2881 = vsel %vm2875, %v2874, 0.0
  %v2882 = vadd.f32 %v2880, %v2881
  %v2883 = vrot.slane %v2882, 4
  %v2884 = vadd.f32 %v2882, %v2883
  %v2885 = vrot.slane %v2884, 2
  %v2886 = vadd.f32 %v2884, %v2885
  %v2887 = vrot.slane %v2886, 1
  %v2888 = vadd.f32 %v2886, %v2887
  %v2889 = vmul.f32 %v2871, %v2871
  %v2890 = vmul.f32 %v2872, %v2872
  %v2891 = vmul.f32 %v2873, %v2873
  %v2892 = vmul.f32 %v2874, %v2874
  %v2893 = vsel %vm2875, %v2889, 0.0
  %v2894 = vsel %vm2875, %v2890, 0.0
  %v2895 = vadd.f32 %v2893, %v2894
  %v2896 = vsel %vm2875, %v2891, 0.0
  %v2897 = vadd.f32 %v2895, %v2896
  %v2898 = vsel %vm2875, %v2892, 0.0
  %v2899 = vadd.f32 %v2897, %v2898
  %v2900 = vrot.slane %v2899, 4
  %v2901 = vadd.f32 %v2899, %v2900
  %v2902 = vrot.slane %v2901, 2
  %v2903 = vadd.f32 %v2901, %v2902
  %v2904 = vrot.slane %v2903, 1
  %v2905 = vadd.f32 %v2903, %v2904
  %v2906 = vld [vmem:[%s10] sm:$0xff]
  %v2907 = vld [vmem:[%s10 + $0x8] sm:$0xff]
  %v2908 = vld [vmem:[%s10 + $0x10] sm:$0xff]
  %v2909 = vld [vmem:[%s10 + $0x18] sm:$0xff]
  %v2910 = vld [vmem:[%s10 + $0x20] sm:$0xff]
  %v2911 = vld [vmem:[%s10 + $0x28] sm:$0xff]
  %v2912 = vld [vmem:[%s10 + $0x30] sm:$0xff]
  %v2913 = vld [vmem:[%s10 + $0x38] sm:$0xff]
  %v2915 = vsel %vm2875, %v2888, 0
  %2917 = vmatprep.subr.mxu0 0.0
  %2918 = vmatpush1.msra.mxu0 0.0
  %2919 = vmatprep.subr.mxu0 0.0
  %2920 = vmatpush1.msra.mxu0 0.0
  %2921 = vmatprep.subr.mxu0 0.0
  %2922 = vmatpush1.msra.mxu0 0.0
  %2923 = vmatprep.subr.mxu0 0.0
  %2924 = vmatpush1.msra.mxu0 0.0
  %2925 = vmatprep.subr.mxu0 0.0
  %2926 = vmatpush1.msra.mxu0 0.0
  %2927 = vmatprep.subr.mxu0 0.0
  %2928 = vmatpush1.msra.mxu0 0.0
  %2929 = vmatprep.subr.mxu0 0.0
  %2930 = vmatpush1.msra.mxu0 0.0
  %2931 = vmatprep.subr.mxu0 0.0
  %2932 = vmatpush1.msra.mxu0 0.0
  %2933 = vmatprep.subr.mxu0 0.0
  %2934 = vmatpush1.msra.mxu0 %v2913
  %2935 = vmatprep.subr.mxu0 0.0
  %2936 = vmatpush1.msra.mxu0 %v2912
  %2937 = vmatprep.subr.mxu0 0.0
  %2938 = vmatpush1.msra.mxu0 %v2911
  %2939 = vmatprep.subr.mxu0 0.0
  %2940 = vmatpush1.msra.mxu0 %v2910
  %2941 = vmatprep.subr.mxu0 0.0
  %2942 = vmatpush1.msra.mxu0 %v2909
  %2943 = vmatprep.subr.mxu0 0.0
  %2944 = vmatpush1.msra.mxu0 %v2908
  %2945 = vmatprep.subr.mxu0 0.0
  %2946 = vmatpush1.msra.mxu0 %v2907
  %2947 = vmatprep.subr.mxu0 0.0
  %2948 = vmatpush1.msra.mxu0 %v2906
  %2949 = vmatprep.subr.mxu0 0.0
  %2950 = vmatpush2.msra.mxu0 0.0
  %2951 = vmatprep.subr.mxu0 0.0
  %2952 = vmatpush2.msra.mxu0 0.0
  %2953 = vmatprep.subr.mxu0 0.0
  %2954 = vmatpush2.msra.mxu0 0.0
  %2955 = vmatprep.subr.mxu0 0.0
  %2956 = vmatpush2.msra.mxu0 0.0
  %2957 = vmatprep.subr.mxu0 0.0
  %2958 = vmatpush2.msra.mxu0 0.0
  %2959 = vmatprep.subr.mxu0 0.0
  %2960 = vmatpush2.msra.mxu0 0.0
  %2961 = vmatprep.subr.mxu0 0.0
  %2962 = vmatpush2.msra.mxu0 0.0
  %2963 = vmatprep.subr.mxu0 0.0
  %2964 = vmatpush2.msra.mxu0 0.0
  %2965 = vmatprep.subr.mxu0 0.0
  %2966 = vmatpush2.msra.mxu0 0.0
  %2967 = vmatprep.subr.mxu0 0.0
  %2968 = vmatpush2.msra.mxu0 0.0
  %2969 = vmatprep.subr.mxu0 0.0
  %2970 = vmatpush2.msra.mxu0 0.0
  %2971 = vmatprep.subr.mxu0 0.0
  %2972 = vmatpush2.msra.mxu0 0.0
  %2973 = vmatprep.subr.mxu0 0.0
  %2974 = vmatpush2.msra.mxu0 0.0
  %2975 = vmatprep.subr.mxu0 0.0
  %2976 = vmatpush2.msra.mxu0 0.0
  %2977 = vmatprep.subr.mxu0 0.0
  %2978 = vmatpush2.msra.mxu0 0.0
  %2979 = vmatprep.subr.mxu0 0.0
  %2980 = vmatpush2.msra.mxu0 0.0
  %2981 = vmatprep.mubr.f32.mxu0 0.0
  %2982 = vmatmul.mubr.f32.gmra.mxu0 %v2915
  %v2983 = vpop.f32.mrf.mxu0
  %v2984 = vadd.f32 0.0, %v2983
  %v2985 = vpop.f32.mrf.mxu0
  %2986 = vdwg.mxu0
  %v2987 = vrcp.pop 128.0
  %v2988 = vmul.f32 %v2984, %v2987
  %v2990 = vsel %vm2875, %v2905, 0
  %2992 = vmatprep.subr.mxu0 0.0
  %2993 = vmatpush1.msra.mxu0 0.0
  %2994 = vmatprep.subr.mxu0 0.0
  %2995 = vmatpush1.msra.mxu0 0.0
  %2996 = vmatprep.subr.mxu0 0.0
  %2997 = vmatpush1.msra.mxu0 0.0
  %2998 = vmatprep.subr.mxu0 0.0
  %2999 = vmatpush1.msra.mxu0 0.0
  %3000 = vmatprep.subr.mxu0 0.0
  %3001 = vmatpush1.msra.mxu0 0.0
  %3002 = vmatprep.subr.mxu0 0.0
  %3003 = vmatpush1.msra.mxu0 0.0
  %3004 = vmatprep.subr.mxu0 0.0
  %3005 = vmatpush1.msra.mxu0 0.0
  %3006 = vmatprep.subr.mxu0 0.0
  %3007 = vmatpush1.msra.mxu0 0.0
  %3008 = vmatprep.subr.mxu0 0.0
  %3009 = vmatpush1.msra.mxu0 %v2913
  %3010 = vmatprep.subr.mxu0 0.0
  %3011 = vmatpush1.msra.mxu0 %v2912
  %3012 = vmatprep.subr.mxu0 0.0
  %3013 = vmatpush1.msra.mxu0 %v2911
  %3014 = vmatprep.subr.mxu0 0.0
  %3015 = vmatpush1.msra.mxu0 %v2910
  %3016 = vmatprep.subr.mxu0 0.0
  %3017 = vmatpush1.msra.mxu0 %v2909
  %3018 = vmatprep.subr.mxu0 0.0
  %3019 = vmatpush1.msra.mxu0 %v2908
  %3020 = vmatprep.subr.mxu0 0.0
  %3021 = vmatpush1.msra.mxu0 %v2907
  %3022 = vmatprep.subr.mxu0 0.0
  %3023 = vmatpush1.msra.mxu0 %v2906
  %3024 = vmatprep.subr.mxu0 0.0
  %3025 = vmatpush2.msra.mxu0 0.0
  %3026 = vmatprep.subr.mxu0 0.0
  %3027 = vmatpush2.msra.mxu0 0.0
  %3028 = vmatprep.subr.mxu0 0.0
  %3029 = vmatpush2.msra.mxu0 0.0
  %3030 = vmatprep.subr.mxu0 0.0
  %3031 = vmatpush2.msra.mxu0 0.0
  %3032 = vmatprep.subr.mxu0 0.0
  %3033 = vmatpush2.msra.mxu0 0.0
  %3034 = vmatprep.subr.mxu0 0.0
  %3035 = vmatpush2.msra.mxu0 0.0
  %3036 = vmatprep.subr.mxu0 0.0
  %3037 = vmatpush2.msra.mxu0 0.0
  %3038 = vmatprep.subr.mxu0 0.0
  %3039 = vmatpush2.msra.mxu0 0.0
  %3040 = vmatprep.subr.mxu0 0.0
  %3041 = vmatpush2.msra.mxu0 0.0
  %3042 = vmatprep.subr.mxu0 0.0
  %3043 = vmatpush2.msra.mxu0 0.0
  %3044 = vmatprep.subr.mxu0 0.0
  %3045 = vmatpush2.msra.mxu0 0.0
  %3046 = vmatprep.subr.mxu0 0.0
  %3047 = vmatpush2.msra.mxu0 0.0
  %3048 = vmatprep.subr.mxu0 0.0
  %3049 = vmatpush2.msra.mxu0 0.0
  %3050 = vmatprep.subr.mxu0 0.0
  %3051 = vmatpush2.msra.mxu0 0.0
  %3052 = vmatprep.subr.mxu0 0.0
  %3053 = vmatpush2.msra.mxu0 0.0
  %3054 = vmatprep.subr.mxu0 0.0
  %3055 = vmatpush2.msra.mxu0 0.0
  %3056 = vmatprep.mubr.f32.mxu0 0.0
  %3057 = vmatmul.mubr.f32.gmra.mxu0 %v2990
  %v3058 = vpop.f32.mrf.mxu0
  %v3059 = vadd.f32 0.0, %v3058
  %v3060 = vpop.f32.mrf.mxu0
  %3061 = vdwg.mxu0
  %v3062 = vmul.f32 %v3059, %v2987
  %v3063 = vmul.f32 %v2988, %v2988
  %v3064 = vsub.f32 %v3062, %v3063
  %v3065 = vld [vmem:[%s8] sm:$0x1]
  %v3066 = vadd.f32 %v3064, 1e-05
  %v3067 = vrsqrt.pop %v3066
  %v3068 = vmul.f32 %v3065, %v3067
  %v3069 = vld [vmem:[%s9] sm:$0x1]
  %v3070 = vmul.f32 %v2988, %v3068
  %v3071 = vsub.f32 %v3069, %v3070
  %v3072 = vld [vmem:[%s11] sm:$0xff]
  %v3073 = vld [vmem:[%s11 + $0x8] sm:$0xff]
  %vm3074 = vcmask 130048
  %v3076 = vsel %vm3074, %v3068, 0
  %3078 = vmatprep.subr.mxu0 0.0
  %3079 = vmatpush1.msra.mxu0 0.0
  %3080 = vmatprep.subr.mxu0 0.0
  %3081 = vmatpush1.msra.mxu0 0.0
  %3082 = vmatprep.subr.mxu0 0.0
  %3083 = vmatpush1.msra.mxu0 0.0
  %3084 = vmatprep.subr.mxu0 0.0
  %3085 = vmatpush1.msra.mxu0 0.0
  %3086 = vmatprep.subr.mxu0 0.0
  %3087 = vmatpush1.msra.mxu0 0.0
  %3088 = vmatprep.subr.mxu0 0.0
  %3089 = vmatpush1.msra.mxu0 0.0
  %3090 = vmatprep.subr.mxu0 0.0
  %3091 = vmatpush1.msra.mxu0 0.0
  %3092 = vmatprep.subr.mxu0 0.0
  %3093 = vmatpush1.msra.mxu0 0.0
  %3094 = vmatprep.subr.mxu0 0.0
  %3095 = vmatpush1.msra.mxu0 0.0
  %3096 = vmatprep.subr.mxu0 0.0
  %3097 = vmatpush1.msra.mxu0 0.0
  %3098 = vmatprep.subr.mxu0 0.0
  %3099 = vmatpush1.msra.mxu0 0.0
  %3100 = vmatprep.subr.mxu0 0.0
  %3101 = vmatpush1.msra.mxu0 0.0
  %3102 = vmatprep.subr.mxu0 0.0
  %3103 = vmatpush1.msra.mxu0 0.0
  %3104 = vmatprep.subr.mxu0 0.0
  %3105 = vmatpush1.msra.mxu0 0.0
  %3106 = vmatprep.subr.mxu0 0.0
  %3107 = vmatpush1.msra.mxu0 %v3073
  %3108 = vmatprep.subr.mxu0 0.0
  %3109 = vmatpush1.msra.mxu0 %v3072
  %3110 = vmatprep.subr.mxu0 0.0
  %3111 = vmatpush2.msra.mxu0 0.0
  %3112 = vmatprep.subr.mxu0 0.0
  %3113 = vmatpush2.msra.mxu0 0.0
  %3114 = vmatprep.subr.mxu0 0.0
  %3115 = vmatpush2.msra.mxu0 0.0
  %3116 = vmatprep.subr.mxu0 0.0
  %3117 = vmatpush2.msra.mxu0 0.0
  %3118 = vmatprep.subr.mxu0 0.0
  %3119 = vmatpush2.msra.mxu0 0.0
  %3120 = vmatprep.subr.mxu0 0.0
  %3121 = vmatpush2.msra.mxu0 0.0
  %3122 = vmatprep.subr.mxu0 0.0
  %3123 = vmatpush2.msra.mxu0 0.0
  %3124 = vmatprep.subr.mxu0 0.0
  %3125 = vmatpush2.msra.mxu0 0.0
  %3126 = vmatprep.subr.mxu0 0.0
  %3127 = vmatpush2.msra.mxu0 0.0
  %3128 = vmatprep.subr.mxu0 0.0
  %3129 = vmatpush2.msra.mxu0 0.0
  %3130 = vmatprep.subr.mxu0 0.0
  %3131 = vmatpush2.msra.mxu0 0.0
  %3132 = vmatprep.subr.mxu0 0.0
  %3133 = vmatpush2.msra.mxu0 0.0
  %3134 = vmatprep.subr.mxu0 0.0
  %3135 = vmatpush2.msra.mxu0 0.0
  %3136 = vmatprep.subr.mxu0 0.0
  %3137 = vmatpush2.msra.mxu0 0.0
  %3138 = vmatprep.subr.mxu0 0.0
  %3139 = vmatpush2.msra.mxu0 0.0
  %3140 = vmatprep.subr.mxu0 0.0
  %3141 = vmatpush2.msra.mxu0 0.0
  %3142 = vmatprep.mubr.f32.mxu0 0.0
  %3143 = vmatmul.mubr.f32.gmra.mxu0 %v3076
  %v3144 = vpop.f32.mrf.mxu0
  %v3145 = vadd.f32 0.0, %v3144
  %v3146 = vpop.f32.mrf.mxu0
  %3147 = vdwg.mxu0
  %v3149 = vsel %vm3074, %v3071, 0
  %3151 = vmatprep.subr.mxu0 0.0
  %3152 = vmatpush1.msra.mxu0 0.0
  %3153 = vmatprep.subr.mxu0 0.0
  %3154 = vmatpush1.msra.mxu0 0.0
  %3155 = vmatprep.subr.mxu0 0.0
  %3156 = vmatpush1.msra.mxu0 0.0
  %3157 = vmatprep.subr.mxu0 0.0
  %3158 = vmatpush1.msra.mxu0 0.0
  %3159 = vmatprep.subr.mxu0 0.0
  %3160 = vmatpush1.msra.mxu0 0.0
  %3161 = vmatprep.subr.mxu0 0.0
  %3162 = vmatpush1.msra.mxu0 0.0
  %3163 = vmatprep.subr.mxu0 0.0
  %3164 = vmatpush1.msra.mxu0 0.0
  %3165 = vmatprep.subr.mxu0 0.0
  %3166 = vmatpush1.msra.mxu0 0.0
  %3167 = vmatprep.subr.mxu0 0.0
  %3168 = vmatpush1.msra.mxu0 0.0
  %3169 = vmatprep.subr.mxu0 0.0
  %3170 = vmatpush1.msra.mxu0 0.0
  %3171 = vmatprep.subr.mxu0 0.0
  %3172 = vmatpush1.msra.mxu0 0.0
  %3173 = vmatprep.subr.mxu0 0.0
  %3174 = vmatpush1.msra.mxu0 0.0
  %3175 = vmatprep.subr.mxu0 0.0
  %3176 = vmatpush1.msra.mxu0 0.0
  %3177 = vmatprep.subr.mxu0 0.0
  %3178 = vmatpush1.msra.mxu0 0.0
  %3179 = vmatprep.subr.mxu0 0.0
  %3180 = vmatpush1.msra.mxu0 %v3073
  %3181 = vmatprep.subr.mxu0 0.0
  %3182 = vmatpush1.msra.mxu0 %v3072
  %3183 = vmatprep.subr.mxu0 0.0
  %3184 = vmatpush2.msra.mxu0 0.0
  %3185 = vmatprep.subr.mxu0 0.0
  %3186 = vmatpush2.msra.mxu0 0.0
  %3187 = vmatprep.subr.mxu0 0.0
  %3188 = vmatpush2.msra.mxu0 0.0
  %3189 = vmatprep.subr.mxu0 0.0
  %3190 = vmatpush2.msra.mxu0 0.0
  %3191 = vmatprep.subr.mxu0 0.0
  %3192 = vmatpush2.msra.mxu0 0.0
  %3193 = vmatprep.subr.mxu0 0.0
  %3194 = vmatpush2.msra.mxu0 0.0
  %3195 = vmatprep.subr.mxu0 0.0
  %3196 = vmatpush2.msra.mxu0 0.0
  %3197 = vmatprep.subr.mxu0 0.0
  %3198 = vmatpush2.msra.mxu0 0.0
  %3199 = vmatprep.subr.mxu0 0.0
  %3200 = vmatpush2.msra.mxu0 0.0
  %3201 = vmatprep.subr.mxu0 0.0
  %3202 = vmatpush2.msra.mxu0 0.0
  %3203 = vmatprep.subr.mxu0 0.0
  %3204 = vmatpush2.msra.mxu0 0.0
  %3205 = vmatprep.subr.mxu0 0.0
  %3206 = vmatpush2.msra.mxu0 0.0
  %3207 = vmatprep.subr.mxu0 0.0
  %3208 = vmatpush2.msra.mxu0 0.0
  %3209 = vmatprep.subr.mxu0 0.0
  %3210 = vmatpush2.msra.mxu0 0.0
  %3211 = vmatprep.subr.mxu0 0.0
  %3212 = vmatpush2.msra.mxu0 0.0
  %3213 = vmatprep.subr.mxu0 0.0
  %3214 = vmatpush2.msra.mxu0 0.0
  %3215 = vmatprep.mubr.f32.mxu0 0.0
  %3216 = vmatmul.mubr.f32.gmra.mxu0 %v3149
  %v3217 = vpop.f32.mrf.mxu0
  %v3218 = vadd.f32 0.0, %v3217
  %v3219 = vpop.f32.mrf.mxu0
  %3220 = vdwg.mxu0
  %v3221 = vlaneseq
  %v3222 = vshrl.u32 %v3221, 7
  %v3223 = vsub.s32 0, %v3222
  %v3224 = vrot.slane %v3145, %v3223
  %v3225 = vmul.f32 %v2871, %v3224
  %v3226 = vmul.f32 %v2872, %v3224
  %v3227 = vmul.f32 %v2873, %v3224
  %v3228 = vmul.f32 %v2874, %v3224
  %v3229 = vlaneseq
  %v3230 = vshrl.u32 %v3229, 7
  %v3231 = vsub.s32 0, %v3230
  %v3232 = vrot.slane %v3218, %v3231
  %v3233 = vadd.f32 %v3225, %v3232
  %v3234 = vadd.f32 %v3226, %v3232
  %v3235 = vadd.f32 %v3227, %v3232
  %v3236 = vadd.f32 %v3228, %v3232
  %vm3237 = vcmp.ge.f32.partialorder %v3233, 0.0
  %vm3238 = vcmp.ge.f32.partialorder %v3234, 0.0
  %vm3239 = vcmp.ge.f32.partialorder %v3235, 0.0
  %vm3240 = vcmp.ge.f32.partialorder %v3236, 0.0
  %v3241 = vmul.f32 %v3233, 0.2
  %v3242 = vmul.f32 %v3234, 0.2
  %v3243 = vmul.f32 %v3235, 0.2
  %v3244 = vmul.f32 %v3236, 0.2
  %v3245 = vsel %vm3237, %v3233, %v3241
  %v3246 = vsel %vm3238, %v3234, %v3242
  %v3247 = vsel %vm3239, %v3235, %v3243
  %v3248 = vsel %vm3240, %v3236, %v3244
  %v3249 = vld [vmem:[%s12] sm:$0xff]
  %v3250 = vld [vmem:[%s12 + $0x8] sm:$0xff]
  %v3251 = vld [vmem:[%s12 + $0x10] sm:$0xff]
  %v3252 = vld [vmem:[%s12 + $0x18] sm:$0xff]
  %v3253 = vld [vmem:[%s12 + $0x20] sm:$0xff]
  %v3254 = vld [vmem:[%s12 + $0x28] sm:$0xff]
  %v3255 = vld [vmem:[%s12 + $0x30] sm:$0xff]
  %v3256 = vld [vmem:[%s12 + $0x38] sm:$0xff]
  %v3257 = vld [vmem:[%s12 + $0x40] sm:$0xff]
  %v3258 = vld [vmem:[%s12 + $0x48] sm:$0xff]
  %v3259 = vld [vmem:[%s12 + $0x50] sm:$0xff]
  %v3260 = vld [vmem:[%s12 + $0x58] sm:$0xff]
  %v3261 = vld [vmem:[%s12 + $0x60] sm:$0xff]
  %v3262 = vld [vmem:[%s12 + $0x68] sm:$0xff]
  %v3263 = vld [vmem:[%s12 + $0x70] sm:$0xff]
  %v3264 = vld [vmem:[%s12 + $0x78] sm:$0xff]
  %vm3265 = vcmask 261120
  %v3267 = vsel %vm3265, %v3249, 0
  %v3270 = vsel %vm3265, %v3250, 0
  %v3273 = vsel %vm3265, %v3251, 0
  %v3276 = vsel %vm3265, %v3252, 0
  %v3279 = vsel %vm3265, %v3253, 0
  %v3282 = vsel %vm3265, %v3254, 0
  %v3285 = vsel %vm3265, %v3255, 0
  %v3288 = vsel %vm3265, %v3256, 0
  %v3291 = vsel %vm3265, %v3257, 0
  %v3294 = vsel %vm3265, %v3258, 0
  %v3297 = vsel %vm3265, %v3259, 0
  %v3300 = vsel %vm3265, %v3260, 0
  %v3303 = vsel %vm3265, %v3261, 0
  %v3306 = vsel %vm3265, %v3262, 0
  %v3309 = vsel %vm3265, %v3263, 0
  %v3312 = vsel %vm3265, %v3264, 0
  %3314 = vmatprep.subr.mxu0 0.0
  %3315 = vmatpush1.msra.mxu0 0.0
  %3316 = vmatprep.subr.mxu0 0.0
  %3317 = vmatpush1.msra.mxu0 0.0
  %3318 = vmatprep.subr.mxu0 0.0
  %3319 = vmatpush1.msra.mxu0 0.0
  %3320 = vmatprep.subr.mxu0 0.0
  %3321 = vmatpush1.msra.mxu0 0.0
  %3322 = vmatprep.subr.mxu0 0.0
  %3323 = vmatpush1.msra.mxu0 0.0
  %3324 = vmatprep.subr.mxu0 0.0
  %3325 = vmatpush1.msra.mxu0 0.0
  %3326 = vmatprep.subr.mxu0 0.0
  %3327 = vmatpush1.msra.mxu0 0.0
  %3328 = vmatprep.subr.mxu0 0.0
  %3329 = vmatpush1.msra.mxu0 0.0
  %3330 = vmatprep.subr.mxu0 0.0
  %3331 = vmatpush1.msra.mxu0 0.0
  %3332 = vmatprep.subr.mxu0 0.0
  %3333 = vmatpush1.msra.mxu0 0.0
  %3334 = vmatprep.subr.mxu0 0.0
  %3335 = vmatpush1.msra.mxu0 0.0
  %3336 = vmatprep.subr.mxu0 0.0
  %3337 = vmatpush1.msra.mxu0 0.0
  %3338 = vmatprep.subr.mxu0 0.0
  %3339 = vmatpush1.msra.mxu0 %v3248
  %3340 = vmatprep.subr.mxu0 0.0
  %3341 = vmatpush1.msra.mxu0 %v3247
  %3342 = vmatprep.subr.mxu0 0.0
  %3343 = vmatpush1.msra.mxu0 %v3246
  %3344 = vmatprep.subr.mxu0 0.0
  %3345 = vmatpush1.msra.mxu0 %v3245
  %3346 = vmatprep.subr.mxu0 0.0
  %3347 = vmatpush2.msra.mxu0 0.0
  %3348 = vmatprep.subr.mxu0 0.0
  %3349 = vmatpush2.msra.mxu0 0.0
  %3350 = vmatprep.subr.mxu0 0.0
  %3351 = vmatpush2.msra.mxu0 0.0
  %3352 = vmatprep.subr.mxu0 0.0
  %3353 = vmatpush2.msra.mxu0 0.0
  %3354 = vmatprep.subr.mxu0 0.0
  %3355 = vmatpush2.msra.mxu0 0.0
  %3356 = vmatprep.subr.mxu0 0.0
  %3357 = vmatpush2.msra.mxu0 0.0
  %3358 = vmatprep.subr.mxu0 0.0
  %3359 = vmatpush2.msra.mxu0 0.0
  %3360 = vmatprep.subr.mxu0 0.0
  %3361 = vmatpush2.msra.mxu0 0.0
  %3362 = vmatprep.subr.mxu0 0.0
  %3363 = vmatpush2.msra.mxu0 0.0
  %3364 = vmatprep.subr.mxu0 0.0
  %3365 = vmatpush2.msra.mxu0 0.0
  %3366 = vmatprep.subr.mxu0 0.0
  %3367 = vmatpush2.msra.mxu0 0.0
  %3368 = vmatprep.subr.mxu0 0.0
  %3369 = vmatpush2.msra.mxu0 0.0
  %3370 = vmatprep.subr.mxu0 0.0
  %3371 = vmatpush2.msra.mxu0 0.0
  %3372 = vmatprep.subr.mxu0 0.0
  %3373 = vmatpush2.msra.mxu0 0.0
  %3374 = vmatprep.subr.mxu0 0.0
  %3375 = vmatpush2.msra.mxu0 0.0
  %3376 = vmatprep.subr.mxu0 0.0
  %3377 = vmatpush2.msra.mxu0 0.0
  %3378 = vmatprep.mubr.f32.mxu0 0.0
  %3379 = vmatmul.mubr.f32.gmra.mxu0 %v3267
  %v3380 = vpop.f32.mrf.mxu0
  %v3381 = vadd.f32 0.0, %v3380
  %v3382 = vpop.f32.mrf.mxu0
  %3383 = vmatprep.mubr.f32.mxu0 0.0
  %3384 = vmatmul.mubr.f32.gmra.mxu0 %v3270
  %v3385 = vpop.f32.mrf.mxu0
  %v3386 = vadd.f32 0.0, %v3385
  %v3387 = vpop.f32.mrf.mxu0
  %3388 = vmatprep.mubr.f32.mxu0 0.0
  %3389 = vmatmul.mubr.f32.gmra.mxu0 %v3273
  %v3390 = vpop.f32.mrf.mxu0
  %v3391 = vadd.f32 0.0, %v3390
  %v3392 = vpop.f32.mrf.mxu0
  %3393 = vmatprep.mubr.f32.mxu0 0.0
  %3394 = vmatmul.mubr.f32.gmra.mxu0 %v3276
  %v3395 = vpop.f32.mrf.mxu0
  %v3396 = vadd.f32 0.0, %v3395
  %v3397 = vpop.f32.mrf.mxu0
  %3398 = vmatprep.mubr.f32.mxu0 0.0
  %3399 = vmatmul.mubr.f32.gmra.mxu0 %v3279
  %v3400 = vpop.f32.mrf.mxu0
  %v3401 = vadd.f32 0.0, %v3400
  %v3402 = vpop.f32.mrf.mxu0
  %3403 = vmatprep.mubr.f32.mxu0 0.0
  %3404 = vmatmul.mubr.f32.gmra.mxu0 %v3282
  %v3405 = vpop.f32.mrf.mxu0
  %v3406 = vadd.f32 0.0, %v3405
  %v3407 = vpop.f32.mrf.mxu0
  %3408 = vmatprep.mubr.f32.mxu0 0.0
  %3409 = vmatmul.mubr.f32.gmra.mxu0 %v3285
  %v3410 = vpop.f32.mrf.mxu0
  %v3411 = vadd.f32 0.0, %v3410
  %v3412 = vpop.f32.mrf.mxu0
  %3413 = vmatprep.mubr.f32.mxu0 0.0
  %3414 = vmatmul.mubr.f32.gmra.mxu0 %v3288
  %v3415 = vpop.f32.mrf.mxu0
  %v3416 = vadd.f32 0.0, %v3415
  %v3417 = vpop.f32.mrf.mxu0
  %3418 = vmatprep.mubr.f32.mxu0 0.0
  %3419 = vmatmul.mubr.f32.gmra.mxu0 %v3291
  %v3420 = vpop.f32.mrf.mxu0
  %v3421 = vadd.f32 0.0, %v3420
  %v3422 = vpop.f32.mrf.mxu0
  %3423 = vmatprep.mubr.f32.mxu0 0.0
  %3424 = vmatmul.mubr.f32.gmra.mxu0 %v3294
  %v3425 = vpop.f32.mrf.mxu0
  %v3426 = vadd.f32 0.0, %v3425
  %v3427 = vpop.f32.mrf.mxu0
  %3428 = vmatprep.mubr.f32.mxu0 0.0
  %3429 = vmatmul.mubr.f32.gmra.mxu0 %v3297
  %v3430 = vpop.f32.mrf.mxu0
  %v3431 = vadd.f32 0.0, %v3430
  %v3432 = vpop.f32.mrf.mxu0
  %3433 = vmatprep.mubr.f32.mxu0 0.0
  %3434 = vmatmul.mubr.f32.gmra.mxu0 %v3300
  %v3435 = vpop.f32.mrf.mxu0
  %v3436 = vadd.f32 0.0, %v3435
  %v3437 = vpop.f32.mrf.mxu0
  %3438 = vmatprep.mubr.f32.mxu0 0.0
  %3439 = vmatmul.mubr.f32.gmra.mxu0 %v3303
  %v3440 = vpop.f32.mrf.mxu0
  %v3441 = vadd.f32 0.0, %v3440
  %v3442 = vpop.f32.mrf.mxu0
  %3443 = vmatprep.mubr.f32.mxu0 0.0
  %3444 = vmatmul.mubr.f32.gmra.mxu0 %v3306
  %v3445 = vpop.f32.mrf.mxu0
  %v3446 = vadd.f32 0.0, %v3445
  %v3447 = vpop.f32.mrf.mxu0
  %3448 = vmatprep.mubr.f32.mxu0 0.0
  %3449 = vmatmul.mubr.f32.gmra.mxu0 %v3309
  %v3450 = vpop.f32.mrf.mxu0
  %v3451 = vadd.f32 0.0, %v3450
  %v3452 = vpop.f32.mrf.mxu0
  %3453 = vmatprep.mubr.f32.mxu0 0.0
  %3454 = vmatmul.mubr.f32.gmra.mxu0 %v3312
  %v3455 = vpop.f32.mrf.mxu0
  %v3456 = vadd.f32 0.0, %v3455
  %v3457 = vpop.f32.mrf.mxu0
  %3458 = vdwg.mxu0
  %v3459 = vld [vmem:[%s14] sm:$0xff]
  %v3460 = vld [vmem:[%s13] sm:$0xff]
  %v3461 = vld [vmem:[%s13 + $0x8] sm:$0xff]
  %v3462 = vld [vmem:[%s13 + $0x10] sm:$0xff]
  %v3463 = vld [vmem:[%s13 + $0x18] sm:$0xff]
  %v3464 = vld [vmem:[%s13 + $0x20] sm:$0xff]
  %v3465 = vld [vmem:[%s13 + $0x28] sm:$0xff]
  %v3466 = vld [vmem:[%s13 + $0x30] sm:$0xff]
  %v3467 = vld [vmem:[%s13 + $0x38] sm:$0xff]
  %v3468 = vld [vmem:[%s13 + $0x40] sm:$0xff]
  %v3469 = vld [vmem:[%s13 + $0x48] sm:$0xff]
  %v3470 = vld [vmem:[%s13 + $0x50] sm:$0xff]
  %v3471 = vld [vmem:[%s13 + $0x58] sm:$0xff]
  %v3472 = vld [vmem:[%s13 + $0x60] sm:$0xff]
  %v3473 = vld [vmem:[%s13 + $0x68] sm:$0xff]
  %v3474 = vld [vmem:[%s13 + $0x70] sm:$0xff]
  %v3475 = vld [vmem:[%s13 + $0x78] sm:$0xff]
  %v3476 = vmul.f32 %v3381, %v3460
  %v3477 = vmul.f32 %v3386, %v3461
  %v3478 = vmul.f32 %v3391, %v3462
  %v3479 = vmul.f32 %v3396, %v3463
  %v3480 = vmul.f32 %v3401, %v3464
  %v3481 = vmul.f32 %v3406, %v3465
  %v3482 = vmul.f32 %v3411, %v3466
  %v3483 = vmul.f32 %v3416, %v3467
  %v3484 = vmul.f32 %v3421, %v3468
  %v3485 = vmul.f32 %v3426, %v3469
  %v3486 = vmul.f32 %v3431, %v3470
  %v3487 = vmul.f32 %v3436, %v3471
  %v3488 = vmul.f32 %v3441, %v3472
  %v3489 = vmul.f32 %v3446, %v3473
  %v3490 = vmul.f32 %v3451, %v3474
  %v3491 = vmul.f32 %v3456, %v3475
  %3492 = vmatprep.subr.mxu0 0.0
  %3493 = vmatpush1.msra.mxu0 %v3491
  %3494 = vmatprep.subr.mxu0 0.0
  %3495 = vmatpush1.msra.mxu0 %v3490
  %3496 = vmatprep.subr.mxu0 0.0
  %3497 = vmatpush1.msra.mxu0 %v3489
  %3498 = vmatprep.subr.mxu0 0.0
  %3499 = vmatpush1.msra.mxu0 %v3488
  %3500 = vmatprep.subr.mxu0 0.0
  %3501 = vmatpush1.msra.mxu0 %v3487
  %3502 = vmatprep.subr.mxu0 0.0
  %3503 = vmatpush1.msra.mxu0 %v3486
  %3504 = vmatprep.subr.mxu0 0.0
  %3505 = vmatpush1.msra.mxu0 %v3485
  %3506 = vmatprep.subr.mxu0 0.0
  %3507 = vmatpush1.msra.mxu0 %v3484
  %3508 = vmatprep.subr.mxu0 0.0
  %3509 = vmatpush1.msra.mxu0 %v3483
  %3510 = vmatprep.subr.mxu0 0.0
  %3511 = vmatpush1.msra.mxu0 %v3482
  %3512 = vmatprep.subr.mxu0 0.0
  %3513 = vmatpush1.msra.mxu0 %v3481
  %3514 = vmatprep.subr.mxu0 0.0
  %3515 = vmatpush1.msra.mxu0 %v3480
  %3516 = vmatprep.subr.mxu0 0.0
  %3517 = vmatpush1.msra.mxu0 %v3479
  %3518 = vmatprep.subr.mxu0 0.0
  %3519 = vmatpush1.msra.mxu0 %v3478
  %3520 = vmatprep.subr.mxu0 0.0
  %3521 = vmatpush1.msra.mxu0 %v3477
  %3522 = vmatprep.subr.mxu0 0.0
  %3523 = vmatpush1.msra.mxu0 %v3476
  %3524 = vmatprep.subr.mxu0 0.0
  %3525 = vmatpush2.msra.mxu0 0.0
  %3526 = vmatprep.subr.mxu0 0.0
  %3527 = vmatpush2.msra.mxu0 0.0
  %3528 = vmatprep.subr.mxu0 0.0
  %3529 = vmatpush2.msra.mxu0 0.0
  %3530 = vmatprep.subr.mxu0 0.0
  %3531 = vmatpush2.msra.mxu0 0.0
  %3532 = vmatprep.subr.mxu0 0.0
  %3533 = vmatpush2.msra.mxu0 0.0
  %3534 = vmatprep.subr.mxu0 0.0
  %3535 = vmatpush2.msra.mxu0 0.0
  %3536 = vmatprep.subr.mxu0 0.0
  %3537 = vmatpush2.msra.mxu0 0.0
  %3538 = vmatprep.subr.mxu0 0.0
  %3539 = vmatpush2.msra.mxu0 0.0
  %3540 = vmatprep.subr.mxu0 0.0
  %3541 = vmatpush2.msra.mxu0 0.0
  %3542 = vmatprep.subr.mxu0 0.0
  %3543 = vmatpush2.msra.mxu0 0.0
  %3544 = vmatprep.subr.mxu0 0.0
  %3545 = vmatpush2.msra.mxu0 0.0
  %3546 = vmatprep.subr.mxu0 0.0
  %3547 = vmatpush2.msra.mxu0 0.0
  %3548 = vmatprep.subr.mxu0 0.0
  %3549 = vmatpush2.msra.mxu0 0.0
  %3550 = vmatprep.subr.mxu0 0.0
  %3551 = vmatpush2.msra.mxu0 0.0
  %3552 = vmatprep.subr.mxu0 0.0
  %3553 = vmatpush2.msra.mxu0 0.0
  %3554 = vmatprep.subr.mxu0 0.0
  %3555 = vmatpush2.msra.mxu0 0.0
  %3556 = vmatprep.mubr.f32.mxu0 0.0
  %3557 = vmatmul.mubr.f32.gmra.mxu0 %v3459
  %v3558 = vpop.f32.mrf.mxu0
  %v3559 = vadd.f32 0.0, %v3558
  %v3560 = vpop.f32.mrf.mxu0
  %3561 = vdwg.mxu0
  %v3562 = vld [vmem:[%s15] sm:$0xff]
  %v3563 = vld [vmem:[%s15 + $0x8] sm:$0xff]
  %v3564 = vld [vmem:[%s15 + $0x10] sm:$0xff]
  %v3565 = vld [vmem:[%s15 + $0x18] sm:$0xff]
  %v3566 = vld [vmem:[%s15 + $0x20] sm:$0xff]
  %v3567 = vld [vmem:[%s15 + $0x28] sm:$0xff]
  %v3568 = vld [vmem:[%s15 + $0x30] sm:$0xff]
  %v3569 = vld [vmem:[%s15 + $0x38] sm:$0xff]
  %v3571 = vsel %vm2875, %v3559, 0
  %3573 = vmatprep.subr.mxu0 0.0
  %3574 = vmatpush1.msra.mxu0 0.0
  %3575 = vmatprep.subr.mxu0 0.0
  %3576 = vmatpush1.msra.mxu0 0.0
  %3577 = vmatprep.subr.mxu0 0.0
  %3578 = vmatpush1.msra.mxu0 0.0
  %3579 = vmatprep.subr.mxu0 0.0
  %3580 = vmatpush1.msra.mxu0 0.0
  %3581 = vmatprep.subr.mxu0 0.0
  %3582 = vmatpush1.msra.mxu0 0.0
  %3583 = vmatprep.subr.mxu0 0.0
  %3584 = vmatpush1.msra.mxu0 0.0
  %3585 = vmatprep.subr.mxu0 0.0
  %3586 = vmatpush1.msra.mxu0 0.0
  %3587 = vmatprep.subr.mxu0 0.0
  %3588 = vmatpush1.msra.mxu0 0.0
  %3589 = vmatprep.subr.mxu0 0.0
  %3590 = vmatpush1.msra.mxu0 %v3569
  %3591 = vmatprep.subr.mxu0 0.0
  %3592 = vmatpush1.msra.mxu0 %v3568
  %3593 = vmatprep.subr.mxu0 0.0
  %3594 = vmatpush1.msra.mxu0 %v3567
  %3595 = vmatprep.subr.mxu0 0.0
  %3596 = vmatpush1.msra.mxu0 %v3566
  %3597 = vmatprep.subr.mxu0 0.0
  %3598 = vmatpush1.msra.mxu0 %v3565
  %3599 = vmatprep.subr.mxu0 0.0
  %3600 = vmatpush1.msra.mxu0 %v3564
  %3601 = vmatprep.subr.mxu0 0.0
  %3602 = vmatpush1.msra.mxu0 %v3563
  %3603 = vmatprep.subr.mxu0 0.0
  %3604 = vmatpush1.msra.mxu0 %v3562
  %3605 = vmatprep.subr.mxu0 0.0
  %3606 = vmatpush2.msra.mxu0 0.0
  %3607 = vmatprep.subr.mxu0 0.0
  %3608 = vmatpush2.msra.mxu0 0.0
  %3609 = vmatprep.subr.mxu0 0.0
  %3610 = vmatpush2.msra.mxu0 0.0
  %3611 = vmatprep.subr.mxu0 0.0
  %3612 = vmatpush2.msra.mxu0 0.0
  %3613 = vmatprep.subr.mxu0 0.0
  %3614 = vmatpush2.msra.mxu0 0.0
  %3615 = vmatprep.subr.mxu0 0.0
  %3616 = vmatpush2.msra.mxu0 0.0
  %3617 = vmatprep.subr.mxu0 0.0
  %3618 = vmatpush2.msra.mxu0 0.0
  %3619 = vmatprep.subr.mxu0 0.0
  %3620 = vmatpush2.msra.mxu0 0.0
  %3621 = vmatprep.subr.mxu0 0.0
  %3622 = vmatpush2.msra.mxu0 0.0
  %3623 = vmatprep.subr.mxu0 0.0
  %3624 = vmatpush2.msra.mxu0 0.0
  %3625 = vmatprep.subr.mxu0 0.0
  %3626 = vmatpush2.msra.mxu0 0.0
  %3627 = vmatprep.subr.mxu0 0.0
  %3628 = vmatpush2.msra.mxu0 0.0
  %3629 = vmatprep.subr.mxu0 0.0
  %3630 = vmatpush2.msra.mxu0 0.0
  %3631 = vmatprep.subr.mxu0 0.0
  %3632 = vmatpush2.msra.mxu0 0.0
  %3633 = vmatprep.subr.mxu0 0.0
  %3634 = vmatpush2.msra.mxu0 0.0
  %3635 = vmatprep.subr.mxu0 0.0
  %3636 = vmatpush2.msra.mxu0 0.0
  %3637 = vmatprep.mubr.f32.mxu0 0.0
  %3638 = vmatmul.mubr.f32.gmra.mxu0 %v3571
  %v3639 = vpop.f32.mrf.mxu0
  %v3640 = vadd.f32 0.0, %v3639
  %v3641 = vpop.f32.mrf.mxu0
  %3642 = vdwg.mxu0
  %vm3643 = vcmask 31744
  %3644 = vst.msk [vmem:[%s16] sm:$0xff] %vm3643, %v3640
  // Predicated region
  $region66: #{encoder_forward.1} parent=0 // pred_check
    _
  $region67: #{encoder_forward.1} parent=0 // pred_check_branch
    %3646 = sbr.rel (0) target = $region69
  $region68: #{encoder_forward.1} parent=0 // pred_region
    _
  $region69: #{encoder_forward.1} parent=0 // pred_fallthru
    _
  // Predicated region
  $region70: #{encoder_forward.1} parent=0 // pred_check
    _
  $region71: #{encoder_forward.1} parent=0 // pred_check_branch
    %3648 = sbr.rel (0) target = $region73
  $region72: #{encoder_forward.1} parent=0 // pred_region
    _
  $region73: #{encoder_forward.1} parent=0 // pred_fallthru
    _

</llo_original>
